<compile_context>
chip_gen: v5e
topology: v5e:2x2
jax: 0.10.0
libtpu: 0.0.40
codegen_flags: <defaults>
</compile_context>

<pallas_src>
import jax
import jax.numpy as jnp
import numpy as np
from jax.experimental import pallas as pl
from jax.experimental.pallas import tpu as pltpu


def _fold_weights(weight_np, cin, cout):
    """Fold cat(x4) + PixelShuffle(2) + 3x3 conv weight into (3, 3, cin, 4*cout).

    big[ky, kx][c_x, (2a+b)*cout + o] accumulates every original conv tap
    (dy, dx) and conv-input channel c that, for output subpixel (a, b), reads
    original-x pixel offset (ky-1, kx-1) and original-x channel
    c_x = (4c + 2i + j) % cin  (i, j = subpixel of the upsampled sample read).
    """
    big = np.zeros((3, 3, cin, 4 * cout), dtype=np.float32)
    for a in range(2):
        for b in range(2):
            col0 = (2 * a + b) * cout
            for dy in (-1, 0, 1):
                ky = (a + dy) // 2 + 1      # row offset into spatially padded x
                i = (a + dy) % 2            # subpixel row being read
                for dx in (-1, 0, 1):
                    kx = (b + dx) // 2 + 1
                    j = (b + dx) % 2
                    for c in range(cin):
                        c_x = (4 * c + 2 * i + j) % cin
                        big[ky, kx, c_x, col0:col0 + cout] += weight_np[:, c, dy + 1, dx + 1]
    return big


def _band_weights(big, cin, cout, W):
    """Scatter the folded 3x3 weight into per-ky banded matmul weights.

    wband[ky, (w + kx)*cin + c, w*4*cout + col] = big[ky, kx, c, col]
    so that for each vertical tap ky, a single matmul over the padded row slab
    xpad[:, ky:ky+H, :] (with (W+2, Cin) merged on the lane axis) produces the
    whole subpixel-packed output row block (W*4*cout lanes).
    """
    cout4 = 4 * cout
    wband = np.zeros((3, (W + 2) * cin, W * cout4), dtype=np.float32)
    for ky in range(3):
        for w in range(W):
            for kx in range(3):
                wband[ky, (w + kx) * cin:(w + kx + 1) * cin,
                      w * cout4:(w + 1) * cout4] = big[ky, kx]
    return wband


def _make_kernel(H, W, cin, cout4):
    def kernel(xrow_ref, w_ref, b_ref, out_ref):
        # xrow_ref: (1, H+2, (W+2)*cin)      padded row slabs, (W, C) merged on lanes
        # w_ref:    (3, (W+2)*cin, W*cout4)  banded folded weights (one per ky)
        # b_ref:    (1, W*cout4)             bias replicated per (w, subpixel)
        # out_ref:  (1, H, W*cout4)          subpixel-packed output, lane-dense
        acc = jnp.zeros((H, W * cout4), dtype=jnp.float32)
        for ky in range(3):                       # 3 MXU matmuls, f32 accumulate
            slab = xrow_ref[0, pl.ds(ky, H), :]   # (H, (W+2)*cin)
            acc = acc + jnp.dot(
                slab,
                w_ref[ky],
                preferred_element_type=jnp.float32,
                precision=jax.lax.Precision.HIGHEST,
            )
        out_ref[0] = (acc + b_ref[...]).astype(out_ref.dtype)

    return kernel


def upsample_conv_forward(x_nchw, weight, bias):
    """Forward of UpsampleConv: cat x4 -> PixelShuffle(2) -> Conv2d(3x3, pad=1)."""
    N, Cin, H, W = x_nchw.shape
    Cout = weight.shape[0]
    assert weight.shape == (Cout, Cin, 3, 3)
    Cout4 = 4 * Cout

    # Layout glue only: NCHW -> NHWC, 1-pixel zero halo, merge (W+2, Cin) onto
    # the lane axis (pure metadata reshape, no data movement).
    x_nhwc = jnp.transpose(x_nchw, (0, 2, 3, 1))
    xpad = jnp.pad(x_nhwc, ((0, 0), (1, 1), (1, 1), (0, 0)))
    xrow = xpad.reshape(N, H + 2, (W + 2) * Cin)

    big = _fold_weights(np.asarray(weight), Cin, Cout)
    wband = jnp.asarray(_band_weights(big, Cin, Cout, W))
    bias_row = jnp.tile(jnp.asarray(bias), 4 * W).reshape(1, W * Cout4)

    kernel = _make_kernel(H, W, Cin, Cout4)
    # Grid over the batch; each step handles one full sample (fits VMEM easily
    # at these sizes) and pipelines the next sample's DMA behind the matmuls.
    # For large spatial extents this would become a (batch, row-band) grid with
    # a 1-row halo -- not needed at these shapes.
    out_packed = pl.pallas_call(
        kernel,
        out_shape=jax.ShapeDtypeStruct((N, H, W * Cout4), x_nchw.dtype),
        grid=(N,),
        in_specs=[
            pl.BlockSpec((1, H + 2, (W + 2) * Cin), lambda n: (n, 0, 0)),
            pl.BlockSpec((3, (W + 2) * Cin, W * Cout4), lambda n: (0, 0, 0)),
            pl.BlockSpec((1, W * Cout4), lambda n: (0, 0)),
        ],
        out_specs=pl.BlockSpec((1, H, W * Cout4), lambda n: (n, 0, 0)),
        compiler_params=pltpu.CompilerParams(
            dimension_semantics=("parallel",),        # shard samples across TCs
            vmem_limit_bytes=32 * 1024 * 1024,
        ),
    )(xrow, wband, bias_row)

    # Depth-to-space + NHWC->NCHW: (N, H, W*4*Cout) -> (N, Cout, 2H, 2W).
    out = out_packed.reshape(N, H, W, 2, 2, Cout)
    out = jnp.transpose(out, (0, 5, 1, 3, 2, 4)).reshape(N, Cout, 2 * H, 2 * W)
    return out


def reference_forward(x_nchw, weight, bias):
    """Literal plain-JAX port of the PyTorch forward (for checking)."""
    N, Cin, H, W = x_nchw.shape
    z = jnp.concatenate([x_nchw] * 4, axis=1)                        # (N, 4C, H, W)
    u = z.reshape(N, Cin, 2, 2, H, W)
    u = jnp.transpose(u, (0, 1, 4, 2, 5, 3)).reshape(N, Cin, 2 * H, 2 * W)  # PixelShuffle(2)
    y = jax.lax.conv_general_dilated(
        u, weight, window_strides=(1, 1), padding=((1, 1), (1, 1)),
        dimension_numbers=("NCHW", "OIHW", "NCHW"),
        precision=jax.lax.Precision.HIGHEST,
    )
    return y + bias.reshape(1, -1, 1, 1)


if __name__ == "__main__":
    key = jax.random.PRNGKey(0)
    kx_, kw_, kb_ = jax.random.split(key, 3)

    N, Cin, H, W = 2, 4, 16, 16     # input (batch, channels, spatial)
    Cout = 8                        # Conv2d output_dim

    x = jax.random.normal(kx_, (N, Cin, H, W), dtype=jnp.float32)
    weight = 0.1 * jax.random.normal(kw_, (Cout, Cin, 3, 3), dtype=jnp.float32)
    bias = 0.1 * jax.random.normal(kb_, (Cout,), dtype=jnp.float32)

    y = upsample_conv_forward(x, weight, bias)
    y = jax.block_until_ready(y)

    ref = reference_forward(x, weight, bias)
    assert y.shape == (N, Cout, 2 * H, 2 * W), y.shape
    max_err = float(jnp.max(jnp.abs(y - ref)))
    assert jnp.allclose(y, ref, atol=5e-3, rtol=5e-3), f"mismatch vs reference, max abs err {max_err}"

    print("KERNEL_OK")
</pallas_src>

<mosaic_0001>
module attributes {stable_mosaic.version = 11 : i64} {
  func.func @kernel(%arg0: i32, %arg1: memref<1x18x72xf32, #tpu.memory_space<vmem>>, %arg2: memref<3x72x512xf32, #tpu.memory_space<vmem>>, %arg3: memref<1x512xf32, #tpu.memory_space<vmem>>, %arg4: memref<1x16x512xf32, #tpu.memory_space<vmem>>) attributes {dimension_semantics = [#tpu.dimension_semantics<parallel>], iteration_bounds = array<i64: 2>, scalar_prefetch = 0 : i64, scratch_operands = 0 : i64, tpu.core_type = #tpu.core_type<tc>, window_params = [{transform_indices = @transform_0, window_bounds = array<i64: 1, 18, 72>}, {pipeline_mode = #tpu.pipeline_mode<synchronous>, transform_indices = @transform_1, window_bounds = array<i64: 3, 72, 512>}, {pipeline_mode = #tpu.pipeline_mode<synchronous>, transform_indices = @transform_2, window_bounds = array<i64: 1, 512>}, {transform_indices = @transform_3, window_bounds = array<i64: 1, 16, 512>}]} {
    %cst = arith.constant 0.000000e+00 : f32
    %0 = vector.broadcast %cst : f32 to vector<16x512xf32>
    %c0 = arith.constant 0 : index
    %c0_0 = arith.constant 0 : index
    %c0_1 = arith.constant 0 : index
    %1 = vector.load %arg1[%c0, %c0_0, %c0_1] : memref<1x18x72xf32, #tpu.memory_space<vmem>>, vector<1x16x72xf32>
    %2 = vector.shape_cast %1 : vector<1x16x72xf32> to vector<16x72xf32>
    %c0_2 = arith.constant 0 : index
    %c0_3 = arith.constant 0 : index
    %c0_4 = arith.constant 0 : index
    %3 = vector.load %arg2[%c0_2, %c0_3, %c0_4] : memref<3x72x512xf32, #tpu.memory_space<vmem>>, vector<1x72x512xf32>
    %4 = vector.shape_cast %3 : vector<1x72x512xf32> to vector<72x512xf32>
    %cst_5 = arith.constant dense<0.000000e+00> : vector<16x512xf32>
    %5 = tpu.matmul %2, %4, %cst_5 {dimension_numbers = #tpu.dot_dimension_numbers<[1], [0], [0], [1], [0, 0, 1, 1], [], []>, precision = #tpu.contract_precision<fp32>} : vector<16x72xf32>, vector<72x512xf32>, vector<16x512xf32> -> vector<16x512xf32>
    %6 = arith.addf %0, %5 : vector<16x512xf32>
    %c0_6 = arith.constant 0 : index
    %c1 = arith.constant 1 : index
    %c0_7 = arith.constant 0 : index
    %7 = vector.load %arg1[%c0_6, %c1, %c0_7] : memref<1x18x72xf32, #tpu.memory_space<vmem>>, vector<1x16x72xf32>
    %8 = vector.shape_cast %7 : vector<1x16x72xf32> to vector<16x72xf32>
    %c1_8 = arith.constant 1 : index
    %c0_9 = arith.constant 0 : index
    %c0_10 = arith.constant 0 : index
    %9 = vector.load %arg2[%c1_8, %c0_9, %c0_10] : memref<3x72x512xf32, #tpu.memory_space<vmem>>, vector<1x72x512xf32>
    %10 = vector.shape_cast %9 : vector<1x72x512xf32> to vector<72x512xf32>
    %cst_11 = arith.constant dense<0.000000e+00> : vector<16x512xf32>
    %11 = tpu.matmul %8, %10, %cst_11 {dimension_numbers = #tpu.dot_dimension_numbers<[1], [0], [0], [1], [0, 0, 1, 1], [], []>, precision = #tpu.contract_precision<fp32>} : vector<16x72xf32>, vector<72x512xf32>, vector<16x512xf32> -> vector<16x512xf32>
    %12 = arith.addf %6, %11 : vector<16x512xf32>
    %c0_12 = arith.constant 0 : index
    %c2 = arith.constant 2 : index
    %c0_13 = arith.constant 0 : index
    %13 = vector.load %arg1[%c0_12, %c2, %c0_13] : memref<1x18x72xf32, #tpu.memory_space<vmem>>, vector<1x16x72xf32>
    %14 = vector.shape_cast %13 : vector<1x16x72xf32> to vector<16x72xf32>
    %c2_14 = arith.constant 2 : index
    %c0_15 = arith.constant 0 : index
    %c0_16 = arith.constant 0 : index
    %15 = vector.load %arg2[%c2_14, %c0_15, %c0_16] : memref<3x72x512xf32, #tpu.memory_space<vmem>>, vector<1x72x512xf32>
    %16 = vector.shape_cast %15 : vector<1x72x512xf32> to vector<72x512xf32>
    %cst_17 = arith.constant dense<0.000000e+00> : vector<16x512xf32>
    %17 = tpu.matmul %14, %16, %cst_17 {dimension_numbers = #tpu.dot_dimension_numbers<[1], [0], [0], [1], [0, 0, 1, 1], [], []>, precision = #tpu.contract_precision<fp32>} : vector<16x72xf32>, vector<72x512xf32>, vector<16x512xf32> -> vector<16x512xf32>
    %18 = arith.addf %12, %17 : vector<16x512xf32>
    %c0_18 = arith.constant 0 : index
    %c0_19 = arith.constant 0 : index
    %19 = vector.load %arg3[%c0_18, %c0_19] : memref<1x512xf32, #tpu.memory_space<vmem>>, vector<1x512xf32>
    %20 = vector.broadcast %19 : vector<1x512xf32> to vector<16x512xf32>
    %21 = arith.addf %18, %20 : vector<16x512xf32>
    %c0_20 = arith.constant 0 : index
    %c0_21 = arith.constant 0 : index
    %c0_22 = arith.constant 0 : index
    %22 = vector.load %arg4[%c0_20, %c0_21, %c0_22] : memref<1x16x512xf32, #tpu.memory_space<vmem>>, vector<1x16x512xf32>
    %23 = vector.shape_cast %22 : vector<1x16x512xf32> to vector<16x512xf32>
    %24 = vector.shape_cast %21 : vector<16x512xf32> to vector<1x16x512xf32>
    tpu.vector_store %arg4[%c0_20, %c0_21, %c0_22], %24 {strides = array<i32>} : memref<1x16x512xf32, #tpu.memory_space<vmem>>, vector<1x16x512xf32>,
    return
  }
  func.func @transform_0(%arg0: i32) -> (i32, i32, i32) {
    %c0_i32 = arith.constant 0 : i32
    %c0_i32_0 = arith.constant 0 : i32
    %c0_i32_1 = arith.constant 0 : i32
    return %arg0, %c0_i32, %c0_i32_0 : i32, i32, i32
  }
  func.func @transform_1(%arg0: i32) -> (i32, i32, i32) {
    %c0_i32 = arith.constant 0 : i32
    %c0_i32_0 = arith.constant 0 : i32
    %c0_i32_1 = arith.constant 0 : i32
    %c0_i32_2 = arith.constant 0 : i32
    return %c0_i32, %c0_i32_0, %c0_i32_1 : i32, i32, i32
  }
  func.func @transform_2(%arg0: i32) -> (i32, i32) {
    %c0_i32 = arith.constant 0 : i32
    %c0_i32_0 = arith.constant 0 : i32
    %c0_i32_1 = arith.constant 0 : i32
    return %c0_i32, %c0_i32_0 : i32, i32
  }
  func.func @transform_3(%arg0: i32) -> (i32, i32, i32) {
    %c0_i32 = arith.constant 0 : i32
    %c0_i32_0 = arith.constant 0 : i32
    %c0_i32_1 = arith.constant 0 : i32
    return %arg0, %c0_i32, %c0_i32_0 : i32, i32, i32
  }
}

</mosaic_0001>

<llo_original>
// kernel: tpu_custom_call.1
$region0: #{tpu_custom_call.1}
  #allocation0 [shape = 'u32[]', space=smem, size = 0x4, offset = 0x4, fixed_abs, tag = 'smem constant byte address 0x4 - core index']
  #allocation1 [shape = 'u32[72,128]{1,0:T(1,128)}', space=vmem, size = 0x9000, scoped, tag = 'internal scratch']
  %s0 = inlined_call_operand.vmem [shape: f32[2,18,72], index: 0, kind: input, shape index: {}]
  %s1 = inlined_call_operand.hbm [shape: f32[3,72,512], index: 1, kind: input, shape index: {}]
  %s2 = inlined_call_operand.vmem [shape: f32[1,512], index: 2, kind: input, shape index: {}]
  %s3 = inlined_call_operand.hbm [shape: f32[2,16,512], index: 3, kind: output, shape index: {}]
  %s4 = sld [smem:[#allocation0]]
  $region49: #{tpu_custom_call.1} parent=0
    _
  %s6 = ssub.s32 1, %s4
  %s7 = scalar_select 0, %s6, %s4
  $region1: #{tpu_custom_call.1} parent=0
    #allocation2 [shape = 'u8[442368]{0}', space=vmem, size = 0x6c000, scoped, tag = 'input window, operand 1, single buffered']
    #allocation3 [shape = 's32[2]{0}', space=sflag, size = 0x8, scoped, tag = 'scoped memory for tpu_custom_call.1']
    #allocation4 [shape = 's32[2]{0}', space=sflag, size = 0x8, scoped, tag = 'scoped memory for tpu_custom_call.1']
    #allocation5 [shape = 'u8[65536]{0}', space=vmem, size = 0x10000, scoped, tag = 'output window, operand 0']
    %8 = vsyncpa [#allocation3], 0
    %9 = vsyncpa [#allocation4], 0
    %s10 = scalar_lea.sflag [#allocation4], 1
    %11 = vsyncpa %s10, 0
    loop: start=0, step=1, limit=4
    $region2: #{tpu_custom_call.1} parent=1 // loop_pre_header
      _
    $region3: #{tpu_custom_call.1} parent=1 // loop_header
      %s13 = sphi 0, %s17
      %p14 = scmp.ge.s32.totalorder %s13, 4
      %s23 = sphi 0, %s25
      %s26 = sphi 0, %s23
      %s27 = sphi 0, %s26
      %s43 = sphi 0, %s27
      %s47 = sphi 0, %s47
      %s49 = sphi 0, %s47
      %s50 = sphi 0, %s49
      %s64 = sphi 0, %s50
      %s68 = sphi 0, %s68
      %s70 = sphi 0, %s68
      %s71 = sphi 0, %s70
      %s85 = sphi 0, %s71
      %s91 = sphi 0, %s93
      %s94 = sphi 0, %s91
      %s95 = sphi 0, %s94
      %s111 = sphi 0, %s95
    $region4: #{tpu_custom_call.1} parent=1 // loop_header_branch
      %16 = sbr.rel (%p14) target = $region8
    $region5: #{tpu_custom_call.1} parent=1 // loop_body
      %s18 = ssub.s32 %s13, 1
      %s19 = ssub.s32 %s13, 2
      %s20 = sadd.s32 %s13, 1
      %s21 = ssub.s32 %s13, %s20
      %p22 = scmp.eq.s32.totalorder %s21, 0
      %s24 = sadd.s32 %s23, 1
      %s25 = scalar_select %p22, %s23, %s24
      %p28 = pneg %p22
      %p29 = scmp.eq.s32.totalorder %s13, 1
      %p30 = por %p28, %p29
      %p31 = scmp.ne.s32.totalorder %s23, %s26
      %p32 = scmp.eq.s32.totalorder %s13, 0
      %p33 = por %p31, %p32
      %p34 = scmp.ne.s32.totalorder %s23, %s26
      %p35 = scmp.eq.s32.totalorder %s18, 1
      %p36 = por %p34, %p35
      %p37 = scmp.ne.s32.totalorder %s26, %s27
      %p38 = scmp.eq.s32.totalorder %s18, 0
      %p39 = por %p37, %p38
      %p40 = scmp.ne.s32.totalorder %s26, %s27
      %p41 = scmp.eq.s32.totalorder %s19, 1
      %p42 = por %p40, %p41
      %p44 = scmp.ne.s32.totalorder %s27, %s43
      %p45 = scmp.eq.s32.totalorder %s19, 0
      %p46 = por %p44, %p45
      %s48 = sadd.s32 %s47, 1
      %p51 = scmp.eq.s32.totalorder %s13, 1
      %p52 = scmp.ne.s32.totalorder %s47, %s49
      %p53 = scmp.eq.s32.totalorder %s13, 0
      %p54 = por %p52, %p53
      %p55 = scmp.ne.s32.totalorder %s47, %s49
      %p56 = scmp.eq.s32.totalorder %s18, 1
      %p57 = por %p55, %p56
      %p58 = scmp.ne.s32.totalorder %s49, %s50
      %p59 = scmp.eq.s32.totalorder %s18, 0
      %p60 = por %p58, %p59
      %p61 = scmp.ne.s32.totalorder %s49, %s50
      %p62 = scmp.eq.s32.totalorder %s19, 1
      %p63 = por %p61, %p62
      %p65 = scmp.ne.s32.totalorder %s50, %s64
      %p66 = scmp.eq.s32.totalorder %s19, 0
      %p67 = por %p65, %p66
      %s69 = sadd.s32 %s68, 1
      %p72 = scmp.eq.s32.totalorder %s13, 1
      %p73 = scmp.ne.s32.totalorder %s68, %s70
      %p74 = scmp.eq.s32.totalorder %s13, 0
      %p75 = por %p73, %p74
      %p76 = scmp.ne.s32.totalorder %s68, %s70
      %p77 = scmp.eq.s32.totalorder %s18, 1
      %p78 = por %p76, %p77
      %p79 = scmp.ne.s32.totalorder %s70, %s71
      %p80 = scmp.eq.s32.totalorder %s18, 0
      %p81 = por %p79, %p80
      %p82 = scmp.ne.s32.totalorder %s70, %s71
      %p83 = scmp.eq.s32.totalorder %s19, 1
      %p84 = por %p82, %p83
      %p86 = scmp.ne.s32.totalorder %s71, %s85
      %p87 = scmp.eq.s32.totalorder %s19, 0
      %p88 = por %p86, %p87
      %s89 = ssub.s32 %s13, %s20
      %p90 = scmp.eq.s32.totalorder %s89, 0
      %s92 = sadd.s32 %s91, 1
      %s93 = scalar_select %p90, %s91, %s92
      %p96 = pneg %p90
      %p97 = scmp.eq.s32.totalorder %s13, 1
      %p98 = por %p96, %p97
      %p99 = scmp.ne.s32.totalorder %s91, %s94
      %p100 = scmp.eq.s32.totalorder %s13, 0
      %p101 = por %p99, %p100
      %p102 = scmp.ne.s32.totalorder %s91, %s94
      %p103 = scmp.eq.s32.totalorder %s18, 1
      %p104 = por %p102, %p103
      %p105 = scmp.ne.s32.totalorder %s94, %s95
      %p106 = scmp.eq.s32.totalorder %s18, 0
      %p107 = por %p105, %p106
      %p108 = scmp.ne.s32.totalorder %s94, %s95
      %p109 = scmp.eq.s32.totalorder %s19, 1
      %p110 = por %p108, %p109
      %p112 = scmp.ne.s32.totalorder %s95, %s111
      %p113 = scmp.eq.s32.totalorder %s19, 0
      %p114 = por %p112, %p113
      %p115 = scmp.le.s32.totalorder 1, %s13
      %p116 = scmp.lt.s32.totalorder %s13, 3
      %p117 = pnand %p115, %p116
      %p118 = pneg %p117
      // Predicated region
      $region9: #{tpu_custom_call.1} parent=5 // pred_check
        _
      $region10: #{tpu_custom_call.1} parent=5 // pred_check_branch
        %120 = sbr.rel (%p117) target = $region12
      $region11: #{tpu_custom_call.1} parent=5 // pred_region
        %s121 = ssub.s32 %s13, 1
        // Predicated region
        $region13: #{tpu_custom_call.1} parent=11 // pred_check
          %p122 = pneg %p60
        $region14: #{tpu_custom_call.1} parent=11 // pred_check_branch
          %124 = sbr.rel (%p122) target = $region16
        $region15: #{tpu_custom_call.1} parent=11 // pred_region
          %126 = vsyncadd [#allocation3], 0
          %s127 = sshll.u32 %s1, 4
          %s128 = int_to_ptr.hbm [resolvable:$true] %s127
          %s129 = sshll.u32 [#allocation2], 4
          %s130 = int_to_ptr.vmem [resolvable:$true] %s129
          %135 = dma.hbm_to_vmem [thread:$0]  %s128, 13824, %s130, [#allocation3], 512, 512, 32
        $region16: #{tpu_custom_call.1} parent=11 // pred_fallthru
          _
        // Predicated region
        $region17: #{tpu_custom_call.1} parent=11 // pred_check
          %p136 = pneg %p81
        $region18: #{tpu_custom_call.1} parent=11 // pred_check_branch
          %138 = sbr.rel (%p136) target = $region20
        $region19: #{tpu_custom_call.1} parent=11 // pred_region
          _
        $region20: #{tpu_custom_call.1} parent=11 // pred_fallthru
          _
      $region12: #{tpu_custom_call.1} parent=5 // pred_fallthru
        _
      %p139 = scmp.lt.s32.totalorder %s13, 2
      // Predicated region
      $region21: #{tpu_custom_call.1} parent=5 // pred_check
        %p140 = pneg %p139
      $region22: #{tpu_custom_call.1} parent=5 // pred_check_branch
        %142 = sbr.rel (%p140) target = $region24
      $region23: #{tpu_custom_call.1} parent=5 // pred_region
        // Predicated region
        $region25: #{tpu_custom_call.1} parent=23 // pred_check
          %p143 = pneg %p33
        $region26: #{tpu_custom_call.1} parent=23 // pred_check_branch
          %145 = sbr.rel (%p143) target = $region28
        $region27: #{tpu_custom_call.1} parent=23 // pred_region
          %p146 = scmp.lt.s32.totalorder %s13, 1
          %s147 = scalar_select %p146, %s13, 1
          %s148 = smul.addr %s147, 3
          %s149 = smul.addr %s148, 8
          %s150 = scalar_lea.vmem %s0, %s149
        $region28: #{tpu_custom_call.1} parent=23 // pred_fallthru
          _
      $region24: #{tpu_custom_call.1} parent=5 // pred_fallthru
        _
      %p151 = scmp.le.s32.totalorder 1, %s13
      %p152 = scmp.lt.s32.totalorder %s13, 3
      %p153 = pnand %p151, %p152
      %p154 = pneg %p153
      // Predicated region
      $region29: #{tpu_custom_call.1} parent=5 // pred_check
        _
      $region30: #{tpu_custom_call.1} parent=5 // pred_check_branch
        %156 = sbr.rel (%p153) target = $region32
      $region31: #{tpu_custom_call.1} parent=5 // pred_region
        %s157 = ssub.s32 %s13, 1
        // Predicated region
        $region33: #{tpu_custom_call.1} parent=31 // pred_check
          %p158 = pneg %p60
        $region34: #{tpu_custom_call.1} parent=31 // pred_check_branch
          %160 = sbr.rel (%p158) target = $region36
        $region35: #{tpu_custom_call.1} parent=31 // pred_region
          %162 = dma.done [#allocation3], 13824
        $region36: #{tpu_custom_call.1} parent=31 // pred_fallthru
          _
        %p163 = scmp.lt.s32.totalorder %s18, 1
        %s164 = scalar_select %p163, %s18, 1
        %s165 = smul.addr %s164, 3
        %s166 = smul.addr %s165, 8
        %s167 = scalar_lea.vmem %s0, %s166
        %p168 = pneg %p39
        %p169 = pneg %p36
        %p170 = pneg %p60
        %p171 = pneg %p57
        %p172 = pneg %p81
        %p173 = pneg %p78
        %p174 = pneg %p107
        %p175 = pneg %p104
        %s176 = sand.u32 %s94, 1
        %s177 = scalar_lea.sflag [#allocation4], %s176
        %s178 = sand.u32 %s94, 1
        %s179 = smul.addr %s178, 64
        %s180 = scalar_lea.vmem [#allocation5], %s179
        %p181 = scmp.lt.s32.totalorder %s18, 1
        %s182 = scalar_select %p181, %s18, 1
        %s183 = smul.addr %s182, 3
        %s184 = smul.addr %s183, 8
        %s185 = scalar_lea.vmem %s0, %s184
        %v186 = vld [vmem:[%s185] sm:$0xff]
        %v187 = vld [vmem:[%s185 + $0x8] sm:$0xff]
        %v188 = vld [vmem:[#allocation2] sm:$0xff]
        %v189 = vld [vmem:[#allocation2 + $0x8] sm:$0xff]
        %v190 = vld [vmem:[#allocation2 + $0x10] sm:$0xff]
        %v191 = vld [vmem:[#allocation2 + $0x18] sm:$0xff]
        %v192 = vld [vmem:[#allocation2 + $0x20] sm:$0xff]
        %v193 = vld [vmem:[#allocation2 + $0x28] sm:$0xff]
        %v194 = vld [vmem:[#allocation2 + $0x30] sm:$0xff]
        %v195 = vld [vmem:[#allocation2 + $0x38] sm:$0xff]
        %v196 = vld [vmem:[#allocation2 + $0x40] sm:$0xff]
        %v197 = vld [vmem:[#allocation2 + $0x48] sm:$0xff]
        %v198 = vld [vmem:[#allocation2 + $0x50] sm:$0xff]
        %v199 = vld [vmem:[#allocation2 + $0x58] sm:$0xff]
        %v200 = vld [vmem:[#allocation2 + $0x60] sm:$0xff]
        %v201 = vld [vmem:[#allocation2 + $0x68] sm:$0xff]
        %v202 = vld [vmem:[#allocation2 + $0x70] sm:$0xff]
        %v203 = vld [vmem:[#allocation2 + $0x78] sm:$0xff]
        %v204 = vld [vmem:[#allocation2 + $0x80] sm:$0xff]
        %v205 = vld [vmem:[#allocation2 + $0x88] sm:$0xff]
        %v206 = vld [vmem:[#allocation2 + $0x90] sm:$0xff]
        %v207 = vld [vmem:[#allocation2 + $0x98] sm:$0xff]
        %v208 = vld [vmem:[#allocation2 + $0xa0] sm:$0xff]
        %v209 = vld [vmem:[#allocation2 + $0xa8] sm:$0xff]
        %v210 = vld [vmem:[#allocation2 + $0xb0] sm:$0xff]
        %v211 = vld [vmem:[#allocation2 + $0xb8] sm:$0xff]
        %v212 = vld [vmem:[#allocation2 + $0xc0] sm:$0xff]
        %v213 = vld [vmem:[#allocation2 + $0xc8] sm:$0xff]
        %v214 = vld [vmem:[#allocation2 + $0xd0] sm:$0xff]
        %v215 = vld [vmem:[#allocation2 + $0xd8] sm:$0xff]
        %v216 = vld [vmem:[#allocation2 + $0xe0] sm:$0xff]
        %v217 = vld [vmem:[#allocation2 + $0xe8] sm:$0xff]
        %v218 = vld [vmem:[#allocation2 + $0xf0] sm:$0xff]
        %v219 = vld [vmem:[#allocation2 + $0xf8] sm:$0xff]
        %v220 = vld [vmem:[#allocation2 + $0x100] sm:$0xff]
        %v221 = vld [vmem:[#allocation2 + $0x108] sm:$0xff]
        %v222 = vld [vmem:[#allocation2 + $0x110] sm:$0xff]
        %v223 = vld [vmem:[#allocation2 + $0x118] sm:$0xff]
        %v224 = vld [vmem:[%s185 + $0x1] sm:$0xff]
        %v225 = vld [vmem:[%s185 + $0x9] sm:$0xff]
        %s226 = scalar_lea.vmem [#allocation2], 288
        %v227 = vld [vmem:[%s226] sm:$0xff]
        %v228 = vld [vmem:[%s226 + $0x8] sm:$0xff]
        %v229 = vld [vmem:[%s226 + $0x10] sm:$0xff]
        %v230 = vld [vmem:[%s226 + $0x18] sm:$0xff]
        %v231 = vld [vmem:[%s226 + $0x20] sm:$0xff]
        %v232 = vld [vmem:[%s226 + $0x28] sm:$0xff]
        %v233 = vld [vmem:[%s226 + $0x30] sm:$0xff]
        %v234 = vld [vmem:[%s226 + $0x38] sm:$0xff]
        %v235 = vld [vmem:[%s226 + $0x40] sm:$0xff]
        %v236 = vld [vmem:[%s226 + $0x48] sm:$0xff]
        %v237 = vld [vmem:[%s226 + $0x50] sm:$0xff]
        %v238 = vld [vmem:[%s226 + $0x58] sm:$0xff]
        %v239 = vld [vmem:[%s226 + $0x60] sm:$0xff]
        %v240 = vld [vmem:[%s226 + $0x68] sm:$0xff]
        %v241 = vld [vmem:[%s226 + $0x70] sm:$0xff]
        %v242 = vld [vmem:[%s226 + $0x78] sm:$0xff]
        %v243 = vld [vmem:[%s226 + $0x80] sm:$0xff]
        %v244 = vld [vmem:[%s226 + $0x88] sm:$0xff]
        %v245 = vld [vmem:[%s226 + $0x90] sm:$0xff]
        %v246 = vld [vmem:[%s226 + $0x98] sm:$0xff]
        %v247 = vld [vmem:[%s226 + $0xa0] sm:$0xff]
        %v248 = vld [vmem:[%s226 + $0xa8] sm:$0xff]
        %v249 = vld [vmem:[%s226 + $0xb0] sm:$0xff]
        %v250 = vld [vmem:[%s226 + $0xb8] sm:$0xff]
        %v251 = vld [vmem:[%s226 + $0xc0] sm:$0xff]
        %v252 = vld [vmem:[%s226 + $0xc8] sm:$0xff]
        %v253 = vld [vmem:[%s226 + $0xd0] sm:$0xff]
        %v254 = vld [vmem:[%s226 + $0xd8] sm:$0xff]
        %v255 = vld [vmem:[%s226 + $0xe0] sm:$0xff]
        %v256 = vld [vmem:[%s226 + $0xe8] sm:$0xff]
        %v257 = vld [vmem:[%s226 + $0xf0] sm:$0xff]
        %v258 = vld [vmem:[%s226 + $0xf8] sm:$0xff]
        %v259 = vld [vmem:[%s226 + $0x100] sm:$0xff]
        %v260 = vld [vmem:[%s226 + $0x108] sm:$0xff]
        %v261 = vld [vmem:[%s226 + $0x110] sm:$0xff]
        %v262 = vld [vmem:[%s226 + $0x118] sm:$0xff]
        %vm263 = vcmask 588800
        %v265 = vsel %vm263, %v224, 0
        %v268 = vsel %vm263, %v225, 0
        %270 = vmatpush.msra.mxu0 0.0
        %271 = vmatpush.msra.mxu0 0.0
        %272 = vmatpush.msra.mxu0 0.0
        %273 = vmatpush.msra.mxu0 0.0
        %274 = vmatpush.msra.mxu0 0.0
        %275 = vmatpush.msra.mxu0 0.0
        %276 = vmatpush.msra.mxu0 0.0
        %v277 = vand.u32 %v259, 4294901760
        %278 = vmatpush.msra.mxu0 %v277
        %v279 = vand.u32 %v255, 4294901760
        %280 = vmatpush.msra.mxu0 %v279
        %v281 = vand.u32 %v251, 4294901760
        %282 = vmatpush.msra.mxu0 %v281
        %v283 = vand.u32 %v247, 4294901760
        %284 = vmatpush.msra.mxu0 %v283
        %v285 = vand.u32 %v243, 4294901760
        %286 = vmatpush.msra.mxu0 %v285
        %v287 = vand.u32 %v239, 4294901760
        %288 = vmatpush.msra.mxu0 %v287
        %v289 = vand.u32 %v235, 4294901760
        %290 = vmatpush.msra.mxu0 %v289
        %v291 = vand.u32 %v231, 4294901760
        %292 = vmatpush.msra.mxu0 %v291
        %v293 = vand.u32 %v227, 4294901760
        %294 = vmatpush.msra.mxu0 %v293
        %v295 = vand.u32 %v265, 4294901760
        %v296 = vsub.f32 %v265, %v295
        %v297 = vand.u32 %v296, 4294901760
        %v298 = vsub.f32 %v296, %v297
        %v299 = vand.u32 %v298, 4294901760
        %300 = vmatmul.f32.gmra.mxu0 %v299
        %v301 = vpop.f32.mrf.mxu0
        %v302 = vadd.f32 0.0, %v301
        %v303 = vand.u32 %v268, 4294901760
        %v304 = vsub.f32 %v268, %v303
        %v305 = vand.u32 %v304, 4294901760
        %v306 = vsub.f32 %v304, %v305
        %v307 = vand.u32 %v306, 4294901760
        %308 = vmatmul.f32.gmra.mxu0 %v307
        %v309 = vpop.f32.mrf.mxu0
        %v310 = vadd.f32 0.0, %v309
        %311 = vdwg.mxu0
        %312 = vmatpush.msra.mxu0 0.0
        %313 = vmatpush.msra.mxu0 0.0
        %314 = vmatpush.msra.mxu0 0.0
        %315 = vmatpush.msra.mxu0 0.0
        %316 = vmatpush.msra.mxu0 0.0
        %317 = vmatpush.msra.mxu0 0.0
        %318 = vmatpush.msra.mxu0 0.0
        %v319 = vand.u32 %v259, 4294901760
        %v320 = vsub.f32 %v259, %v319
        %v321 = vand.u32 %v320, 4294901760
        %v322 = vsub.f32 %v320, %v321
        %v323 = vand.u32 %v322, 4294901760
        %324 = vmatpush.msra.mxu0 %v323
        %v325 = vand.u32 %v255, 4294901760
        %v326 = vsub.f32 %v255, %v325
        %v327 = vand.u32 %v326, 4294901760
        %v328 = vsub.f32 %v326, %v327
        %v329 = vand.u32 %v328, 4294901760
        %330 = vmatpush.msra.mxu0 %v329
        %v331 = vand.u32 %v251, 4294901760
        %v332 = vsub.f32 %v251, %v331
        %v333 = vand.u32 %v332, 4294901760
        %v334 = vsub.f32 %v332, %v333
        %v335 = vand.u32 %v334, 4294901760
        %336 = vmatpush.msra.mxu0 %v335
        %v337 = vand.u32 %v247, 4294901760
        %v338 = vsub.f32 %v247, %v337
        %v339 = vand.u32 %v338, 4294901760
        %v340 = vsub.f32 %v338, %v339
        %v341 = vand.u32 %v340, 4294901760
        %342 = vmatpush.msra.mxu0 %v341
        %v343 = vand.u32 %v243, 4294901760
        %v344 = vsub.f32 %v243, %v343
        %v345 = vand.u32 %v344, 4294901760
        %v346 = vsub.f32 %v344, %v345
        %v347 = vand.u32 %v346, 4294901760
        %348 = vmatpush.msra.mxu0 %v347
        %v349 = vand.u32 %v239, 4294901760
        %v350 = vsub.f32 %v239, %v349
        %v351 = vand.u32 %v350, 4294901760
        %v352 = vsub.f32 %v350, %v351
        %v353 = vand.u32 %v352, 4294901760
        %354 = vmatpush.msra.mxu0 %v353
        %v355 = vand.u32 %v235, 4294901760
        %v356 = vsub.f32 %v235, %v355
        %v357 = vand.u32 %v356, 4294901760
        %v358 = vsub.f32 %v356, %v357
        %v359 = vand.u32 %v358, 4294901760
        %360 = vmatpush.msra.mxu0 %v359
        %v361 = vand.u32 %v231, 4294901760
        %v362 = vsub.f32 %v231, %v361
        %v363 = vand.u32 %v362, 4294901760
        %v364 = vsub.f32 %v362, %v363
        %v365 = vand.u32 %v364, 4294901760
        %366 = vmatpush.msra.mxu0 %v365
        %v367 = vand.u32 %v227, 4294901760
        %v368 = vsub.f32 %v227, %v367
        %v369 = vand.u32 %v368, 4294901760
        %v370 = vsub.f32 %v368, %v369
        %v371 = vand.u32 %v370, 4294901760
        %372 = vmatpush.msra.mxu0 %v371
        %v373 = vand.u32 %v265, 4294901760
        %374 = vmatmul.f32.gmra.mxu0 %v373
        %v375 = vpop.f32.mrf.mxu0
        %v376 = vadd.f32 %v302, %v375
        %v377 = vand.u32 %v268, 4294901760
        %378 = vmatmul.f32.gmra.mxu0 %v377
        %v379 = vpop.f32.mrf.mxu0
        %v380 = vadd.f32 %v310, %v379
        %381 = vdwg.mxu0
        %382 = vmatpush.msra.mxu0 0.0
        %383 = vmatpush.msra.mxu0 0.0
        %384 = vmatpush.msra.mxu0 0.0
        %385 = vmatpush.msra.mxu0 0.0
        %386 = vmatpush.msra.mxu0 0.0
        %387 = vmatpush.msra.mxu0 0.0
        %388 = vmatpush.msra.mxu0 0.0
        %v389 = vand.u32 %v259, 4294901760
        %v390 = vsub.f32 %v259, %v389
        %391 = vmatpush.msra.mxu0 %v390
        %v392 = vand.u32 %v255, 4294901760
        %v393 = vsub.f32 %v255, %v392
        %394 = vmatpush.msra.mxu0 %v393
        %v395 = vand.u32 %v251, 4294901760
        %v396 = vsub.f32 %v251, %v395
        %397 = vmatpush.msra.mxu0 %v396
        %v398 = vand.u32 %v247, 4294901760
        %v399 = vsub.f32 %v247, %v398
        %400 = vmatpush.msra.mxu0 %v399
        %v401 = vand.u32 %v243, 4294901760
        %v402 = vsub.f32 %v243, %v401
        %403 = vmatpush.msra.mxu0 %v402
        %v404 = vand.u32 %v239, 4294901760
        %v405 = vsub.f32 %v239, %v404
        %406 = vmatpush.msra.mxu0 %v405
        %v407 = vand.u32 %v235, 4294901760
        %v408 = vsub.f32 %v235, %v407
        %409 = vmatpush.msra.mxu0 %v408
        %v410 = vand.u32 %v231, 4294901760
        %v411 = vsub.f32 %v231, %v410
        %412 = vmatpush.msra.mxu0 %v411
        %v413 = vand.u32 %v227, 4294901760
        %v414 = vsub.f32 %v227, %v413
        %415 = vmatpush.msra.mxu0 %v414
        %v416 = vand.u32 %v265, 4294901760
        %v417 = vsub.f32 %v265, %v416
        %418 = vmatmul.f32.gmra.mxu0 %v417
        %v419 = vpop.f32.mrf.mxu0
        %v420 = vadd.f32 %v376, %v419
        %v421 = vand.u32 %v268, 4294901760
        %v422 = vsub.f32 %v268, %v421
        %423 = vmatmul.f32.gmra.mxu0 %v422
        %v424 = vpop.f32.mrf.mxu0
        %v425 = vadd.f32 %v380, %v424
        %426 = vdwg.mxu0
        %427 = vmatpush.msra.mxu0 0.0
        %428 = vmatpush.msra.mxu0 0.0
        %429 = vmatpush.msra.mxu0 0.0
        %430 = vmatpush.msra.mxu0 0.0
        %431 = vmatpush.msra.mxu0 0.0
        %432 = vmatpush.msra.mxu0 0.0
        %433 = vmatpush.msra.mxu0 0.0
        %v434 = vand.u32 %v259, 4294901760
        %435 = vmatpush.msra.mxu0 %v434
        %v436 = vand.u32 %v255, 4294901760
        %437 = vmatpush.msra.mxu0 %v436
        %v438 = vand.u32 %v251, 4294901760
        %439 = vmatpush.msra.mxu0 %v438
        %v440 = vand.u32 %v247, 4294901760
        %441 = vmatpush.msra.mxu0 %v440
        %v442 = vand.u32 %v243, 4294901760
        %443 = vmatpush.msra.mxu0 %v442
        %v444 = vand.u32 %v239, 4294901760
        %445 = vmatpush.msra.mxu0 %v444
        %v446 = vand.u32 %v235, 4294901760
        %447 = vmatpush.msra.mxu0 %v446
        %v448 = vand.u32 %v231, 4294901760
        %449 = vmatpush.msra.mxu0 %v448
        %v450 = vand.u32 %v227, 4294901760
        %451 = vmatpush.msra.mxu0 %v450
        %v452 = vand.u32 %v265, 4294901760
        %v453 = vsub.f32 %v265, %v452
        %v454 = vand.u32 %v453, 4294901760
        %455 = vmatmul.f32.gmra.mxu0 %v454
        %v456 = vpop.f32.mrf.mxu0
        %v457 = vadd.f32 %v420, %v456
        %v458 = vand.u32 %v268, 4294901760
        %v459 = vsub.f32 %v268, %v458
        %v460 = vand.u32 %v459, 4294901760
        %461 = vmatmul.f32.gmra.mxu0 %v460
        %v462 = vpop.f32.mrf.mxu0
        %v463 = vadd.f32 %v425, %v462
        %464 = vdwg.mxu0
        %465 = vmatpush.msra.mxu0 0.0
        %466 = vmatpush.msra.mxu0 0.0
        %467 = vmatpush.msra.mxu0 0.0
        %468 = vmatpush.msra.mxu0 0.0
        %469 = vmatpush.msra.mxu0 0.0
        %470 = vmatpush.msra.mxu0 0.0
        %471 = vmatpush.msra.mxu0 0.0
        %v472 = vand.u32 %v259, 4294901760
        %v473 = vsub.f32 %v259, %v472
        %v474 = vand.u32 %v473, 4294901760
        %475 = vmatpush.msra.mxu0 %v474
        %v476 = vand.u32 %v255, 4294901760
        %v477 = vsub.f32 %v255, %v476
        %v478 = vand.u32 %v477, 4294901760
        %479 = vmatpush.msra.mxu0 %v478
        %v480 = vand.u32 %v251, 4294901760
        %v481 = vsub.f32 %v251, %v480
        %v482 = vand.u32 %v481, 4294901760
        %483 = vmatpush.msra.mxu0 %v482
        %v484 = vand.u32 %v247, 4294901760
        %v485 = vsub.f32 %v247, %v484
        %v486 = vand.u32 %v485, 4294901760
        %487 = vmatpush.msra.mxu0 %v486
        %v488 = vand.u32 %v243, 4294901760
        %v489 = vsub.f32 %v243, %v488
        %v490 = vand.u32 %v489, 4294901760
        %491 = vmatpush.msra.mxu0 %v490
        %v492 = vand.u32 %v239, 4294901760
        %v493 = vsub.f32 %v239, %v492
        %v494 = vand.u32 %v493, 4294901760
        %495 = vmatpush.msra.mxu0 %v494
        %v496 = vand.u32 %v235, 4294901760
        %v497 = vsub.f32 %v235, %v496
        %v498 = vand.u32 %v497, 4294901760
        %499 = vmatpush.msra.mxu0 %v498
        %v500 = vand.u32 %v231, 4294901760
        %v501 = vsub.f32 %v231, %v500
        %v502 = vand.u32 %v501, 4294901760
        %503 = vmatpush.msra.mxu0 %v502
        %v504 = vand.u32 %v227, 4294901760
        %v505 = vsub.f32 %v227, %v504
        %v506 = vand.u32 %v505, 4294901760
        %507 = vmatpush.msra.mxu0 %v506
        %v508 = vand.u32 %v265, 4294901760
        %509 = vmatmul.f32.gmra.mxu0 %v508
        %v510 = vpop.f32.mrf.mxu0
        %v511 = vadd.f32 %v457, %v510
        %v512 = vand.u32 %v268, 4294901760
        %513 = vmatmul.f32.gmra.mxu0 %v512
        %v514 = vpop.f32.mrf.mxu0
        %v515 = vadd.f32 %v463, %v514
        %516 = vdwg.mxu0
        %517 = vmatpush.msra.mxu0 0.0
        %518 = vmatpush.msra.mxu0 0.0
        %519 = vmatpush.msra.mxu0 0.0
        %520 = vmatpush.msra.mxu0 0.0
        %521 = vmatpush.msra.mxu0 0.0
        %522 = vmatpush.msra.mxu0 0.0
        %523 = vmatpush.msra.mxu0 0.0
        %v524 = vand.u32 %v259, 4294901760
        %525 = vmatpush.msra.mxu0 %v524
        %v526 = vand.u32 %v255, 4294901760
        %527 = vmatpush.msra.mxu0 %v526
        %v528 = vand.u32 %v251, 4294901760
        %529 = vmatpush.msra.mxu0 %v528
        %v530 = vand.u32 %v247, 4294901760
        %531 = vmatpush.msra.mxu0 %v530
        %v532 = vand.u32 %v243, 4294901760
        %533 = vmatpush.msra.mxu0 %v532
        %v534 = vand.u32 %v239, 4294901760
        %535 = vmatpush.msra.mxu0 %v534
        %v536 = vand.u32 %v235, 4294901760
        %537 = vmatpush.msra.mxu0 %v536
        %v538 = vand.u32 %v231, 4294901760
        %539 = vmatpush.msra.mxu0 %v538
        %v540 = vand.u32 %v227, 4294901760
        %541 = vmatpush.msra.mxu0 %v540
        %v542 = vand.u32 %v265, 4294901760
        %543 = vmatmul.f32.gmra.mxu0 %v542
        %v544 = vpop.f32.mrf.mxu0
        %v545 = vadd.f32 %v511, %v544
        %v546 = vand.u32 %v268, 4294901760
        %547 = vmatmul.f32.gmra.mxu0 %v546
        %v548 = vpop.f32.mrf.mxu0
        %v549 = vadd.f32 %v515, %v548
        %550 = vdwg.mxu0
        %551 = vmatpush.msra.mxu0 0.0
        %552 = vmatpush.msra.mxu0 0.0
        %553 = vmatpush.msra.mxu0 0.0
        %554 = vmatpush.msra.mxu0 0.0
        %555 = vmatpush.msra.mxu0 0.0
        %556 = vmatpush.msra.mxu0 0.0
        %557 = vmatpush.msra.mxu0 0.0
        %v558 = vand.u32 %v260, 4294901760
        %559 = vmatpush.msra.mxu0 %v558
        %v560 = vand.u32 %v256, 4294901760
        %561 = vmatpush.msra.mxu0 %v560
        %v562 = vand.u32 %v252, 4294901760
        %563 = vmatpush.msra.mxu0 %v562
        %v564 = vand.u32 %v248, 4294901760
        %565 = vmatpush.msra.mxu0 %v564
        %v566 = vand.u32 %v244, 4294901760
        %567 = vmatpush.msra.mxu0 %v566
        %v568 = vand.u32 %v240, 4294901760
        %569 = vmatpush.msra.mxu0 %v568
        %v570 = vand.u32 %v236, 4294901760
        %571 = vmatpush.msra.mxu0 %v570
        %v572 = vand.u32 %v232, 4294901760
        %573 = vmatpush.msra.mxu0 %v572
        %v574 = vand.u32 %v228, 4294901760
        %575 = vmatpush.msra.mxu0 %v574
        %v576 = vand.u32 %v265, 4294901760
        %v577 = vsub.f32 %v265, %v576
        %v578 = vand.u32 %v577, 4294901760
        %v579 = vsub.f32 %v577, %v578
        %v580 = vand.u32 %v579, 4294901760
        %581 = vmatmul.f32.gmra.mxu0 %v580
        %v582 = vpop.f32.mrf.mxu0
        %v583 = vadd.f32 0.0, %v582
        %v584 = vand.u32 %v268, 4294901760
        %v585 = vsub.f32 %v268, %v584
        %v586 = vand.u32 %v585, 4294901760
        %v587 = vsub.f32 %v585, %v586
        %v588 = vand.u32 %v587, 4294901760
        %589 = vmatmul.f32.gmra.mxu0 %v588
        %v590 = vpop.f32.mrf.mxu0
        %v591 = vadd.f32 0.0, %v590
        %592 = vdwg.mxu0
        %593 = vmatpush.msra.mxu0 0.0
        %594 = vmatpush.msra.mxu0 0.0
        %595 = vmatpush.msra.mxu0 0.0
        %596 = vmatpush.msra.mxu0 0.0
        %597 = vmatpush.msra.mxu0 0.0
        %598 = vmatpush.msra.mxu0 0.0
        %599 = vmatpush.msra.mxu0 0.0
        %v600 = vand.u32 %v260, 4294901760
        %v601 = vsub.f32 %v260, %v600
        %v602 = vand.u32 %v601, 4294901760
        %v603 = vsub.f32 %v601, %v602
        %v604 = vand.u32 %v603, 4294901760
        %605 = vmatpush.msra.mxu0 %v604
        %v606 = vand.u32 %v256, 4294901760
        %v607 = vsub.f32 %v256, %v606
        %v608 = vand.u32 %v607, 4294901760
        %v609 = vsub.f32 %v607, %v608
        %v610 = vand.u32 %v609, 4294901760
        %611 = vmatpush.msra.mxu0 %v610
        %v612 = vand.u32 %v252, 4294901760
        %v613 = vsub.f32 %v252, %v612
        %v614 = vand.u32 %v613, 4294901760
        %v615 = vsub.f32 %v613, %v614
        %v616 = vand.u32 %v615, 4294901760
        %617 = vmatpush.msra.mxu0 %v616
        %v618 = vand.u32 %v248, 4294901760
        %v619 = vsub.f32 %v248, %v618
        %v620 = vand.u32 %v619, 4294901760
        %v621 = vsub.f32 %v619, %v620
        %v622 = vand.u32 %v621, 4294901760
        %623 = vmatpush.msra.mxu0 %v622
        %v624 = vand.u32 %v244, 4294901760
        %v625 = vsub.f32 %v244, %v624
        %v626 = vand.u32 %v625, 4294901760
        %v627 = vsub.f32 %v625, %v626
        %v628 = vand.u32 %v627, 4294901760
        %629 = vmatpush.msra.mxu0 %v628
        %v630 = vand.u32 %v240, 4294901760
        %v631 = vsub.f32 %v240, %v630
        %v632 = vand.u32 %v631, 4294901760
        %v633 = vsub.f32 %v631, %v632
        %v634 = vand.u32 %v633, 4294901760
        %635 = vmatpush.msra.mxu0 %v634
        %v636 = vand.u32 %v236, 4294901760
        %v637 = vsub.f32 %v236, %v636
        %v638 = vand.u32 %v637, 4294901760
        %v639 = vsub.f32 %v637, %v638
        %v640 = vand.u32 %v639, 4294901760
        %641 = vmatpush.msra.mxu0 %v640
        %v642 = vand.u32 %v232, 4294901760
        %v643 = vsub.f32 %v232, %v642
        %v644 = vand.u32 %v643, 4294901760
        %v645 = vsub.f32 %v643, %v644
        %v646 = vand.u32 %v645, 4294901760
        %647 = vmatpush.msra.mxu0 %v646
        %v648 = vand.u32 %v228, 4294901760
        %v649 = vsub.f32 %v228, %v648
        %v650 = vand.u32 %v649, 4294901760
        %v651 = vsub.f32 %v649, %v650
        %v652 = vand.u32 %v651, 4294901760
        %653 = vmatpush.msra.mxu0 %v652
        %v654 = vand.u32 %v265, 4294901760
        %655 = vmatmul.f32.gmra.mxu0 %v654
        %v656 = vpop.f32.mrf.mxu0
        %v657 = vadd.f32 %v583, %v656
        %v658 = vand.u32 %v268, 4294901760
        %659 = vmatmul.f32.gmra.mxu0 %v658
        %v660 = vpop.f32.mrf.mxu0
        %v661 = vadd.f32 %v591, %v660
        %662 = vdwg.mxu0
        %663 = vmatpush.msra.mxu0 0.0
        %664 = vmatpush.msra.mxu0 0.0
        %665 = vmatpush.msra.mxu0 0.0
        %666 = vmatpush.msra.mxu0 0.0
        %667 = vmatpush.msra.mxu0 0.0
        %668 = vmatpush.msra.mxu0 0.0
        %669 = vmatpush.msra.mxu0 0.0
        %v670 = vand.u32 %v260, 4294901760
        %v671 = vsub.f32 %v260, %v670
        %672 = vmatpush.msra.mxu0 %v671
        %v673 = vand.u32 %v256, 4294901760
        %v674 = vsub.f32 %v256, %v673
        %675 = vmatpush.msra.mxu0 %v674
        %v676 = vand.u32 %v252, 4294901760
        %v677 = vsub.f32 %v252, %v676
        %678 = vmatpush.msra.mxu0 %v677
        %v679 = vand.u32 %v248, 4294901760
        %v680 = vsub.f32 %v248, %v679
        %681 = vmatpush.msra.mxu0 %v680
        %v682 = vand.u32 %v244, 4294901760
        %v683 = vsub.f32 %v244, %v682
        %684 = vmatpush.msra.mxu0 %v683
        %v685 = vand.u32 %v240, 4294901760
        %v686 = vsub.f32 %v240, %v685
        %687 = vmatpush.msra.mxu0 %v686
        %v688 = vand.u32 %v236, 4294901760
        %v689 = vsub.f32 %v236, %v688
        %690 = vmatpush.msra.mxu0 %v689
        %v691 = vand.u32 %v232, 4294901760
        %v692 = vsub.f32 %v232, %v691
        %693 = vmatpush.msra.mxu0 %v692
        %v694 = vand.u32 %v228, 4294901760
        %v695 = vsub.f32 %v228, %v694
        %696 = vmatpush.msra.mxu0 %v695
        %v697 = vand.u32 %v265, 4294901760
        %v698 = vsub.f32 %v265, %v697
        %699 = vmatmul.f32.gmra.mxu0 %v698
        %v700 = vpop.f32.mrf.mxu0
        %v701 = vadd.f32 %v657, %v700
        %v702 = vand.u32 %v268, 4294901760
        %v703 = vsub.f32 %v268, %v702
        %704 = vmatmul.f32.gmra.mxu0 %v703
        %v705 = vpop.f32.mrf.mxu0
        %v706 = vadd.f32 %v661, %v705
        %707 = vdwg.mxu0
        %708 = vmatpush.msra.mxu0 0.0
        %709 = vmatpush.msra.mxu0 0.0
        %710 = vmatpush.msra.mxu0 0.0
        %711 = vmatpush.msra.mxu0 0.0
        %712 = vmatpush.msra.mxu0 0.0
        %713 = vmatpush.msra.mxu0 0.0
        %714 = vmatpush.msra.mxu0 0.0
        %v715 = vand.u32 %v260, 4294901760
        %716 = vmatpush.msra.mxu0 %v715
        %v717 = vand.u32 %v256, 4294901760
        %718 = vmatpush.msra.mxu0 %v717
        %v719 = vand.u32 %v252, 4294901760
        %720 = vmatpush.msra.mxu0 %v719
        %v721 = vand.u32 %v248, 4294901760
        %722 = vmatpush.msra.mxu0 %v721
        %v723 = vand.u32 %v244, 4294901760
        %724 = vmatpush.msra.mxu0 %v723
        %v725 = vand.u32 %v240, 4294901760
        %726 = vmatpush.msra.mxu0 %v725
        %v727 = vand.u32 %v236, 4294901760
        %728 = vmatpush.msra.mxu0 %v727
        %v729 = vand.u32 %v232, 4294901760
        %730 = vmatpush.msra.mxu0 %v729
        %v731 = vand.u32 %v228, 4294901760
        %732 = vmatpush.msra.mxu0 %v731
        %v733 = vand.u32 %v265, 4294901760
        %v734 = vsub.f32 %v265, %v733
        %v735 = vand.u32 %v734, 4294901760
        %736 = vmatmul.f32.gmra.mxu0 %v735
        %v737 = vpop.f32.mrf.mxu0
        %v738 = vadd.f32 %v701, %v737
        %v739 = vand.u32 %v268, 4294901760
        %v740 = vsub.f32 %v268, %v739
        %v741 = vand.u32 %v740, 4294901760
        %742 = vmatmul.f32.gmra.mxu0 %v741
        %v743 = vpop.f32.mrf.mxu0
        %v744 = vadd.f32 %v706, %v743
        %745 = vdwg.mxu0
        %746 = vmatpush.msra.mxu0 0.0
        %747 = vmatpush.msra.mxu0 0.0
        %748 = vmatpush.msra.mxu0 0.0
        %749 = vmatpush.msra.mxu0 0.0
        %750 = vmatpush.msra.mxu0 0.0
        %751 = vmatpush.msra.mxu0 0.0
        %752 = vmatpush.msra.mxu0 0.0
        %v753 = vand.u32 %v260, 4294901760
        %v754 = vsub.f32 %v260, %v753
        %v755 = vand.u32 %v754, 4294901760
        %756 = vmatpush.msra.mxu0 %v755
        %v757 = vand.u32 %v256, 4294901760
        %v758 = vsub.f32 %v256, %v757
        %v759 = vand.u32 %v758, 4294901760
        %760 = vmatpush.msra.mxu0 %v759
        %v761 = vand.u32 %v252, 4294901760
        %v762 = vsub.f32 %v252, %v761
        %v763 = vand.u32 %v762, 4294901760
        %764 = vmatpush.msra.mxu0 %v763
        %v765 = vand.u32 %v248, 4294901760
        %v766 = vsub.f32 %v248, %v765
        %v767 = vand.u32 %v766, 4294901760
        %768 = vmatpush.msra.mxu0 %v767
        %v769 = vand.u32 %v244, 4294901760
        %v770 = vsub.f32 %v244, %v769
        %v771 = vand.u32 %v770, 4294901760
        %772 = vmatpush.msra.mxu0 %v771
        %v773 = vand.u32 %v240, 4294901760
        %v774 = vsub.f32 %v240, %v773
        %v775 = vand.u32 %v774, 4294901760
        %776 = vmatpush.msra.mxu0 %v775
        %v777 = vand.u32 %v236, 4294901760
        %v778 = vsub.f32 %v236, %v777
        %v779 = vand.u32 %v778, 4294901760
        %780 = vmatpush.msra.mxu0 %v779
        %v781 = vand.u32 %v232, 4294901760
        %v782 = vsub.f32 %v232, %v781
        %v783 = vand.u32 %v782, 4294901760
        %784 = vmatpush.msra.mxu0 %v783
        %v785 = vand.u32 %v228, 4294901760
        %v786 = vsub.f32 %v228, %v785
        %v787 = vand.u32 %v786, 4294901760
        %788 = vmatpush.msra.mxu0 %v787
        %v789 = vand.u32 %v265, 4294901760
        %790 = vmatmul.f32.gmra.mxu0 %v789
        %v791 = vpop.f32.mrf.mxu0
        %v792 = vadd.f32 %v738, %v791
        %v793 = vand.u32 %v268, 4294901760
        %794 = vmatmul.f32.gmra.mxu0 %v793
        %v795 = vpop.f32.mrf.mxu0
        %v796 = vadd.f32 %v744, %v795
        %797 = vdwg.mxu0
        %798 = vmatpush.msra.mxu0 0.0
        %799 = vmatpush.msra.mxu0 0.0
        %800 = vmatpush.msra.mxu0 0.0
        %801 = vmatpush.msra.mxu0 0.0
        %802 = vmatpush.msra.mxu0 0.0
        %803 = vmatpush.msra.mxu0 0.0
        %804 = vmatpush.msra.mxu0 0.0
        %v805 = vand.u32 %v260, 4294901760
        %806 = vmatpush.msra.mxu0 %v805
        %v807 = vand.u32 %v256, 4294901760
        %808 = vmatpush.msra.mxu0 %v807
        %v809 = vand.u32 %v252, 4294901760
        %810 = vmatpush.msra.mxu0 %v809
        %v811 = vand.u32 %v248, 4294901760
        %812 = vmatpush.msra.mxu0 %v811
        %v813 = vand.u32 %v244, 4294901760
        %814 = vmatpush.msra.mxu0 %v813
        %v815 = vand.u32 %v240, 4294901760
        %816 = vmatpush.msra.mxu0 %v815
        %v817 = vand.u32 %v236, 4294901760
        %818 = vmatpush.msra.mxu0 %v817
        %v819 = vand.u32 %v232, 4294901760
        %820 = vmatpush.msra.mxu0 %v819
        %v821 = vand.u32 %v228, 4294901760
        %822 = vmatpush.msra.mxu0 %v821
        %v823 = vand.u32 %v265, 4294901760
        %824 = vmatmul.f32.gmra.mxu0 %v823
        %v825 = vpop.f32.mrf.mxu0
        %v826 = vadd.f32 %v792, %v825
        %v827 = vand.u32 %v268, 4294901760
        %828 = vmatmul.f32.gmra.mxu0 %v827
        %v829 = vpop.f32.mrf.mxu0
        %v830 = vadd.f32 %v796, %v829
        %831 = vdwg.mxu0
        %832 = vmatpush.msra.mxu0 0.0
        %833 = vmatpush.msra.mxu0 0.0
        %834 = vmatpush.msra.mxu0 0.0
        %835 = vmatpush.msra.mxu0 0.0
        %836 = vmatpush.msra.mxu0 0.0
        %837 = vmatpush.msra.mxu0 0.0
        %838 = vmatpush.msra.mxu0 0.0
        %v839 = vand.u32 %v261, 4294901760
        %840 = vmatpush.msra.mxu0 %v839
        %v841 = vand.u32 %v257, 4294901760
        %842 = vmatpush.msra.mxu0 %v841
        %v843 = vand.u32 %v253, 4294901760
        %844 = vmatpush.msra.mxu0 %v843
        %v845 = vand.u32 %v249, 4294901760
        %846 = vmatpush.msra.mxu0 %v845
        %v847 = vand.u32 %v245, 4294901760
        %848 = vmatpush.msra.mxu0 %v847
        %v849 = vand.u32 %v241, 4294901760
        %850 = vmatpush.msra.mxu0 %v849
        %v851 = vand.u32 %v237, 4294901760
        %852 = vmatpush.msra.mxu0 %v851
        %v853 = vand.u32 %v233, 4294901760
        %854 = vmatpush.msra.mxu0 %v853
        %v855 = vand.u32 %v229, 4294901760
        %856 = vmatpush.msra.mxu0 %v855
        %v857 = vand.u32 %v265, 4294901760
        %v858 = vsub.f32 %v265, %v857
        %v859 = vand.u32 %v858, 4294901760
        %v860 = vsub.f32 %v858, %v859
        %v861 = vand.u32 %v860, 4294901760
        %862 = vmatmul.f32.gmra.mxu0 %v861
        %v863 = vpop.f32.mrf.mxu0
        %v864 = vadd.f32 0.0, %v863
        %v865 = vand.u32 %v268, 4294901760
        %v866 = vsub.f32 %v268, %v865
        %v867 = vand.u32 %v866, 4294901760
        %v868 = vsub.f32 %v866, %v867
        %v869 = vand.u32 %v868, 4294901760
        %870 = vmatmul.f32.gmra.mxu0 %v869
        %v871 = vpop.f32.mrf.mxu0
        %v872 = vadd.f32 0.0, %v871
        %873 = vdwg.mxu0
        %874 = vmatpush.msra.mxu0 0.0
        %875 = vmatpush.msra.mxu0 0.0
        %876 = vmatpush.msra.mxu0 0.0
        %877 = vmatpush.msra.mxu0 0.0
        %878 = vmatpush.msra.mxu0 0.0
        %879 = vmatpush.msra.mxu0 0.0
        %880 = vmatpush.msra.mxu0 0.0
        %v881 = vand.u32 %v261, 4294901760
        %v882 = vsub.f32 %v261, %v881
        %v883 = vand.u32 %v882, 4294901760
        %v884 = vsub.f32 %v882, %v883
        %v885 = vand.u32 %v884, 4294901760
        %886 = vmatpush.msra.mxu0 %v885
        %v887 = vand.u32 %v257, 4294901760
        %v888 = vsub.f32 %v257, %v887
        %v889 = vand.u32 %v888, 4294901760
        %v890 = vsub.f32 %v888, %v889
        %v891 = vand.u32 %v890, 4294901760
        %892 = vmatpush.msra.mxu0 %v891
        %v893 = vand.u32 %v253, 4294901760
        %v894 = vsub.f32 %v253, %v893
        %v895 = vand.u32 %v894, 4294901760
        %v896 = vsub.f32 %v894, %v895
        %v897 = vand.u32 %v896, 4294901760
        %898 = vmatpush.msra.mxu0 %v897
        %v899 = vand.u32 %v249, 4294901760
        %v900 = vsub.f32 %v249, %v899
        %v901 = vand.u32 %v900, 4294901760
        %v902 = vsub.f32 %v900, %v901
        %v903 = vand.u32 %v902, 4294901760
        %904 = vmatpush.msra.mxu0 %v903
        %v905 = vand.u32 %v245, 4294901760
        %v906 = vsub.f32 %v245, %v905
        %v907 = vand.u32 %v906, 4294901760
        %v908 = vsub.f32 %v906, %v907
        %v909 = vand.u32 %v908, 4294901760
        %910 = vmatpush.msra.mxu0 %v909
        %v911 = vand.u32 %v241, 4294901760
        %v912 = vsub.f32 %v241, %v911
        %v913 = vand.u32 %v912, 4294901760
        %v914 = vsub.f32 %v912, %v913
        %v915 = vand.u32 %v914, 4294901760
        %916 = vmatpush.msra.mxu0 %v915
        %v917 = vand.u32 %v237, 4294901760
        %v918 = vsub.f32 %v237, %v917
        %v919 = vand.u32 %v918, 4294901760
        %v920 = vsub.f32 %v918, %v919
        %v921 = vand.u32 %v920, 4294901760
        %922 = vmatpush.msra.mxu0 %v921
        %v923 = vand.u32 %v233, 4294901760
        %v924 = vsub.f32 %v233, %v923
        %v925 = vand.u32 %v924, 4294901760
        %v926 = vsub.f32 %v924, %v925
        %v927 = vand.u32 %v926, 4294901760
        %928 = vmatpush.msra.mxu0 %v927
        %v929 = vand.u32 %v229, 4294901760
        %v930 = vsub.f32 %v229, %v929
        %v931 = vand.u32 %v930, 4294901760
        %v932 = vsub.f32 %v930, %v931
        %v933 = vand.u32 %v932, 4294901760
        %934 = vmatpush.msra.mxu0 %v933
        %v935 = vand.u32 %v265, 4294901760
        %936 = vmatmul.f32.gmra.mxu0 %v935
        %v937 = vpop.f32.mrf.mxu0
        %v938 = vadd.f32 %v864, %v937
        %v939 = vand.u32 %v268, 4294901760
        %940 = vmatmul.f32.gmra.mxu0 %v939
        %v941 = vpop.f32.mrf.mxu0
        %v942 = vadd.f32 %v872, %v941
        %943 = vdwg.mxu0
        %944 = vmatpush.msra.mxu0 0.0
        %945 = vmatpush.msra.mxu0 0.0
        %946 = vmatpush.msra.mxu0 0.0
        %947 = vmatpush.msra.mxu0 0.0
        %948 = vmatpush.msra.mxu0 0.0
        %949 = vmatpush.msra.mxu0 0.0
        %950 = vmatpush.msra.mxu0 0.0
        %v951 = vand.u32 %v261, 4294901760
        %v952 = vsub.f32 %v261, %v951
        %953 = vmatpush.msra.mxu0 %v952
        %v954 = vand.u32 %v257, 4294901760
        %v955 = vsub.f32 %v257, %v954
        %956 = vmatpush.msra.mxu0 %v955
        %v957 = vand.u32 %v253, 4294901760
        %v958 = vsub.f32 %v253, %v957
        %959 = vmatpush.msra.mxu0 %v958
        %v960 = vand.u32 %v249, 4294901760
        %v961 = vsub.f32 %v249, %v960
        %962 = vmatpush.msra.mxu0 %v961
        %v963 = vand.u32 %v245, 4294901760
        %v964 = vsub.f32 %v245, %v963
        %965 = vmatpush.msra.mxu0 %v964
        %v966 = vand.u32 %v241, 4294901760
        %v967 = vsub.f32 %v241, %v966
        %968 = vmatpush.msra.mxu0 %v967
        %v969 = vand.u32 %v237, 4294901760
        %v970 = vsub.f32 %v237, %v969
        %971 = vmatpush.msra.mxu0 %v970
        %v972 = vand.u32 %v233, 4294901760
        %v973 = vsub.f32 %v233, %v972
        %974 = vmatpush.msra.mxu0 %v973
        %v975 = vand.u32 %v229, 4294901760
        %v976 = vsub.f32 %v229, %v975
        %977 = vmatpush.msra.mxu0 %v976
        %v978 = vand.u32 %v265, 4294901760
        %v979 = vsub.f32 %v265, %v978
        %980 = vmatmul.f32.gmra.mxu0 %v979
        %v981 = vpop.f32.mrf.mxu0
        %v982 = vadd.f32 %v938, %v981
        %v983 = vand.u32 %v268, 4294901760
        %v984 = vsub.f32 %v268, %v983
        %985 = vmatmul.f32.gmra.mxu0 %v984
        %v986 = vpop.f32.mrf.mxu0
        %v987 = vadd.f32 %v942, %v986
        %988 = vdwg.mxu0
        %989 = vmatpush.msra.mxu0 0.0
        %990 = vmatpush.msra.mxu0 0.0
        %991 = vmatpush.msra.mxu0 0.0
        %992 = vmatpush.msra.mxu0 0.0
        %993 = vmatpush.msra.mxu0 0.0
        %994 = vmatpush.msra.mxu0 0.0
        %995 = vmatpush.msra.mxu0 0.0
        %v996 = vand.u32 %v261, 4294901760
        %997 = vmatpush.msra.mxu0 %v996
        %v998 = vand.u32 %v257, 4294901760
        %999 = vmatpush.msra.mxu0 %v998
        %v1000 = vand.u32 %v253, 4294901760
        %1001 = vmatpush.msra.mxu0 %v1000
        %v1002 = vand.u32 %v249, 4294901760
        %1003 = vmatpush.msra.mxu0 %v1002
        %v1004 = vand.u32 %v245, 4294901760
        %1005 = vmatpush.msra.mxu0 %v1004
        %v1006 = vand.u32 %v241, 4294901760
        %1007 = vmatpush.msra.mxu0 %v1006
        %v1008 = vand.u32 %v237, 4294901760
        %1009 = vmatpush.msra.mxu0 %v1008
        %v1010 = vand.u32 %v233, 4294901760
        %1011 = vmatpush.msra.mxu0 %v1010
        %v1012 = vand.u32 %v229, 4294901760
        %1013 = vmatpush.msra.mxu0 %v1012
        %v1014 = vand.u32 %v265, 4294901760
        %v1015 = vsub.f32 %v265, %v1014
        %v1016 = vand.u32 %v1015, 4294901760
        %1017 = vmatmul.f32.gmra.mxu0 %v1016
        %v1018 = vpop.f32.mrf.mxu0
        %v1019 = vadd.f32 %v982, %v1018
        %v1020 = vand.u32 %v268, 4294901760
        %v1021 = vsub.f32 %v268, %v1020
        %v1022 = vand.u32 %v1021, 4294901760
        %1023 = vmatmul.f32.gmra.mxu0 %v1022
        %v1024 = vpop.f32.mrf.mxu0
        %v1025 = vadd.f32 %v987, %v1024
        %1026 = vdwg.mxu0
        %1027 = vmatpush.msra.mxu0 0.0
        %1028 = vmatpush.msra.mxu0 0.0
        %1029 = vmatpush.msra.mxu0 0.0
        %1030 = vmatpush.msra.mxu0 0.0
        %1031 = vmatpush.msra.mxu0 0.0
        %1032 = vmatpush.msra.mxu0 0.0
        %1033 = vmatpush.msra.mxu0 0.0
        %v1034 = vand.u32 %v261, 4294901760
        %v1035 = vsub.f32 %v261, %v1034
        %v1036 = vand.u32 %v1035, 4294901760
        %1037 = vmatpush.msra.mxu0 %v1036
        %v1038 = vand.u32 %v257, 4294901760
        %v1039 = vsub.f32 %v257, %v1038
        %v1040 = vand.u32 %v1039, 4294901760
        %1041 = vmatpush.msra.mxu0 %v1040
        %v1042 = vand.u32 %v253, 4294901760
        %v1043 = vsub.f32 %v253, %v1042
        %v1044 = vand.u32 %v1043, 4294901760
        %1045 = vmatpush.msra.mxu0 %v1044
        %v1046 = vand.u32 %v249, 4294901760
        %v1047 = vsub.f32 %v249, %v1046
        %v1048 = vand.u32 %v1047, 4294901760
        %1049 = vmatpush.msra.mxu0 %v1048
        %v1050 = vand.u32 %v245, 4294901760
        %v1051 = vsub.f32 %v245, %v1050
        %v1052 = vand.u32 %v1051, 4294901760
        %1053 = vmatpush.msra.mxu0 %v1052
        %v1054 = vand.u32 %v241, 4294901760
        %v1055 = vsub.f32 %v241, %v1054
        %v1056 = vand.u32 %v1055, 4294901760
        %1057 = vmatpush.msra.mxu0 %v1056
        %v1058 = vand.u32 %v237, 4294901760
        %v1059 = vsub.f32 %v237, %v1058
        %v1060 = vand.u32 %v1059, 4294901760
        %1061 = vmatpush.msra.mxu0 %v1060
        %v1062 = vand.u32 %v233, 4294901760
        %v1063 = vsub.f32 %v233, %v1062
        %v1064 = vand.u32 %v1063, 4294901760
        %1065 = vmatpush.msra.mxu0 %v1064
        %v1066 = vand.u32 %v229, 4294901760
        %v1067 = vsub.f32 %v229, %v1066
        %v1068 = vand.u32 %v1067, 4294901760
        %1069 = vmatpush.msra.mxu0 %v1068
        %v1070 = vand.u32 %v265, 4294901760
        %1071 = vmatmul.f32.gmra.mxu0 %v1070
        %v1072 = vpop.f32.mrf.mxu0
        %v1073 = vadd.f32 %v1019, %v1072
        %v1074 = vand.u32 %v268, 4294901760
        %1075 = vmatmul.f32.gmra.mxu0 %v1074
        %v1076 = vpop.f32.mrf.mxu0
        %v1077 = vadd.f32 %v1025, %v1076
        %1078 = vdwg.mxu0
        %1079 = vmatpush.msra.mxu0 0.0
        %1080 = vmatpush.msra.mxu0 0.0
        %1081 = vmatpush.msra.mxu0 0.0
        %1082 = vmatpush.msra.mxu0 0.0
        %1083 = vmatpush.msra.mxu0 0.0
        %1084 = vmatpush.msra.mxu0 0.0
        %1085 = vmatpush.msra.mxu0 0.0
        %v1086 = vand.u32 %v261, 4294901760
        %1087 = vmatpush.msra.mxu0 %v1086
        %v1088 = vand.u32 %v257, 4294901760
        %1089 = vmatpush.msra.mxu0 %v1088
        %v1090 = vand.u32 %v253, 4294901760
        %1091 = vmatpush.msra.mxu0 %v1090
        %v1092 = vand.u32 %v249, 4294901760
        %1093 = vmatpush.msra.mxu0 %v1092
        %v1094 = vand.u32 %v245, 4294901760
        %1095 = vmatpush.msra.mxu0 %v1094
        %v1096 = vand.u32 %v241, 4294901760
        %1097 = vmatpush.msra.mxu0 %v1096
        %v1098 = vand.u32 %v237, 4294901760
        %1099 = vmatpush.msra.mxu0 %v1098
        %v1100 = vand.u32 %v233, 4294901760
        %1101 = vmatpush.msra.mxu0 %v1100
        %v1102 = vand.u32 %v229, 4294901760
        %1103 = vmatpush.msra.mxu0 %v1102
        %v1104 = vand.u32 %v265, 4294901760
        %1105 = vmatmul.f32.gmra.mxu0 %v1104
        %v1106 = vpop.f32.mrf.mxu0
        %v1107 = vadd.f32 %v1073, %v1106
        %v1108 = vand.u32 %v268, 4294901760
        %1109 = vmatmul.f32.gmra.mxu0 %v1108
        %v1110 = vpop.f32.mrf.mxu0
        %v1111 = vadd.f32 %v1077, %v1110
        %1112 = vdwg.mxu0
        %1113 = vmatpush.msra.mxu0 0.0
        %1114 = vmatpush.msra.mxu0 0.0
        %1115 = vmatpush.msra.mxu0 0.0
        %1116 = vmatpush.msra.mxu0 0.0
        %1117 = vmatpush.msra.mxu0 0.0
        %1118 = vmatpush.msra.mxu0 0.0
        %1119 = vmatpush.msra.mxu0 0.0
        %v1120 = vand.u32 %v262, 4294901760
        %1121 = vmatpush.msra.mxu0 %v1120
        %v1122 = vand.u32 %v258, 4294901760
        %1123 = vmatpush.msra.mxu0 %v1122
        %v1124 = vand.u32 %v254, 4294901760
        %1125 = vmatpush.msra.mxu0 %v1124
        %v1126 = vand.u32 %v250, 4294901760
        %1127 = vmatpush.msra.mxu0 %v1126
        %v1128 = vand.u32 %v246, 4294901760
        %1129 = vmatpush.msra.mxu0 %v1128
        %v1130 = vand.u32 %v242, 4294901760
        %1131 = vmatpush.msra.mxu0 %v1130
        %v1132 = vand.u32 %v238, 4294901760
        %1133 = vmatpush.msra.mxu0 %v1132
        %v1134 = vand.u32 %v234, 4294901760
        %1135 = vmatpush.msra.mxu0 %v1134
        %v1136 = vand.u32 %v230, 4294901760
        %1137 = vmatpush.msra.mxu0 %v1136
        %v1138 = vand.u32 %v265, 4294901760
        %v1139 = vsub.f32 %v265, %v1138
        %v1140 = vand.u32 %v1139, 4294901760
        %v1141 = vsub.f32 %v1139, %v1140
        %v1142 = vand.u32 %v1141, 4294901760
        %1143 = vmatmul.f32.gmra.mxu0 %v1142
        %v1144 = vpop.f32.mrf.mxu0
        %v1145 = vadd.f32 0.0, %v1144
        %v1146 = vand.u32 %v268, 4294901760
        %v1147 = vsub.f32 %v268, %v1146
        %v1148 = vand.u32 %v1147, 4294901760
        %v1149 = vsub.f32 %v1147, %v1148
        %v1150 = vand.u32 %v1149, 4294901760
        %1151 = vmatmul.f32.gmra.mxu0 %v1150
        %v1152 = vpop.f32.mrf.mxu0
        %v1153 = vadd.f32 0.0, %v1152
        %1154 = vdwg.mxu0
        %1155 = vmatpush.msra.mxu0 0.0
        %1156 = vmatpush.msra.mxu0 0.0
        %1157 = vmatpush.msra.mxu0 0.0
        %1158 = vmatpush.msra.mxu0 0.0
        %1159 = vmatpush.msra.mxu0 0.0
        %1160 = vmatpush.msra.mxu0 0.0
        %1161 = vmatpush.msra.mxu0 0.0
        %v1162 = vand.u32 %v262, 4294901760
        %v1163 = vsub.f32 %v262, %v1162
        %v1164 = vand.u32 %v1163, 4294901760
        %v1165 = vsub.f32 %v1163, %v1164
        %v1166 = vand.u32 %v1165, 4294901760
        %1167 = vmatpush.msra.mxu0 %v1166
        %v1168 = vand.u32 %v258, 4294901760
        %v1169 = vsub.f32 %v258, %v1168
        %v1170 = vand.u32 %v1169, 4294901760
        %v1171 = vsub.f32 %v1169, %v1170
        %v1172 = vand.u32 %v1171, 4294901760
        %1173 = vmatpush.msra.mxu0 %v1172
        %v1174 = vand.u32 %v254, 4294901760
        %v1175 = vsub.f32 %v254, %v1174
        %v1176 = vand.u32 %v1175, 4294901760
        %v1177 = vsub.f32 %v1175, %v1176
        %v1178 = vand.u32 %v1177, 4294901760
        %1179 = vmatpush.msra.mxu0 %v1178
        %v1180 = vand.u32 %v250, 4294901760
        %v1181 = vsub.f32 %v250, %v1180
        %v1182 = vand.u32 %v1181, 4294901760
        %v1183 = vsub.f32 %v1181, %v1182
        %v1184 = vand.u32 %v1183, 4294901760
        %1185 = vmatpush.msra.mxu0 %v1184
        %v1186 = vand.u32 %v246, 4294901760
        %v1187 = vsub.f32 %v246, %v1186
        %v1188 = vand.u32 %v1187, 4294901760
        %v1189 = vsub.f32 %v1187, %v1188
        %v1190 = vand.u32 %v1189, 4294901760
        %1191 = vmatpush.msra.mxu0 %v1190
        %v1192 = vand.u32 %v242, 4294901760
        %v1193 = vsub.f32 %v242, %v1192
        %v1194 = vand.u32 %v1193, 4294901760
        %v1195 = vsub.f32 %v1193, %v1194
        %v1196 = vand.u32 %v1195, 4294901760
        %1197 = vmatpush.msra.mxu0 %v1196
        %v1198 = vand.u32 %v238, 4294901760
        %v1199 = vsub.f32 %v238, %v1198
        %v1200 = vand.u32 %v1199, 4294901760
        %v1201 = vsub.f32 %v1199, %v1200
        %v1202 = vand.u32 %v1201, 4294901760
        %1203 = vmatpush.msra.mxu0 %v1202
        %v1204 = vand.u32 %v234, 4294901760
        %v1205 = vsub.f32 %v234, %v1204
        %v1206 = vand.u32 %v1205, 4294901760
        %v1207 = vsub.f32 %v1205, %v1206
        %v1208 = vand.u32 %v1207, 4294901760
        %1209 = vmatpush.msra.mxu0 %v1208
        %v1210 = vand.u32 %v230, 4294901760
        %v1211 = vsub.f32 %v230, %v1210
        %v1212 = vand.u32 %v1211, 4294901760
        %v1213 = vsub.f32 %v1211, %v1212
        %v1214 = vand.u32 %v1213, 4294901760
        %1215 = vmatpush.msra.mxu0 %v1214
        %v1216 = vand.u32 %v265, 4294901760
        %1217 = vmatmul.f32.gmra.mxu0 %v1216
        %v1218 = vpop.f32.mrf.mxu0
        %v1219 = vadd.f32 %v1145, %v1218
        %v1220 = vand.u32 %v268, 4294901760
        %1221 = vmatmul.f32.gmra.mxu0 %v1220
        %v1222 = vpop.f32.mrf.mxu0
        %v1223 = vadd.f32 %v1153, %v1222
        %1224 = vdwg.mxu0
        %1225 = vmatpush.msra.mxu0 0.0
        %1226 = vmatpush.msra.mxu0 0.0
        %1227 = vmatpush.msra.mxu0 0.0
        %1228 = vmatpush.msra.mxu0 0.0
        %1229 = vmatpush.msra.mxu0 0.0
        %1230 = vmatpush.msra.mxu0 0.0
        %1231 = vmatpush.msra.mxu0 0.0
        %v1232 = vand.u32 %v262, 4294901760
        %v1233 = vsub.f32 %v262, %v1232
        %1234 = vmatpush.msra.mxu0 %v1233
        %v1235 = vand.u32 %v258, 4294901760
        %v1236 = vsub.f32 %v258, %v1235
        %1237 = vmatpush.msra.mxu0 %v1236
        %v1238 = vand.u32 %v254, 4294901760
        %v1239 = vsub.f32 %v254, %v1238
        %1240 = vmatpush.msra.mxu0 %v1239
        %v1241 = vand.u32 %v250, 4294901760
        %v1242 = vsub.f32 %v250, %v1241
        %1243 = vmatpush.msra.mxu0 %v1242
        %v1244 = vand.u32 %v246, 4294901760
        %v1245 = vsub.f32 %v246, %v1244
        %1246 = vmatpush.msra.mxu0 %v1245
        %v1247 = vand.u32 %v242, 4294901760
        %v1248 = vsub.f32 %v242, %v1247
        %1249 = vmatpush.msra.mxu0 %v1248
        %v1250 = vand.u32 %v238, 4294901760
        %v1251 = vsub.f32 %v238, %v1250
        %1252 = vmatpush.msra.mxu0 %v1251
        %v1253 = vand.u32 %v234, 4294901760
        %v1254 = vsub.f32 %v234, %v1253
        %1255 = vmatpush.msra.mxu0 %v1254
        %v1256 = vand.u32 %v230, 4294901760
        %v1257 = vsub.f32 %v230, %v1256
        %1258 = vmatpush.msra.mxu0 %v1257
        %v1259 = vand.u32 %v265, 4294901760
        %v1260 = vsub.f32 %v265, %v1259
        %1261 = vmatmul.f32.gmra.mxu0 %v1260
        %v1262 = vpop.f32.mrf.mxu0
        %v1263 = vadd.f32 %v1219, %v1262
        %v1264 = vand.u32 %v268, 4294901760
        %v1265 = vsub.f32 %v268, %v1264
        %1266 = vmatmul.f32.gmra.mxu0 %v1265
        %v1267 = vpop.f32.mrf.mxu0
        %v1268 = vadd.f32 %v1223, %v1267
        %1269 = vdwg.mxu0
        %1270 = vmatpush.msra.mxu0 0.0
        %1271 = vmatpush.msra.mxu0 0.0
        %1272 = vmatpush.msra.mxu0 0.0
        %1273 = vmatpush.msra.mxu0 0.0
        %1274 = vmatpush.msra.mxu0 0.0
        %1275 = vmatpush.msra.mxu0 0.0
        %1276 = vmatpush.msra.mxu0 0.0
        %v1277 = vand.u32 %v262, 4294901760
        %1278 = vmatpush.msra.mxu0 %v1277
        %v1279 = vand.u32 %v258, 4294901760
        %1280 = vmatpush.msra.mxu0 %v1279
        %v1281 = vand.u32 %v254, 4294901760
        %1282 = vmatpush.msra.mxu0 %v1281
        %v1283 = vand.u32 %v250, 4294901760
        %1284 = vmatpush.msra.mxu0 %v1283
        %v1285 = vand.u32 %v246, 4294901760
        %1286 = vmatpush.msra.mxu0 %v1285
        %v1287 = vand.u32 %v242, 4294901760
        %1288 = vmatpush.msra.mxu0 %v1287
        %v1289 = vand.u32 %v238, 4294901760
        %1290 = vmatpush.msra.mxu0 %v1289
        %v1291 = vand.u32 %v234, 4294901760
        %1292 = vmatpush.msra.mxu0 %v1291
        %v1293 = vand.u32 %v230, 4294901760
        %1294 = vmatpush.msra.mxu0 %v1293
        %v1295 = vand.u32 %v265, 4294901760
        %v1296 = vsub.f32 %v265, %v1295
        %v1297 = vand.u32 %v1296, 4294901760
        %1298 = vmatmul.f32.gmra.mxu0 %v1297
        %v1299 = vpop.f32.mrf.mxu0
        %v1300 = vadd.f32 %v1263, %v1299
        %v1301 = vand.u32 %v268, 4294901760
        %v1302 = vsub.f32 %v268, %v1301
        %v1303 = vand.u32 %v1302, 4294901760
        %1304 = vmatmul.f32.gmra.mxu0 %v1303
        %v1305 = vpop.f32.mrf.mxu0
        %v1306 = vadd.f32 %v1268, %v1305
        %1307 = vdwg.mxu0
        %1308 = vmatpush.msra.mxu0 0.0
        %1309 = vmatpush.msra.mxu0 0.0
        %1310 = vmatpush.msra.mxu0 0.0
        %1311 = vmatpush.msra.mxu0 0.0
        %1312 = vmatpush.msra.mxu0 0.0
        %1313 = vmatpush.msra.mxu0 0.0
        %1314 = vmatpush.msra.mxu0 0.0
        %v1315 = vand.u32 %v262, 4294901760
        %v1316 = vsub.f32 %v262, %v1315
        %v1317 = vand.u32 %v1316, 4294901760
        %1318 = vmatpush.msra.mxu0 %v1317
        %v1319 = vand.u32 %v258, 4294901760
        %v1320 = vsub.f32 %v258, %v1319
        %v1321 = vand.u32 %v1320, 4294901760
        %1322 = vmatpush.msra.mxu0 %v1321
        %v1323 = vand.u32 %v254, 4294901760
        %v1324 = vsub.f32 %v254, %v1323
        %v1325 = vand.u32 %v1324, 4294901760
        %1326 = vmatpush.msra.mxu0 %v1325
        %v1327 = vand.u32 %v250, 4294901760
        %v1328 = vsub.f32 %v250, %v1327
        %v1329 = vand.u32 %v1328, 4294901760
        %1330 = vmatpush.msra.mxu0 %v1329
        %v1331 = vand.u32 %v246, 4294901760
        %v1332 = vsub.f32 %v246, %v1331
        %v1333 = vand.u32 %v1332, 4294901760
        %1334 = vmatpush.msra.mxu0 %v1333
        %v1335 = vand.u32 %v242, 4294901760
        %v1336 = vsub.f32 %v242, %v1335
        %v1337 = vand.u32 %v1336, 4294901760
        %1338 = vmatpush.msra.mxu0 %v1337
        %v1339 = vand.u32 %v238, 4294901760
        %v1340 = vsub.f32 %v238, %v1339
        %v1341 = vand.u32 %v1340, 4294901760
        %1342 = vmatpush.msra.mxu0 %v1341
        %v1343 = vand.u32 %v234, 4294901760
        %v1344 = vsub.f32 %v234, %v1343
        %v1345 = vand.u32 %v1344, 4294901760
        %1346 = vmatpush.msra.mxu0 %v1345
        %v1347 = vand.u32 %v230, 4294901760
        %v1348 = vsub.f32 %v230, %v1347
        %v1349 = vand.u32 %v1348, 4294901760
        %1350 = vmatpush.msra.mxu0 %v1349
        %v1351 = vand.u32 %v265, 4294901760
        %1352 = vmatmul.f32.gmra.mxu0 %v1351
        %v1353 = vpop.f32.mrf.mxu0
        %v1354 = vadd.f32 %v1300, %v1353
        %v1355 = vand.u32 %v268, 4294901760
        %1356 = vmatmul.f32.gmra.mxu0 %v1355
        %v1357 = vpop.f32.mrf.mxu0
        %v1358 = vadd.f32 %v1306, %v1357
        %1359 = vdwg.mxu0
        %1360 = vmatpush.msra.mxu0 0.0
        %1361 = vmatpush.msra.mxu0 0.0
        %1362 = vmatpush.msra.mxu0 0.0
        %1363 = vmatpush.msra.mxu0 0.0
        %1364 = vmatpush.msra.mxu0 0.0
        %1365 = vmatpush.msra.mxu0 0.0
        %1366 = vmatpush.msra.mxu0 0.0
        %v1367 = vand.u32 %v262, 4294901760
        %1368 = vmatpush.msra.mxu0 %v1367
        %v1369 = vand.u32 %v258, 4294901760
        %1370 = vmatpush.msra.mxu0 %v1369
        %v1371 = vand.u32 %v254, 4294901760
        %1372 = vmatpush.msra.mxu0 %v1371
        %v1373 = vand.u32 %v250, 4294901760
        %1374 = vmatpush.msra.mxu0 %v1373
        %v1375 = vand.u32 %v246, 4294901760
        %1376 = vmatpush.msra.mxu0 %v1375
        %v1377 = vand.u32 %v242, 4294901760
        %1378 = vmatpush.msra.mxu0 %v1377
        %v1379 = vand.u32 %v238, 4294901760
        %1380 = vmatpush.msra.mxu0 %v1379
        %v1381 = vand.u32 %v234, 4294901760
        %1382 = vmatpush.msra.mxu0 %v1381
        %v1383 = vand.u32 %v230, 4294901760
        %1384 = vmatpush.msra.mxu0 %v1383
        %v1385 = vand.u32 %v265, 4294901760
        %1386 = vmatmul.f32.gmra.mxu0 %v1385
        %v1387 = vpop.f32.mrf.mxu0
        %v1388 = vadd.f32 %v1354, %v1387
        %v1389 = vand.u32 %v268, 4294901760
        %1390 = vmatmul.f32.gmra.mxu0 %v1389
        %v1391 = vpop.f32.mrf.mxu0
        %v1392 = vadd.f32 %v1358, %v1391
        %1393 = vdwg.mxu0
        %v1395 = vsel %vm263, %v186, 0
        %v1398 = vsel %vm263, %v187, 0
        %1400 = vmatpush.msra.mxu0 0.0
        %1401 = vmatpush.msra.mxu0 0.0
        %1402 = vmatpush.msra.mxu0 0.0
        %1403 = vmatpush.msra.mxu0 0.0
        %1404 = vmatpush.msra.mxu0 0.0
        %1405 = vmatpush.msra.mxu0 0.0
        %1406 = vmatpush.msra.mxu0 0.0
        %v1407 = vand.u32 %v220, 4294901760
        %1408 = vmatpush.msra.mxu0 %v1407
        %v1409 = vand.u32 %v216, 4294901760
        %1410 = vmatpush.msra.mxu0 %v1409
        %v1411 = vand.u32 %v212, 4294901760
        %1412 = vmatpush.msra.mxu0 %v1411
        %v1413 = vand.u32 %v208, 4294901760
        %1414 = vmatpush.msra.mxu0 %v1413
        %v1415 = vand.u32 %v204, 4294901760
        %1416 = vmatpush.msra.mxu0 %v1415
        %v1417 = vand.u32 %v200, 4294901760
        %1418 = vmatpush.msra.mxu0 %v1417
        %v1419 = vand.u32 %v196, 4294901760
        %1420 = vmatpush.msra.mxu0 %v1419
        %v1421 = vand.u32 %v192, 4294901760
        %1422 = vmatpush.msra.mxu0 %v1421
        %v1423 = vand.u32 %v188, 4294901760
        %1424 = vmatpush.msra.mxu0 %v1423
        %v1425 = vand.u32 %v1395, 4294901760
        %v1426 = vsub.f32 %v1395, %v1425
        %v1427 = vand.u32 %v1426, 4294901760
        %v1428 = vsub.f32 %v1426, %v1427
        %v1429 = vand.u32 %v1428, 4294901760
        %1430 = vmatmul.f32.gmra.mxu0 %v1429
        %v1431 = vpop.f32.mrf.mxu0
        %v1432 = vadd.f32 %v545, %v1431
        %v1433 = vand.u32 %v1398, 4294901760
        %v1434 = vsub.f32 %v1398, %v1433
        %v1435 = vand.u32 %v1434, 4294901760
        %v1436 = vsub.f32 %v1434, %v1435
        %v1437 = vand.u32 %v1436, 4294901760
        %1438 = vmatmul.f32.gmra.mxu0 %v1437
        %v1439 = vpop.f32.mrf.mxu0
        %v1440 = vadd.f32 %v549, %v1439
        %1441 = vdwg.mxu0
        %1442 = vmatpush.msra.mxu0 0.0
        %1443 = vmatpush.msra.mxu0 0.0
        %1444 = vmatpush.msra.mxu0 0.0
        %1445 = vmatpush.msra.mxu0 0.0
        %1446 = vmatpush.msra.mxu0 0.0
        %1447 = vmatpush.msra.mxu0 0.0
        %1448 = vmatpush.msra.mxu0 0.0
        %v1449 = vand.u32 %v220, 4294901760
        %v1450 = vsub.f32 %v220, %v1449
        %v1451 = vand.u32 %v1450, 4294901760
        %v1452 = vsub.f32 %v1450, %v1451
        %v1453 = vand.u32 %v1452, 4294901760
        %1454 = vmatpush.msra.mxu0 %v1453
        %v1455 = vand.u32 %v216, 4294901760
        %v1456 = vsub.f32 %v216, %v1455
        %v1457 = vand.u32 %v1456, 4294901760
        %v1458 = vsub.f32 %v1456, %v1457
        %v1459 = vand.u32 %v1458, 4294901760
        %1460 = vmatpush.msra.mxu0 %v1459
        %v1461 = vand.u32 %v212, 4294901760
        %v1462 = vsub.f32 %v212, %v1461
        %v1463 = vand.u32 %v1462, 4294901760
        %v1464 = vsub.f32 %v1462, %v1463
        %v1465 = vand.u32 %v1464, 4294901760
        %1466 = vmatpush.msra.mxu0 %v1465
        %v1467 = vand.u32 %v208, 4294901760
        %v1468 = vsub.f32 %v208, %v1467
        %v1469 = vand.u32 %v1468, 4294901760
        %v1470 = vsub.f32 %v1468, %v1469
        %v1471 = vand.u32 %v1470, 4294901760
        %1472 = vmatpush.msra.mxu0 %v1471
        %v1473 = vand.u32 %v204, 4294901760
        %v1474 = vsub.f32 %v204, %v1473
        %v1475 = vand.u32 %v1474, 4294901760
        %v1476 = vsub.f32 %v1474, %v1475
        %v1477 = vand.u32 %v1476, 4294901760
        %1478 = vmatpush.msra.mxu0 %v1477
        %v1479 = vand.u32 %v200, 4294901760
        %v1480 = vsub.f32 %v200, %v1479
        %v1481 = vand.u32 %v1480, 4294901760
        %v1482 = vsub.f32 %v1480, %v1481
        %v1483 = vand.u32 %v1482, 4294901760
        %1484 = vmatpush.msra.mxu0 %v1483
        %v1485 = vand.u32 %v196, 4294901760
        %v1486 = vsub.f32 %v196, %v1485
        %v1487 = vand.u32 %v1486, 4294901760
        %v1488 = vsub.f32 %v1486, %v1487
        %v1489 = vand.u32 %v1488, 4294901760
        %1490 = vmatpush.msra.mxu0 %v1489
        %v1491 = vand.u32 %v192, 4294901760
        %v1492 = vsub.f32 %v192, %v1491
        %v1493 = vand.u32 %v1492, 4294901760
        %v1494 = vsub.f32 %v1492, %v1493
        %v1495 = vand.u32 %v1494, 4294901760
        %1496 = vmatpush.msra.mxu0 %v1495
        %v1497 = vand.u32 %v188, 4294901760
        %v1498 = vsub.f32 %v188, %v1497
        %v1499 = vand.u32 %v1498, 4294901760
        %v1500 = vsub.f32 %v1498, %v1499
        %v1501 = vand.u32 %v1500, 4294901760
        %1502 = vmatpush.msra.mxu0 %v1501
        %v1503 = vand.u32 %v1395, 4294901760
        %1504 = vmatmul.f32.gmra.mxu0 %v1503
        %v1505 = vpop.f32.mrf.mxu0
        %v1506 = vadd.f32 %v1432, %v1505
        %v1507 = vand.u32 %v1398, 4294901760
        %1508 = vmatmul.f32.gmra.mxu0 %v1507
        %v1509 = vpop.f32.mrf.mxu0
        %v1510 = vadd.f32 %v1440, %v1509
        %1511 = vdwg.mxu0
        %1512 = vmatpush.msra.mxu0 0.0
        %1513 = vmatpush.msra.mxu0 0.0
        %1514 = vmatpush.msra.mxu0 0.0
        %1515 = vmatpush.msra.mxu0 0.0
        %1516 = vmatpush.msra.mxu0 0.0
        %1517 = vmatpush.msra.mxu0 0.0
        %1518 = vmatpush.msra.mxu0 0.0
        %v1519 = vand.u32 %v220, 4294901760
        %v1520 = vsub.f32 %v220, %v1519
        %1521 = vmatpush.msra.mxu0 %v1520
        %v1522 = vand.u32 %v216, 4294901760
        %v1523 = vsub.f32 %v216, %v1522
        %1524 = vmatpush.msra.mxu0 %v1523
        %v1525 = vand.u32 %v212, 4294901760
        %v1526 = vsub.f32 %v212, %v1525
        %1527 = vmatpush.msra.mxu0 %v1526
        %v1528 = vand.u32 %v208, 4294901760
        %v1529 = vsub.f32 %v208, %v1528
        %1530 = vmatpush.msra.mxu0 %v1529
        %v1531 = vand.u32 %v204, 4294901760
        %v1532 = vsub.f32 %v204, %v1531
        %1533 = vmatpush.msra.mxu0 %v1532
        %v1534 = vand.u32 %v200, 4294901760
        %v1535 = vsub.f32 %v200, %v1534
        %1536 = vmatpush.msra.mxu0 %v1535
        %v1537 = vand.u32 %v196, 4294901760
        %v1538 = vsub.f32 %v196, %v1537
        %1539 = vmatpush.msra.mxu0 %v1538
        %v1540 = vand.u32 %v192, 4294901760
        %v1541 = vsub.f32 %v192, %v1540
        %1542 = vmatpush.msra.mxu0 %v1541
        %v1543 = vand.u32 %v188, 4294901760
        %v1544 = vsub.f32 %v188, %v1543
        %1545 = vmatpush.msra.mxu0 %v1544
        %v1546 = vand.u32 %v1395, 4294901760
        %v1547 = vsub.f32 %v1395, %v1546
        %1548 = vmatmul.f32.gmra.mxu0 %v1547
        %v1549 = vpop.f32.mrf.mxu0
        %v1550 = vadd.f32 %v1506, %v1549
        %v1551 = vand.u32 %v1398, 4294901760
        %v1552 = vsub.f32 %v1398, %v1551
        %1553 = vmatmul.f32.gmra.mxu0 %v1552
        %v1554 = vpop.f32.mrf.mxu0
        %v1555 = vadd.f32 %v1510, %v1554
        %1556 = vdwg.mxu0
        %1557 = vmatpush.msra.mxu0 0.0
        %1558 = vmatpush.msra.mxu0 0.0
        %1559 = vmatpush.msra.mxu0 0.0
        %1560 = vmatpush.msra.mxu0 0.0
        %1561 = vmatpush.msra.mxu0 0.0
        %1562 = vmatpush.msra.mxu0 0.0
        %1563 = vmatpush.msra.mxu0 0.0
        %v1564 = vand.u32 %v220, 4294901760
        %1565 = vmatpush.msra.mxu0 %v1564
        %v1566 = vand.u32 %v216, 4294901760
        %1567 = vmatpush.msra.mxu0 %v1566
        %v1568 = vand.u32 %v212, 4294901760
        %1569 = vmatpush.msra.mxu0 %v1568
        %v1570 = vand.u32 %v208, 4294901760
        %1571 = vmatpush.msra.mxu0 %v1570
        %v1572 = vand.u32 %v204, 4294901760
        %1573 = vmatpush.msra.mxu0 %v1572
        %v1574 = vand.u32 %v200, 4294901760
        %1575 = vmatpush.msra.mxu0 %v1574
        %v1576 = vand.u32 %v196, 4294901760
        %1577 = vmatpush.msra.mxu0 %v1576
        %v1578 = vand.u32 %v192, 4294901760
        %1579 = vmatpush.msra.mxu0 %v1578
        %v1580 = vand.u32 %v188, 4294901760
        %1581 = vmatpush.msra.mxu0 %v1580
        %v1582 = vand.u32 %v1395, 4294901760
        %v1583 = vsub.f32 %v1395, %v1582
        %v1584 = vand.u32 %v1583, 4294901760
        %1585 = vmatmul.f32.gmra.mxu0 %v1584
        %v1586 = vpop.f32.mrf.mxu0
        %v1587 = vadd.f32 %v1550, %v1586
        %v1588 = vand.u32 %v1398, 4294901760
        %v1589 = vsub.f32 %v1398, %v1588
        %v1590 = vand.u32 %v1589, 4294901760
        %1591 = vmatmul.f32.gmra.mxu0 %v1590
        %v1592 = vpop.f32.mrf.mxu0
        %v1593 = vadd.f32 %v1555, %v1592
        %1594 = vdwg.mxu0
        %1595 = vmatpush.msra.mxu0 0.0
        %1596 = vmatpush.msra.mxu0 0.0
        %1597 = vmatpush.msra.mxu0 0.0
        %1598 = vmatpush.msra.mxu0 0.0
        %1599 = vmatpush.msra.mxu0 0.0
        %1600 = vmatpush.msra.mxu0 0.0
        %1601 = vmatpush.msra.mxu0 0.0
        %v1602 = vand.u32 %v220, 4294901760
        %v1603 = vsub.f32 %v220, %v1602
        %v1604 = vand.u32 %v1603, 4294901760
        %1605 = vmatpush.msra.mxu0 %v1604
        %v1606 = vand.u32 %v216, 4294901760
        %v1607 = vsub.f32 %v216, %v1606
        %v1608 = vand.u32 %v1607, 4294901760
        %1609 = vmatpush.msra.mxu0 %v1608
        %v1610 = vand.u32 %v212, 4294901760
        %v1611 = vsub.f32 %v212, %v1610
        %v1612 = vand.u32 %v1611, 4294901760
        %1613 = vmatpush.msra.mxu0 %v1612
        %v1614 = vand.u32 %v208, 4294901760
        %v1615 = vsub.f32 %v208, %v1614
        %v1616 = vand.u32 %v1615, 4294901760
        %1617 = vmatpush.msra.mxu0 %v1616
        %v1618 = vand.u32 %v204, 4294901760
        %v1619 = vsub.f32 %v204, %v1618
        %v1620 = vand.u32 %v1619, 4294901760
        %1621 = vmatpush.msra.mxu0 %v1620
        %v1622 = vand.u32 %v200, 4294901760
        %v1623 = vsub.f32 %v200, %v1622
        %v1624 = vand.u32 %v1623, 4294901760
        %1625 = vmatpush.msra.mxu0 %v1624
        %v1626 = vand.u32 %v196, 4294901760
        %v1627 = vsub.f32 %v196, %v1626
        %v1628 = vand.u32 %v1627, 4294901760
        %1629 = vmatpush.msra.mxu0 %v1628
        %v1630 = vand.u32 %v192, 4294901760
        %v1631 = vsub.f32 %v192, %v1630
        %v1632 = vand.u32 %v1631, 4294901760
        %1633 = vmatpush.msra.mxu0 %v1632
        %v1634 = vand.u32 %v188, 4294901760
        %v1635 = vsub.f32 %v188, %v1634
        %v1636 = vand.u32 %v1635, 4294901760
        %1637 = vmatpush.msra.mxu0 %v1636
        %v1638 = vand.u32 %v1395, 4294901760
        %1639 = vmatmul.f32.gmra.mxu0 %v1638
        %v1640 = vpop.f32.mrf.mxu0
        %v1641 = vadd.f32 %v1587, %v1640
        %v1642 = vand.u32 %v1398, 4294901760
        %1643 = vmatmul.f32.gmra.mxu0 %v1642
        %v1644 = vpop.f32.mrf.mxu0
        %v1645 = vadd.f32 %v1593, %v1644
        %1646 = vdwg.mxu0
        %1647 = vmatpush.msra.mxu0 0.0
        %1648 = vmatpush.msra.mxu0 0.0
        %1649 = vmatpush.msra.mxu0 0.0
        %1650 = vmatpush.msra.mxu0 0.0
        %1651 = vmatpush.msra.mxu0 0.0
        %1652 = vmatpush.msra.mxu0 0.0
        %1653 = vmatpush.msra.mxu0 0.0
        %v1654 = vand.u32 %v220, 4294901760
        %1655 = vmatpush.msra.mxu0 %v1654
        %v1656 = vand.u32 %v216, 4294901760
        %1657 = vmatpush.msra.mxu0 %v1656
        %v1658 = vand.u32 %v212, 4294901760
        %1659 = vmatpush.msra.mxu0 %v1658
        %v1660 = vand.u32 %v208, 4294901760
        %1661 = vmatpush.msra.mxu0 %v1660
        %v1662 = vand.u32 %v204, 4294901760
        %1663 = vmatpush.msra.mxu0 %v1662
        %v1664 = vand.u32 %v200, 4294901760
        %1665 = vmatpush.msra.mxu0 %v1664
        %v1666 = vand.u32 %v196, 4294901760
        %1667 = vmatpush.msra.mxu0 %v1666
        %v1668 = vand.u32 %v192, 4294901760
        %1669 = vmatpush.msra.mxu0 %v1668
        %v1670 = vand.u32 %v188, 4294901760
        %1671 = vmatpush.msra.mxu0 %v1670
        %v1672 = vand.u32 %v1395, 4294901760
        %1673 = vmatmul.f32.gmra.mxu0 %v1672
        %v1674 = vpop.f32.mrf.mxu0
        %v1675 = vadd.f32 %v1641, %v1674
        %v1676 = vand.u32 %v1398, 4294901760
        %1677 = vmatmul.f32.gmra.mxu0 %v1676
        %v1678 = vpop.f32.mrf.mxu0
        %v1679 = vadd.f32 %v1645, %v1678
        %1680 = vdwg.mxu0
        %1681 = vmatpush.msra.mxu0 0.0
        %1682 = vmatpush.msra.mxu0 0.0
        %1683 = vmatpush.msra.mxu0 0.0
        %1684 = vmatpush.msra.mxu0 0.0
        %1685 = vmatpush.msra.mxu0 0.0
        %1686 = vmatpush.msra.mxu0 0.0
        %1687 = vmatpush.msra.mxu0 0.0
        %v1688 = vand.u32 %v221, 4294901760
        %1689 = vmatpush.msra.mxu0 %v1688
        %v1690 = vand.u32 %v217, 4294901760
        %1691 = vmatpush.msra.mxu0 %v1690
        %v1692 = vand.u32 %v213, 4294901760
        %1693 = vmatpush.msra.mxu0 %v1692
        %v1694 = vand.u32 %v209, 4294901760
        %1695 = vmatpush.msra.mxu0 %v1694
        %v1696 = vand.u32 %v205, 4294901760
        %1697 = vmatpush.msra.mxu0 %v1696
        %v1698 = vand.u32 %v201, 4294901760
        %1699 = vmatpush.msra.mxu0 %v1698
        %v1700 = vand.u32 %v197, 4294901760
        %1701 = vmatpush.msra.mxu0 %v1700
        %v1702 = vand.u32 %v193, 4294901760
        %1703 = vmatpush.msra.mxu0 %v1702
        %v1704 = vand.u32 %v189, 4294901760
        %1705 = vmatpush.msra.mxu0 %v1704
        %v1706 = vand.u32 %v1395, 4294901760
        %v1707 = vsub.f32 %v1395, %v1706
        %v1708 = vand.u32 %v1707, 4294901760
        %v1709 = vsub.f32 %v1707, %v1708
        %v1710 = vand.u32 %v1709, 4294901760
        %1711 = vmatmul.f32.gmra.mxu0 %v1710
        %v1712 = vpop.f32.mrf.mxu0
        %v1713 = vadd.f32 %v826, %v1712
        %v1714 = vand.u32 %v1398, 4294901760
        %v1715 = vsub.f32 %v1398, %v1714
        %v1716 = vand.u32 %v1715, 4294901760
        %v1717 = vsub.f32 %v1715, %v1716
        %v1718 = vand.u32 %v1717, 4294901760
        %1719 = vmatmul.f32.gmra.mxu0 %v1718
        %v1720 = vpop.f32.mrf.mxu0
        %v1721 = vadd.f32 %v830, %v1720
        %1722 = vdwg.mxu0
        %1723 = vmatpush.msra.mxu0 0.0
        %1724 = vmatpush.msra.mxu0 0.0
        %1725 = vmatpush.msra.mxu0 0.0
        %1726 = vmatpush.msra.mxu0 0.0
        %1727 = vmatpush.msra.mxu0 0.0
        %1728 = vmatpush.msra.mxu0 0.0
        %1729 = vmatpush.msra.mxu0 0.0
        %v1730 = vand.u32 %v221, 4294901760
        %v1731 = vsub.f32 %v221, %v1730
        %v1732 = vand.u32 %v1731, 4294901760
        %v1733 = vsub.f32 %v1731, %v1732
        %v1734 = vand.u32 %v1733, 4294901760
        %1735 = vmatpush.msra.mxu0 %v1734
        %v1736 = vand.u32 %v217, 4294901760
        %v1737 = vsub.f32 %v217, %v1736
        %v1738 = vand.u32 %v1737, 4294901760
        %v1739 = vsub.f32 %v1737, %v1738
        %v1740 = vand.u32 %v1739, 4294901760
        %1741 = vmatpush.msra.mxu0 %v1740
        %v1742 = vand.u32 %v213, 4294901760
        %v1743 = vsub.f32 %v213, %v1742
        %v1744 = vand.u32 %v1743, 4294901760
        %v1745 = vsub.f32 %v1743, %v1744
        %v1746 = vand.u32 %v1745, 4294901760
        %1747 = vmatpush.msra.mxu0 %v1746
        %v1748 = vand.u32 %v209, 4294901760
        %v1749 = vsub.f32 %v209, %v1748
        %v1750 = vand.u32 %v1749, 4294901760
        %v1751 = vsub.f32 %v1749, %v1750
        %v1752 = vand.u32 %v1751, 4294901760
        %1753 = vmatpush.msra.mxu0 %v1752
        %v1754 = vand.u32 %v205, 4294901760
        %v1755 = vsub.f32 %v205, %v1754
        %v1756 = vand.u32 %v1755, 4294901760
        %v1757 = vsub.f32 %v1755, %v1756
        %v1758 = vand.u32 %v1757, 4294901760
        %1759 = vmatpush.msra.mxu0 %v1758
        %v1760 = vand.u32 %v201, 4294901760
        %v1761 = vsub.f32 %v201, %v1760
        %v1762 = vand.u32 %v1761, 4294901760
        %v1763 = vsub.f32 %v1761, %v1762
        %v1764 = vand.u32 %v1763, 4294901760
        %1765 = vmatpush.msra.mxu0 %v1764
        %v1766 = vand.u32 %v197, 4294901760
        %v1767 = vsub.f32 %v197, %v1766
        %v1768 = vand.u32 %v1767, 4294901760
        %v1769 = vsub.f32 %v1767, %v1768
        %v1770 = vand.u32 %v1769, 4294901760
        %1771 = vmatpush.msra.mxu0 %v1770
        %v1772 = vand.u32 %v193, 4294901760
        %v1773 = vsub.f32 %v193, %v1772
        %v1774 = vand.u32 %v1773, 4294901760
        %v1775 = vsub.f32 %v1773, %v1774
        %v1776 = vand.u32 %v1775, 4294901760
        %1777 = vmatpush.msra.mxu0 %v1776
        %v1778 = vand.u32 %v189, 4294901760
        %v1779 = vsub.f32 %v189, %v1778
        %v1780 = vand.u32 %v1779, 4294901760
        %v1781 = vsub.f32 %v1779, %v1780
        %v1782 = vand.u32 %v1781, 4294901760
        %1783 = vmatpush.msra.mxu0 %v1782
        %v1784 = vand.u32 %v1395, 4294901760
        %1785 = vmatmul.f32.gmra.mxu0 %v1784
        %v1786 = vpop.f32.mrf.mxu0
        %v1787 = vadd.f32 %v1713, %v1786
        %v1788 = vand.u32 %v1398, 4294901760
        %1789 = vmatmul.f32.gmra.mxu0 %v1788
        %v1790 = vpop.f32.mrf.mxu0
        %v1791 = vadd.f32 %v1721, %v1790
        %1792 = vdwg.mxu0
        %1793 = vmatpush.msra.mxu0 0.0
        %1794 = vmatpush.msra.mxu0 0.0
        %1795 = vmatpush.msra.mxu0 0.0
        %1796 = vmatpush.msra.mxu0 0.0
        %1797 = vmatpush.msra.mxu0 0.0
        %1798 = vmatpush.msra.mxu0 0.0
        %1799 = vmatpush.msra.mxu0 0.0
        %v1800 = vand.u32 %v221, 4294901760
        %v1801 = vsub.f32 %v221, %v1800
        %1802 = vmatpush.msra.mxu0 %v1801
        %v1803 = vand.u32 %v217, 4294901760
        %v1804 = vsub.f32 %v217, %v1803
        %1805 = vmatpush.msra.mxu0 %v1804
        %v1806 = vand.u32 %v213, 4294901760
        %v1807 = vsub.f32 %v213, %v1806
        %1808 = vmatpush.msra.mxu0 %v1807
        %v1809 = vand.u32 %v209, 4294901760
        %v1810 = vsub.f32 %v209, %v1809
        %1811 = vmatpush.msra.mxu0 %v1810
        %v1812 = vand.u32 %v205, 4294901760
        %v1813 = vsub.f32 %v205, %v1812
        %1814 = vmatpush.msra.mxu0 %v1813
        %v1815 = vand.u32 %v201, 4294901760
        %v1816 = vsub.f32 %v201, %v1815
        %1817 = vmatpush.msra.mxu0 %v1816
        %v1818 = vand.u32 %v197, 4294901760
        %v1819 = vsub.f32 %v197, %v1818
        %1820 = vmatpush.msra.mxu0 %v1819
        %v1821 = vand.u32 %v193, 4294901760
        %v1822 = vsub.f32 %v193, %v1821
        %1823 = vmatpush.msra.mxu0 %v1822
        %v1824 = vand.u32 %v189, 4294901760
        %v1825 = vsub.f32 %v189, %v1824
        %1826 = vmatpush.msra.mxu0 %v1825
        %v1827 = vand.u32 %v1395, 4294901760
        %v1828 = vsub.f32 %v1395, %v1827
        %1829 = vmatmul.f32.gmra.mxu0 %v1828
        %v1830 = vpop.f32.mrf.mxu0
        %v1831 = vadd.f32 %v1787, %v1830
        %v1832 = vand.u32 %v1398, 4294901760
        %v1833 = vsub.f32 %v1398, %v1832
        %1834 = vmatmul.f32.gmra.mxu0 %v1833
        %v1835 = vpop.f32.mrf.mxu0
        %v1836 = vadd.f32 %v1791, %v1835
        %1837 = vdwg.mxu0
        %1838 = vmatpush.msra.mxu0 0.0
        %1839 = vmatpush.msra.mxu0 0.0
        %1840 = vmatpush.msra.mxu0 0.0
        %1841 = vmatpush.msra.mxu0 0.0
        %1842 = vmatpush.msra.mxu0 0.0
        %1843 = vmatpush.msra.mxu0 0.0
        %1844 = vmatpush.msra.mxu0 0.0
        %v1845 = vand.u32 %v221, 4294901760
        %1846 = vmatpush.msra.mxu0 %v1845
        %v1847 = vand.u32 %v217, 4294901760
        %1848 = vmatpush.msra.mxu0 %v1847
        %v1849 = vand.u32 %v213, 4294901760
        %1850 = vmatpush.msra.mxu0 %v1849
        %v1851 = vand.u32 %v209, 4294901760
        %1852 = vmatpush.msra.mxu0 %v1851
        %v1853 = vand.u32 %v205, 4294901760
        %1854 = vmatpush.msra.mxu0 %v1853
        %v1855 = vand.u32 %v201, 4294901760
        %1856 = vmatpush.msra.mxu0 %v1855
        %v1857 = vand.u32 %v197, 4294901760
        %1858 = vmatpush.msra.mxu0 %v1857
        %v1859 = vand.u32 %v193, 4294901760
        %1860 = vmatpush.msra.mxu0 %v1859
        %v1861 = vand.u32 %v189, 4294901760
        %1862 = vmatpush.msra.mxu0 %v1861
        %v1863 = vand.u32 %v1395, 4294901760
        %v1864 = vsub.f32 %v1395, %v1863
        %v1865 = vand.u32 %v1864, 4294901760
        %1866 = vmatmul.f32.gmra.mxu0 %v1865
        %v1867 = vpop.f32.mrf.mxu0
        %v1868 = vadd.f32 %v1831, %v1867
        %v1869 = vand.u32 %v1398, 4294901760
        %v1870 = vsub.f32 %v1398, %v1869
        %v1871 = vand.u32 %v1870, 4294901760
        %1872 = vmatmul.f32.gmra.mxu0 %v1871
        %v1873 = vpop.f32.mrf.mxu0
        %v1874 = vadd.f32 %v1836, %v1873
        %1875 = vdwg.mxu0
        %1876 = vmatpush.msra.mxu0 0.0
        %1877 = vmatpush.msra.mxu0 0.0
        %1878 = vmatpush.msra.mxu0 0.0
        %1879 = vmatpush.msra.mxu0 0.0
        %1880 = vmatpush.msra.mxu0 0.0
        %1881 = vmatpush.msra.mxu0 0.0
        %1882 = vmatpush.msra.mxu0 0.0
        %v1883 = vand.u32 %v221, 4294901760
        %v1884 = vsub.f32 %v221, %v1883
        %v1885 = vand.u32 %v1884, 4294901760
        %1886 = vmatpush.msra.mxu0 %v1885
        %v1887 = vand.u32 %v217, 4294901760
        %v1888 = vsub.f32 %v217, %v1887
        %v1889 = vand.u32 %v1888, 4294901760
        %1890 = vmatpush.msra.mxu0 %v1889
        %v1891 = vand.u32 %v213, 4294901760
        %v1892 = vsub.f32 %v213, %v1891
        %v1893 = vand.u32 %v1892, 4294901760
        %1894 = vmatpush.msra.mxu0 %v1893
        %v1895 = vand.u32 %v209, 4294901760
        %v1896 = vsub.f32 %v209, %v1895
        %v1897 = vand.u32 %v1896, 4294901760
        %1898 = vmatpush.msra.mxu0 %v1897
        %v1899 = vand.u32 %v205, 4294901760
        %v1900 = vsub.f32 %v205, %v1899
        %v1901 = vand.u32 %v1900, 4294901760
        %1902 = vmatpush.msra.mxu0 %v1901
        %v1903 = vand.u32 %v201, 4294901760
        %v1904 = vsub.f32 %v201, %v1903
        %v1905 = vand.u32 %v1904, 4294901760
        %1906 = vmatpush.msra.mxu0 %v1905
        %v1907 = vand.u32 %v197, 4294901760
        %v1908 = vsub.f32 %v197, %v1907
        %v1909 = vand.u32 %v1908, 4294901760
        %1910 = vmatpush.msra.mxu0 %v1909
        %v1911 = vand.u32 %v193, 4294901760
        %v1912 = vsub.f32 %v193, %v1911
        %v1913 = vand.u32 %v1912, 4294901760
        %1914 = vmatpush.msra.mxu0 %v1913
        %v1915 = vand.u32 %v189, 4294901760
        %v1916 = vsub.f32 %v189, %v1915
        %v1917 = vand.u32 %v1916, 4294901760
        %1918 = vmatpush.msra.mxu0 %v1917
        %v1919 = vand.u32 %v1395, 4294901760
        %1920 = vmatmul.f32.gmra.mxu0 %v1919
        %v1921 = vpop.f32.mrf.mxu0
        %v1922 = vadd.f32 %v1868, %v1921
        %v1923 = vand.u32 %v1398, 4294901760
        %1924 = vmatmul.f32.gmra.mxu0 %v1923
        %v1925 = vpop.f32.mrf.mxu0
        %v1926 = vadd.f32 %v1874, %v1925
        %1927 = vdwg.mxu0
        %1928 = vmatpush.msra.mxu0 0.0
        %1929 = vmatpush.msra.mxu0 0.0
        %1930 = vmatpush.msra.mxu0 0.0
        %1931 = vmatpush.msra.mxu0 0.0
        %1932 = vmatpush.msra.mxu0 0.0
        %1933 = vmatpush.msra.mxu0 0.0
        %1934 = vmatpush.msra.mxu0 0.0
        %v1935 = vand.u32 %v221, 4294901760
        %1936 = vmatpush.msra.mxu0 %v1935
        %v1937 = vand.u32 %v217, 4294901760
        %1938 = vmatpush.msra.mxu0 %v1937
        %v1939 = vand.u32 %v213, 4294901760
        %1940 = vmatpush.msra.mxu0 %v1939
        %v1941 = vand.u32 %v209, 4294901760
        %1942 = vmatpush.msra.mxu0 %v1941
        %v1943 = vand.u32 %v205, 4294901760
        %1944 = vmatpush.msra.mxu0 %v1943
        %v1945 = vand.u32 %v201, 4294901760
        %1946 = vmatpush.msra.mxu0 %v1945
        %v1947 = vand.u32 %v197, 4294901760
        %1948 = vmatpush.msra.mxu0 %v1947
        %v1949 = vand.u32 %v193, 4294901760
        %1950 = vmatpush.msra.mxu0 %v1949
        %v1951 = vand.u32 %v189, 4294901760
        %1952 = vmatpush.msra.mxu0 %v1951
        %v1953 = vand.u32 %v1395, 4294901760
        %1954 = vmatmul.f32.gmra.mxu0 %v1953
        %v1955 = vpop.f32.mrf.mxu0
        %v1956 = vadd.f32 %v1922, %v1955
        %v1957 = vand.u32 %v1398, 4294901760
        %1958 = vmatmul.f32.gmra.mxu0 %v1957
        %v1959 = vpop.f32.mrf.mxu0
        %v1960 = vadd.f32 %v1926, %v1959
        %1961 = vdwg.mxu0
        %1962 = vmatpush.msra.mxu0 0.0
        %1963 = vmatpush.msra.mxu0 0.0
        %1964 = vmatpush.msra.mxu0 0.0
        %1965 = vmatpush.msra.mxu0 0.0
        %1966 = vmatpush.msra.mxu0 0.0
        %1967 = vmatpush.msra.mxu0 0.0
        %1968 = vmatpush.msra.mxu0 0.0
        %v1969 = vand.u32 %v222, 4294901760
        %1970 = vmatpush.msra.mxu0 %v1969
        %v1971 = vand.u32 %v218, 4294901760
        %1972 = vmatpush.msra.mxu0 %v1971
        %v1973 = vand.u32 %v214, 4294901760
        %1974 = vmatpush.msra.mxu0 %v1973
        %v1975 = vand.u32 %v210, 4294901760
        %1976 = vmatpush.msra.mxu0 %v1975
        %v1977 = vand.u32 %v206, 4294901760
        %1978 = vmatpush.msra.mxu0 %v1977
        %v1979 = vand.u32 %v202, 4294901760
        %1980 = vmatpush.msra.mxu0 %v1979
        %v1981 = vand.u32 %v198, 4294901760
        %1982 = vmatpush.msra.mxu0 %v1981
        %v1983 = vand.u32 %v194, 4294901760
        %1984 = vmatpush.msra.mxu0 %v1983
        %v1985 = vand.u32 %v190, 4294901760
        %1986 = vmatpush.msra.mxu0 %v1985
        %v1987 = vand.u32 %v1395, 4294901760
        %v1988 = vsub.f32 %v1395, %v1987
        %v1989 = vand.u32 %v1988, 4294901760
        %v1990 = vsub.f32 %v1988, %v1989
        %v1991 = vand.u32 %v1990, 4294901760
        %1992 = vmatmul.f32.gmra.mxu0 %v1991
        %v1993 = vpop.f32.mrf.mxu0
        %v1994 = vadd.f32 %v1107, %v1993
        %v1995 = vand.u32 %v1398, 4294901760
        %v1996 = vsub.f32 %v1398, %v1995
        %v1997 = vand.u32 %v1996, 4294901760
        %v1998 = vsub.f32 %v1996, %v1997
        %v1999 = vand.u32 %v1998, 4294901760
        %2000 = vmatmul.f32.gmra.mxu0 %v1999
        %v2001 = vpop.f32.mrf.mxu0
        %v2002 = vadd.f32 %v1111, %v2001
        %2003 = vdwg.mxu0
        %2004 = vmatpush.msra.mxu0 0.0
        %2005 = vmatpush.msra.mxu0 0.0
        %2006 = vmatpush.msra.mxu0 0.0
        %2007 = vmatpush.msra.mxu0 0.0
        %2008 = vmatpush.msra.mxu0 0.0
        %2009 = vmatpush.msra.mxu0 0.0
        %2010 = vmatpush.msra.mxu0 0.0
        %v2011 = vand.u32 %v222, 4294901760
        %v2012 = vsub.f32 %v222, %v2011
        %v2013 = vand.u32 %v2012, 4294901760
        %v2014 = vsub.f32 %v2012, %v2013
        %v2015 = vand.u32 %v2014, 4294901760
        %2016 = vmatpush.msra.mxu0 %v2015
        %v2017 = vand.u32 %v218, 4294901760
        %v2018 = vsub.f32 %v218, %v2017
        %v2019 = vand.u32 %v2018, 4294901760
        %v2020 = vsub.f32 %v2018, %v2019
        %v2021 = vand.u32 %v2020, 4294901760
        %2022 = vmatpush.msra.mxu0 %v2021
        %v2023 = vand.u32 %v214, 4294901760
        %v2024 = vsub.f32 %v214, %v2023
        %v2025 = vand.u32 %v2024, 4294901760
        %v2026 = vsub.f32 %v2024, %v2025
        %v2027 = vand.u32 %v2026, 4294901760
        %2028 = vmatpush.msra.mxu0 %v2027
        %v2029 = vand.u32 %v210, 4294901760
        %v2030 = vsub.f32 %v210, %v2029
        %v2031 = vand.u32 %v2030, 4294901760
        %v2032 = vsub.f32 %v2030, %v2031
        %v2033 = vand.u32 %v2032, 4294901760
        %2034 = vmatpush.msra.mxu0 %v2033
        %v2035 = vand.u32 %v206, 4294901760
        %v2036 = vsub.f32 %v206, %v2035
        %v2037 = vand.u32 %v2036, 4294901760
        %v2038 = vsub.f32 %v2036, %v2037
        %v2039 = vand.u32 %v2038, 4294901760
        %2040 = vmatpush.msra.mxu0 %v2039
        %v2041 = vand.u32 %v202, 4294901760
        %v2042 = vsub.f32 %v202, %v2041
        %v2043 = vand.u32 %v2042, 4294901760
        %v2044 = vsub.f32 %v2042, %v2043
        %v2045 = vand.u32 %v2044, 4294901760
        %2046 = vmatpush.msra.mxu0 %v2045
        %v2047 = vand.u32 %v198, 4294901760
        %v2048 = vsub.f32 %v198, %v2047
        %v2049 = vand.u32 %v2048, 4294901760
        %v2050 = vsub.f32 %v2048, %v2049
        %v2051 = vand.u32 %v2050, 4294901760
        %2052 = vmatpush.msra.mxu0 %v2051
        %v2053 = vand.u32 %v194, 4294901760
        %v2054 = vsub.f32 %v194, %v2053
        %v2055 = vand.u32 %v2054, 4294901760
        %v2056 = vsub.f32 %v2054, %v2055
        %v2057 = vand.u32 %v2056, 4294901760
        %2058 = vmatpush.msra.mxu0 %v2057
        %v2059 = vand.u32 %v190, 4294901760
        %v2060 = vsub.f32 %v190, %v2059
        %v2061 = vand.u32 %v2060, 4294901760
        %v2062 = vsub.f32 %v2060, %v2061
        %v2063 = vand.u32 %v2062, 4294901760
        %2064 = vmatpush.msra.mxu0 %v2063
        %v2065 = vand.u32 %v1395, 4294901760
        %2066 = vmatmul.f32.gmra.mxu0 %v2065
        %v2067 = vpop.f32.mrf.mxu0
        %v2068 = vadd.f32 %v1994, %v2067
        %v2069 = vand.u32 %v1398, 4294901760
        %2070 = vmatmul.f32.gmra.mxu0 %v2069
        %v2071 = vpop.f32.mrf.mxu0
        %v2072 = vadd.f32 %v2002, %v2071
        %2073 = vdwg.mxu0
        %2074 = vmatpush.msra.mxu0 0.0
        %2075 = vmatpush.msra.mxu0 0.0
        %2076 = vmatpush.msra.mxu0 0.0
        %2077 = vmatpush.msra.mxu0 0.0
        %2078 = vmatpush.msra.mxu0 0.0
        %2079 = vmatpush.msra.mxu0 0.0
        %2080 = vmatpush.msra.mxu0 0.0
        %v2081 = vand.u32 %v222, 4294901760
        %v2082 = vsub.f32 %v222, %v2081
        %2083 = vmatpush.msra.mxu0 %v2082
        %v2084 = vand.u32 %v218, 4294901760
        %v2085 = vsub.f32 %v218, %v2084
        %2086 = vmatpush.msra.mxu0 %v2085
        %v2087 = vand.u32 %v214, 4294901760
        %v2088 = vsub.f32 %v214, %v2087
        %2089 = vmatpush.msra.mxu0 %v2088
        %v2090 = vand.u32 %v210, 4294901760
        %v2091 = vsub.f32 %v210, %v2090
        %2092 = vmatpush.msra.mxu0 %v2091
        %v2093 = vand.u32 %v206, 4294901760
        %v2094 = vsub.f32 %v206, %v2093
        %2095 = vmatpush.msra.mxu0 %v2094
        %v2096 = vand.u32 %v202, 4294901760
        %v2097 = vsub.f32 %v202, %v2096
        %2098 = vmatpush.msra.mxu0 %v2097
        %v2099 = vand.u32 %v198, 4294901760
        %v2100 = vsub.f32 %v198, %v2099
        %2101 = vmatpush.msra.mxu0 %v2100
        %v2102 = vand.u32 %v194, 4294901760
        %v2103 = vsub.f32 %v194, %v2102
        %2104 = vmatpush.msra.mxu0 %v2103
        %v2105 = vand.u32 %v190, 4294901760
        %v2106 = vsub.f32 %v190, %v2105
        %2107 = vmatpush.msra.mxu0 %v2106
        %v2108 = vand.u32 %v1395, 4294901760
        %v2109 = vsub.f32 %v1395, %v2108
        %2110 = vmatmul.f32.gmra.mxu0 %v2109
        %v2111 = vpop.f32.mrf.mxu0
        %v2112 = vadd.f32 %v2068, %v2111
        %v2113 = vand.u32 %v1398, 4294901760
        %v2114 = vsub.f32 %v1398, %v2113
        %2115 = vmatmul.f32.gmra.mxu0 %v2114
        %v2116 = vpop.f32.mrf.mxu0
        %v2117 = vadd.f32 %v2072, %v2116
        %2118 = vdwg.mxu0
        %2119 = vmatpush.msra.mxu0 0.0
        %2120 = vmatpush.msra.mxu0 0.0
        %2121 = vmatpush.msra.mxu0 0.0
        %2122 = vmatpush.msra.mxu0 0.0
        %2123 = vmatpush.msra.mxu0 0.0
        %2124 = vmatpush.msra.mxu0 0.0
        %2125 = vmatpush.msra.mxu0 0.0
        %v2126 = vand.u32 %v222, 4294901760
        %2127 = vmatpush.msra.mxu0 %v2126
        %v2128 = vand.u32 %v218, 4294901760
        %2129 = vmatpush.msra.mxu0 %v2128
        %v2130 = vand.u32 %v214, 4294901760
        %2131 = vmatpush.msra.mxu0 %v2130
        %v2132 = vand.u32 %v210, 4294901760
        %2133 = vmatpush.msra.mxu0 %v2132
        %v2134 = vand.u32 %v206, 4294901760
        %2135 = vmatpush.msra.mxu0 %v2134
        %v2136 = vand.u32 %v202, 4294901760
        %2137 = vmatpush.msra.mxu0 %v2136
        %v2138 = vand.u32 %v198, 4294901760
        %2139 = vmatpush.msra.mxu0 %v2138
        %v2140 = vand.u32 %v194, 4294901760
        %2141 = vmatpush.msra.mxu0 %v2140
        %v2142 = vand.u32 %v190, 4294901760
        %2143 = vmatpush.msra.mxu0 %v2142
        %v2144 = vand.u32 %v1395, 4294901760
        %v2145 = vsub.f32 %v1395, %v2144
        %v2146 = vand.u32 %v2145, 4294901760
        %2147 = vmatmul.f32.gmra.mxu0 %v2146
        %v2148 = vpop.f32.mrf.mxu0
        %v2149 = vadd.f32 %v2112, %v2148
        %v2150 = vand.u32 %v1398, 4294901760
        %v2151 = vsub.f32 %v1398, %v2150
        %v2152 = vand.u32 %v2151, 4294901760
        %2153 = vmatmul.f32.gmra.mxu0 %v2152
        %v2154 = vpop.f32.mrf.mxu0
        %v2155 = vadd.f32 %v2117, %v2154
        %2156 = vdwg.mxu0
        %2157 = vmatpush.msra.mxu0 0.0
        %2158 = vmatpush.msra.mxu0 0.0
        %2159 = vmatpush.msra.mxu0 0.0
        %2160 = vmatpush.msra.mxu0 0.0
        %2161 = vmatpush.msra.mxu0 0.0
        %2162 = vmatpush.msra.mxu0 0.0
        %2163 = vmatpush.msra.mxu0 0.0
        %v2164 = vand.u32 %v222, 4294901760
        %v2165 = vsub.f32 %v222, %v2164
        %v2166 = vand.u32 %v2165, 4294901760
        %2167 = vmatpush.msra.mxu0 %v2166
        %v2168 = vand.u32 %v218, 4294901760
        %v2169 = vsub.f32 %v218, %v2168
        %v2170 = vand.u32 %v2169, 4294901760
        %2171 = vmatpush.msra.mxu0 %v2170
        %v2172 = vand.u32 %v214, 4294901760
        %v2173 = vsub.f32 %v214, %v2172
        %v2174 = vand.u32 %v2173, 4294901760
        %2175 = vmatpush.msra.mxu0 %v2174
        %v2176 = vand.u32 %v210, 4294901760
        %v2177 = vsub.f32 %v210, %v2176
        %v2178 = vand.u32 %v2177, 4294901760
        %2179 = vmatpush.msra.mxu0 %v2178
        %v2180 = vand.u32 %v206, 4294901760
        %v2181 = vsub.f32 %v206, %v2180
        %v2182 = vand.u32 %v2181, 4294901760
        %2183 = vmatpush.msra.mxu0 %v2182
        %v2184 = vand.u32 %v202, 4294901760
        %v2185 = vsub.f32 %v202, %v2184
        %v2186 = vand.u32 %v2185, 4294901760
        %2187 = vmatpush.msra.mxu0 %v2186
        %v2188 = vand.u32 %v198, 4294901760
        %v2189 = vsub.f32 %v198, %v2188
        %v2190 = vand.u32 %v2189, 4294901760
        %2191 = vmatpush.msra.mxu0 %v2190
        %v2192 = vand.u32 %v194, 4294901760
        %v2193 = vsub.f32 %v194, %v2192
        %v2194 = vand.u32 %v2193, 4294901760
        %2195 = vmatpush.msra.mxu0 %v2194
        %v2196 = vand.u32 %v190, 4294901760
        %v2197 = vsub.f32 %v190, %v2196
        %v2198 = vand.u32 %v2197, 4294901760
        %2199 = vmatpush.msra.mxu0 %v2198
        %v2200 = vand.u32 %v1395, 4294901760
        %2201 = vmatmul.f32.gmra.mxu0 %v2200
        %v2202 = vpop.f32.mrf.mxu0
        %v2203 = vadd.f32 %v2149, %v2202
        %v2204 = vand.u32 %v1398, 4294901760
        %2205 = vmatmul.f32.gmra.mxu0 %v2204
        %v2206 = vpop.f32.mrf.mxu0
        %v2207 = vadd.f32 %v2155, %v2206
        %2208 = vdwg.mxu0
        %2209 = vmatpush.msra.mxu0 0.0
        %2210 = vmatpush.msra.mxu0 0.0
        %2211 = vmatpush.msra.mxu0 0.0
        %2212 = vmatpush.msra.mxu0 0.0
        %2213 = vmatpush.msra.mxu0 0.0
        %2214 = vmatpush.msra.mxu0 0.0
        %2215 = vmatpush.msra.mxu0 0.0
        %v2216 = vand.u32 %v222, 4294901760
        %2217 = vmatpush.msra.mxu0 %v2216
        %v2218 = vand.u32 %v218, 4294901760
        %2219 = vmatpush.msra.mxu0 %v2218
        %v2220 = vand.u32 %v214, 4294901760
        %2221 = vmatpush.msra.mxu0 %v2220
        %v2222 = vand.u32 %v210, 4294901760
        %2223 = vmatpush.msra.mxu0 %v2222
        %v2224 = vand.u32 %v206, 4294901760
        %2225 = vmatpush.msra.mxu0 %v2224
        %v2226 = vand.u32 %v202, 4294901760
        %2227 = vmatpush.msra.mxu0 %v2226
        %v2228 = vand.u32 %v198, 4294901760
        %2229 = vmatpush.msra.mxu0 %v2228
        %v2230 = vand.u32 %v194, 4294901760
        %2231 = vmatpush.msra.mxu0 %v2230
        %v2232 = vand.u32 %v190, 4294901760
        %2233 = vmatpush.msra.mxu0 %v2232
        %v2234 = vand.u32 %v1395, 4294901760
        %2235 = vmatmul.f32.gmra.mxu0 %v2234
        %v2236 = vpop.f32.mrf.mxu0
        %v2237 = vadd.f32 %v2203, %v2236
        %v2238 = vand.u32 %v1398, 4294901760
        %2239 = vmatmul.f32.gmra.mxu0 %v2238
        %v2240 = vpop.f32.mrf.mxu0
        %v2241 = vadd.f32 %v2207, %v2240
        %2242 = vdwg.mxu0
        %2243 = vmatpush.msra.mxu0 0.0
        %2244 = vmatpush.msra.mxu0 0.0
        %2245 = vmatpush.msra.mxu0 0.0
        %2246 = vmatpush.msra.mxu0 0.0
        %2247 = vmatpush.msra.mxu0 0.0
        %2248 = vmatpush.msra.mxu0 0.0
        %2249 = vmatpush.msra.mxu0 0.0
        %v2250 = vand.u32 %v223, 4294901760
        %2251 = vmatpush.msra.mxu0 %v2250
        %v2252 = vand.u32 %v219, 4294901760
        %2253 = vmatpush.msra.mxu0 %v2252
        %v2254 = vand.u32 %v215, 4294901760
        %2255 = vmatpush.msra.mxu0 %v2254
        %v2256 = vand.u32 %v211, 4294901760
        %2257 = vmatpush.msra.mxu0 %v2256
        %v2258 = vand.u32 %v207, 4294901760
        %2259 = vmatpush.msra.mxu0 %v2258
        %v2260 = vand.u32 %v203, 4294901760
        %2261 = vmatpush.msra.mxu0 %v2260
        %v2262 = vand.u32 %v199, 4294901760
        %2263 = vmatpush.msra.mxu0 %v2262
        %v2264 = vand.u32 %v195, 4294901760
        %2265 = vmatpush.msra.mxu0 %v2264
        %v2266 = vand.u32 %v191, 4294901760
        %2267 = vmatpush.msra.mxu0 %v2266
        %v2268 = vand.u32 %v1395, 4294901760
        %v2269 = vsub.f32 %v1395, %v2268
        %v2270 = vand.u32 %v2269, 4294901760
        %v2271 = vsub.f32 %v2269, %v2270
        %v2272 = vand.u32 %v2271, 4294901760
        %2273 = vmatmul.f32.gmra.mxu0 %v2272
        %v2274 = vpop.f32.mrf.mxu0
        %v2275 = vadd.f32 %v1388, %v2274
        %v2276 = vand.u32 %v1398, 4294901760
        %v2277 = vsub.f32 %v1398, %v2276
        %v2278 = vand.u32 %v2277, 4294901760
        %v2279 = vsub.f32 %v2277, %v2278
        %v2280 = vand.u32 %v2279, 4294901760
        %2281 = vmatmul.f32.gmra.mxu0 %v2280
        %v2282 = vpop.f32.mrf.mxu0
        %v2283 = vadd.f32 %v1392, %v2282
        %2284 = vdwg.mxu0
        %2285 = vmatpush.msra.mxu0 0.0
        %2286 = vmatpush.msra.mxu0 0.0
        %2287 = vmatpush.msra.mxu0 0.0
        %2288 = vmatpush.msra.mxu0 0.0
        %2289 = vmatpush.msra.mxu0 0.0
        %2290 = vmatpush.msra.mxu0 0.0
        %2291 = vmatpush.msra.mxu0 0.0
        %v2292 = vand.u32 %v223, 4294901760
        %v2293 = vsub.f32 %v223, %v2292
        %v2294 = vand.u32 %v2293, 4294901760
        %v2295 = vsub.f32 %v2293, %v2294
        %v2296 = vand.u32 %v2295, 4294901760
        %2297 = vmatpush.msra.mxu0 %v2296
        %v2298 = vand.u32 %v219, 4294901760
        %v2299 = vsub.f32 %v219, %v2298
        %v2300 = vand.u32 %v2299, 4294901760
        %v2301 = vsub.f32 %v2299, %v2300
        %v2302 = vand.u32 %v2301, 4294901760
        %2303 = vmatpush.msra.mxu0 %v2302
        %v2304 = vand.u32 %v215, 4294901760
        %v2305 = vsub.f32 %v215, %v2304
        %v2306 = vand.u32 %v2305, 4294901760
        %v2307 = vsub.f32 %v2305, %v2306
        %v2308 = vand.u32 %v2307, 4294901760
        %2309 = vmatpush.msra.mxu0 %v2308
        %v2310 = vand.u32 %v211, 4294901760
        %v2311 = vsub.f32 %v211, %v2310
        %v2312 = vand.u32 %v2311, 4294901760
        %v2313 = vsub.f32 %v2311, %v2312
        %v2314 = vand.u32 %v2313, 4294901760
        %2315 = vmatpush.msra.mxu0 %v2314
        %v2316 = vand.u32 %v207, 4294901760
        %v2317 = vsub.f32 %v207, %v2316
        %v2318 = vand.u32 %v2317, 4294901760
        %v2319 = vsub.f32 %v2317, %v2318
        %v2320 = vand.u32 %v2319, 4294901760
        %2321 = vmatpush.msra.mxu0 %v2320
        %v2322 = vand.u32 %v203, 4294901760
        %v2323 = vsub.f32 %v203, %v2322
        %v2324 = vand.u32 %v2323, 4294901760
        %v2325 = vsub.f32 %v2323, %v2324
        %v2326 = vand.u32 %v2325, 4294901760
        %2327 = vmatpush.msra.mxu0 %v2326
        %v2328 = vand.u32 %v199, 4294901760
        %v2329 = vsub.f32 %v199, %v2328
        %v2330 = vand.u32 %v2329, 4294901760
        %v2331 = vsub.f32 %v2329, %v2330
        %v2332 = vand.u32 %v2331, 4294901760
        %2333 = vmatpush.msra.mxu0 %v2332
        %v2334 = vand.u32 %v195, 4294901760
        %v2335 = vsub.f32 %v195, %v2334
        %v2336 = vand.u32 %v2335, 4294901760
        %v2337 = vsub.f32 %v2335, %v2336
        %v2338 = vand.u32 %v2337, 4294901760
        %2339 = vmatpush.msra.mxu0 %v2338
        %v2340 = vand.u32 %v191, 4294901760
        %v2341 = vsub.f32 %v191, %v2340
        %v2342 = vand.u32 %v2341, 4294901760
        %v2343 = vsub.f32 %v2341, %v2342
        %v2344 = vand.u32 %v2343, 4294901760
        %2345 = vmatpush.msra.mxu0 %v2344
        %v2346 = vand.u32 %v1395, 4294901760
        %2347 = vmatmul.f32.gmra.mxu0 %v2346
        %v2348 = vpop.f32.mrf.mxu0
        %v2349 = vadd.f32 %v2275, %v2348
        %v2350 = vand.u32 %v1398, 4294901760
        %2351 = vmatmul.f32.gmra.mxu0 %v2350
        %v2352 = vpop.f32.mrf.mxu0
        %v2353 = vadd.f32 %v2283, %v2352
        %2354 = vdwg.mxu0
        %2355 = vmatpush.msra.mxu0 0.0
        %2356 = vmatpush.msra.mxu0 0.0
        %2357 = vmatpush.msra.mxu0 0.0
        %2358 = vmatpush.msra.mxu0 0.0
        %2359 = vmatpush.msra.mxu0 0.0
        %2360 = vmatpush.msra.mxu0 0.0
        %2361 = vmatpush.msra.mxu0 0.0
        %v2362 = vand.u32 %v223, 4294901760
        %v2363 = vsub.f32 %v223, %v2362
        %2364 = vmatpush.msra.mxu0 %v2363
        %v2365 = vand.u32 %v219, 4294901760
        %v2366 = vsub.f32 %v219, %v2365
        %2367 = vmatpush.msra.mxu0 %v2366
        %v2368 = vand.u32 %v215, 4294901760
        %v2369 = vsub.f32 %v215, %v2368
        %2370 = vmatpush.msra.mxu0 %v2369
        %v2371 = vand.u32 %v211, 4294901760
        %v2372 = vsub.f32 %v211, %v2371
        %2373 = vmatpush.msra.mxu0 %v2372
        %v2374 = vand.u32 %v207, 4294901760
        %v2375 = vsub.f32 %v207, %v2374
        %2376 = vmatpush.msra.mxu0 %v2375
        %v2377 = vand.u32 %v203, 4294901760
        %v2378 = vsub.f32 %v203, %v2377
        %2379 = vmatpush.msra.mxu0 %v2378
        %v2380 = vand.u32 %v199, 4294901760
        %v2381 = vsub.f32 %v199, %v2380
        %2382 = vmatpush.msra.mxu0 %v2381
        %v2383 = vand.u32 %v195, 4294901760
        %v2384 = vsub.f32 %v195, %v2383
        %2385 = vmatpush.msra.mxu0 %v2384
        %v2386 = vand.u32 %v191, 4294901760
        %v2387 = vsub.f32 %v191, %v2386
        %2388 = vmatpush.msra.mxu0 %v2387
        %v2389 = vand.u32 %v1395, 4294901760
        %v2390 = vsub.f32 %v1395, %v2389
        %2391 = vmatmul.f32.gmra.mxu0 %v2390
        %v2392 = vpop.f32.mrf.mxu0
        %v2393 = vadd.f32 %v2349, %v2392
        %v2394 = vand.u32 %v1398, 4294901760
        %v2395 = vsub.f32 %v1398, %v2394
        %2396 = vmatmul.f32.gmra.mxu0 %v2395
        %v2397 = vpop.f32.mrf.mxu0
        %v2398 = vadd.f32 %v2353, %v2397
        %2399 = vdwg.mxu0
        %2400 = vmatpush.msra.mxu0 0.0
        %2401 = vmatpush.msra.mxu0 0.0
        %2402 = vmatpush.msra.mxu0 0.0
        %2403 = vmatpush.msra.mxu0 0.0
        %2404 = vmatpush.msra.mxu0 0.0
        %2405 = vmatpush.msra.mxu0 0.0
        %2406 = vmatpush.msra.mxu0 0.0
        %v2407 = vand.u32 %v223, 4294901760
        %2408 = vmatpush.msra.mxu0 %v2407
        %v2409 = vand.u32 %v219, 4294901760
        %2410 = vmatpush.msra.mxu0 %v2409
        %v2411 = vand.u32 %v215, 4294901760
        %2412 = vmatpush.msra.mxu0 %v2411
        %v2413 = vand.u32 %v211, 4294901760
        %2414 = vmatpush.msra.mxu0 %v2413
        %v2415 = vand.u32 %v207, 4294901760
        %2416 = vmatpush.msra.mxu0 %v2415
        %v2417 = vand.u32 %v203, 4294901760
        %2418 = vmatpush.msra.mxu0 %v2417
        %v2419 = vand.u32 %v199, 4294901760
        %2420 = vmatpush.msra.mxu0 %v2419
        %v2421 = vand.u32 %v195, 4294901760
        %2422 = vmatpush.msra.mxu0 %v2421
        %v2423 = vand.u32 %v191, 4294901760
        %2424 = vmatpush.msra.mxu0 %v2423
        %v2425 = vand.u32 %v1395, 4294901760
        %v2426 = vsub.f32 %v1395, %v2425
        %v2427 = vand.u32 %v2426, 4294901760
        %2428 = vmatmul.f32.gmra.mxu0 %v2427
        %v2429 = vpop.f32.mrf.mxu0
        %v2430 = vadd.f32 %v2393, %v2429
        %v2431 = vand.u32 %v1398, 4294901760
        %v2432 = vsub.f32 %v1398, %v2431
        %v2433 = vand.u32 %v2432, 4294901760
        %2434 = vmatmul.f32.gmra.mxu0 %v2433
        %v2435 = vpop.f32.mrf.mxu0
        %v2436 = vadd.f32 %v2398, %v2435
        %2437 = vdwg.mxu0
        %2438 = vmatpush.msra.mxu0 0.0
        %2439 = vmatpush.msra.mxu0 0.0
        %2440 = vmatpush.msra.mxu0 0.0
        %2441 = vmatpush.msra.mxu0 0.0
        %2442 = vmatpush.msra.mxu0 0.0
        %2443 = vmatpush.msra.mxu0 0.0
        %2444 = vmatpush.msra.mxu0 0.0
        %v2445 = vand.u32 %v223, 4294901760
        %v2446 = vsub.f32 %v223, %v2445
        %v2447 = vand.u32 %v2446, 4294901760
        %2448 = vmatpush.msra.mxu0 %v2447
        %v2449 = vand.u32 %v219, 4294901760
        %v2450 = vsub.f32 %v219, %v2449
        %v2451 = vand.u32 %v2450, 4294901760
        %2452 = vmatpush.msra.mxu0 %v2451
        %v2453 = vand.u32 %v215, 4294901760
        %v2454 = vsub.f32 %v215, %v2453
        %v2455 = vand.u32 %v2454, 4294901760
        %2456 = vmatpush.msra.mxu0 %v2455
        %v2457 = vand.u32 %v211, 4294901760
        %v2458 = vsub.f32 %v211, %v2457
        %v2459 = vand.u32 %v2458, 4294901760
        %2460 = vmatpush.msra.mxu0 %v2459
        %v2461 = vand.u32 %v207, 4294901760
        %v2462 = vsub.f32 %v207, %v2461
        %v2463 = vand.u32 %v2462, 4294901760
        %2464 = vmatpush.msra.mxu0 %v2463
        %v2465 = vand.u32 %v203, 4294901760
        %v2466 = vsub.f32 %v203, %v2465
        %v2467 = vand.u32 %v2466, 4294901760
        %2468 = vmatpush.msra.mxu0 %v2467
        %v2469 = vand.u32 %v199, 4294901760
        %v2470 = vsub.f32 %v199, %v2469
        %v2471 = vand.u32 %v2470, 4294901760
        %2472 = vmatpush.msra.mxu0 %v2471
        %v2473 = vand.u32 %v195, 4294901760
        %v2474 = vsub.f32 %v195, %v2473
        %v2475 = vand.u32 %v2474, 4294901760
        %2476 = vmatpush.msra.mxu0 %v2475
        %v2477 = vand.u32 %v191, 4294901760
        %v2478 = vsub.f32 %v191, %v2477
        %v2479 = vand.u32 %v2478, 4294901760
        %2480 = vmatpush.msra.mxu0 %v2479
        %v2481 = vand.u32 %v1395, 4294901760
        %2482 = vmatmul.f32.gmra.mxu0 %v2481
        %v2483 = vpop.f32.mrf.mxu0
        %v2484 = vadd.f32 %v2430, %v2483
        %v2485 = vand.u32 %v1398, 4294901760
        %2486 = vmatmul.f32.gmra.mxu0 %v2485
        %v2487 = vpop.f32.mrf.mxu0
        %v2488 = vadd.f32 %v2436, %v2487
        %2489 = vdwg.mxu0
        %2490 = vmatpush.msra.mxu0 0.0
        %2491 = vmatpush.msra.mxu0 0.0
        %2492 = vmatpush.msra.mxu0 0.0
        %2493 = vmatpush.msra.mxu0 0.0
        %2494 = vmatpush.msra.mxu0 0.0
        %2495 = vmatpush.msra.mxu0 0.0
        %2496 = vmatpush.msra.mxu0 0.0
        %v2497 = vand.u32 %v223, 4294901760
        %2498 = vmatpush.msra.mxu0 %v2497
        %v2499 = vand.u32 %v219, 4294901760
        %2500 = vmatpush.msra.mxu0 %v2499
        %v2501 = vand.u32 %v215, 4294901760
        %2502 = vmatpush.msra.mxu0 %v2501
        %v2503 = vand.u32 %v211, 4294901760
        %2504 = vmatpush.msra.mxu0 %v2503
        %v2505 = vand.u32 %v207, 4294901760
        %2506 = vmatpush.msra.mxu0 %v2505
        %v2507 = vand.u32 %v203, 4294901760
        %2508 = vmatpush.msra.mxu0 %v2507
        %v2509 = vand.u32 %v199, 4294901760
        %2510 = vmatpush.msra.mxu0 %v2509
        %v2511 = vand.u32 %v195, 4294901760
        %2512 = vmatpush.msra.mxu0 %v2511
        %v2513 = vand.u32 %v191, 4294901760
        %2514 = vmatpush.msra.mxu0 %v2513
        %v2515 = vand.u32 %v1395, 4294901760
        %2516 = vmatmul.f32.gmra.mxu0 %v2515
        %v2517 = vpop.f32.mrf.mxu0
        %v2518 = vadd.f32 %v2484, %v2517
        %v2519 = vand.u32 %v1398, 4294901760
        %2520 = vmatmul.f32.gmra.mxu0 %v2519
        %v2521 = vpop.f32.mrf.mxu0
        %v2522 = vadd.f32 %v2488, %v2521
        %2523 = vdwg.mxu0
        %v2524 = vld [vmem:[%s185 + $0x2] sm:$0xff]
        %v2525 = vld [vmem:[%s185 + $0xa] sm:$0xff]
        %s2526 = scalar_lea.vmem [#allocation2], 576
        %v2527 = vld [vmem:[%s2526] sm:$0xff]
        %v2528 = vld [vmem:[%s2526 + $0x8] sm:$0xff]
        %v2529 = vld [vmem:[%s2526 + $0x10] sm:$0xff]
        %v2530 = vld [vmem:[%s2526 + $0x18] sm:$0xff]
        %v2531 = vld [vmem:[%s2526 + $0x20] sm:$0xff]
        %v2532 = vld [vmem:[%s2526 + $0x28] sm:$0xff]
        %v2533 = vld [vmem:[%s2526 + $0x30] sm:$0xff]
        %v2534 = vld [vmem:[%s2526 + $0x38] sm:$0xff]
        %v2535 = vld [vmem:[%s2526 + $0x40] sm:$0xff]
        %v2536 = vld [vmem:[%s2526 + $0x48] sm:$0xff]
        %v2537 = vld [vmem:[%s2526 + $0x50] sm:$0xff]
        %v2538 = vld [vmem:[%s2526 + $0x58] sm:$0xff]
        %v2539 = vld [vmem:[%s2526 + $0x60] sm:$0xff]
        %v2540 = vld [vmem:[%s2526 + $0x68] sm:$0xff]
        %v2541 = vld [vmem:[%s2526 + $0x70] sm:$0xff]
        %v2542 = vld [vmem:[%s2526 + $0x78] sm:$0xff]
        %v2543 = vld [vmem:[%s2526 + $0x80] sm:$0xff]
        %v2544 = vld [vmem:[%s2526 + $0x88] sm:$0xff]
        %v2545 = vld [vmem:[%s2526 + $0x90] sm:$0xff]
        %v2546 = vld [vmem:[%s2526 + $0x98] sm:$0xff]
        %v2547 = vld [vmem:[%s2526 + $0xa0] sm:$0xff]
        %v2548 = vld [vmem:[%s2526 + $0xa8] sm:$0xff]
        %v2549 = vld [vmem:[%s2526 + $0xb0] sm:$0xff]
        %v2550 = vld [vmem:[%s2526 + $0xb8] sm:$0xff]
        %v2551 = vld [vmem:[%s2526 + $0xc0] sm:$0xff]
        %v2552 = vld [vmem:[%s2526 + $0xc8] sm:$0xff]
        %v2553 = vld [vmem:[%s2526 + $0xd0] sm:$0xff]
        %v2554 = vld [vmem:[%s2526 + $0xd8] sm:$0xff]
        %v2555 = vld [vmem:[%s2526 + $0xe0] sm:$0xff]
        %v2556 = vld [vmem:[%s2526 + $0xe8] sm:$0xff]
        %v2557 = vld [vmem:[%s2526 + $0xf0] sm:$0xff]
        %v2558 = vld [vmem:[%s2526 + $0xf8] sm:$0xff]
        %v2559 = vld [vmem:[%s2526 + $0x100] sm:$0xff]
        %v2560 = vld [vmem:[%s2526 + $0x108] sm:$0xff]
        %v2561 = vld [vmem:[%s2526 + $0x110] sm:$0xff]
        %v2562 = vld [vmem:[%s2526 + $0x118] sm:$0xff]
        %v2564 = vsel %vm263, %v2524, 0
        %v2567 = vsel %vm263, %v2525, 0
        %2569 = vmatpush.msra.mxu0 0.0
        %2570 = vmatpush.msra.mxu0 0.0
        %2571 = vmatpush.msra.mxu0 0.0
        %2572 = vmatpush.msra.mxu0 0.0
        %2573 = vmatpush.msra.mxu0 0.0
        %2574 = vmatpush.msra.mxu0 0.0
        %2575 = vmatpush.msra.mxu0 0.0
        %v2576 = vand.u32 %v2559, 4294901760
        %2577 = vmatpush.msra.mxu0 %v2576
        %v2578 = vand.u32 %v2555, 4294901760
        %2579 = vmatpush.msra.mxu0 %v2578
        %v2580 = vand.u32 %v2551, 4294901760
        %2581 = vmatpush.msra.mxu0 %v2580
        %v2582 = vand.u32 %v2547, 4294901760
        %2583 = vmatpush.msra.mxu0 %v2582
        %v2584 = vand.u32 %v2543, 4294901760
        %2585 = vmatpush.msra.mxu0 %v2584
        %v2586 = vand.u32 %v2539, 4294901760
        %2587 = vmatpush.msra.mxu0 %v2586
        %v2588 = vand.u32 %v2535, 4294901760
        %2589 = vmatpush.msra.mxu0 %v2588
        %v2590 = vand.u32 %v2531, 4294901760
        %2591 = vmatpush.msra.mxu0 %v2590
        %v2592 = vand.u32 %v2527, 4294901760
        %2593 = vmatpush.msra.mxu0 %v2592
        %v2594 = vand.u32 %v2564, 4294901760
        %v2595 = vsub.f32 %v2564, %v2594
        %v2596 = vand.u32 %v2595, 4294901760
        %v2597 = vsub.f32 %v2595, %v2596
        %v2598 = vand.u32 %v2597, 4294901760
        %2599 = vmatmul.f32.gmra.mxu0 %v2598
        %v2600 = vpop.f32.mrf.mxu0
        %v2601 = vadd.f32 0.0, %v2600
        %v2602 = vand.u32 %v2567, 4294901760
        %v2603 = vsub.f32 %v2567, %v2602
        %v2604 = vand.u32 %v2603, 4294901760
        %v2605 = vsub.f32 %v2603, %v2604
        %v2606 = vand.u32 %v2605, 4294901760
        %2607 = vmatmul.f32.gmra.mxu0 %v2606
        %v2608 = vpop.f32.mrf.mxu0
        %v2609 = vadd.f32 0.0, %v2608
        %2610 = vdwg.mxu0
        %2611 = vmatpush.msra.mxu0 0.0
        %2612 = vmatpush.msra.mxu0 0.0
        %2613 = vmatpush.msra.mxu0 0.0
        %2614 = vmatpush.msra.mxu0 0.0
        %2615 = vmatpush.msra.mxu0 0.0
        %2616 = vmatpush.msra.mxu0 0.0
        %2617 = vmatpush.msra.mxu0 0.0
        %v2618 = vand.u32 %v2559, 4294901760
        %v2619 = vsub.f32 %v2559, %v2618
        %v2620 = vand.u32 %v2619, 4294901760
        %v2621 = vsub.f32 %v2619, %v2620
        %v2622 = vand.u32 %v2621, 4294901760
        %2623 = vmatpush.msra.mxu0 %v2622
        %v2624 = vand.u32 %v2555, 4294901760
        %v2625 = vsub.f32 %v2555, %v2624
        %v2626 = vand.u32 %v2625, 4294901760
        %v2627 = vsub.f32 %v2625, %v2626
        %v2628 = vand.u32 %v2627, 4294901760
        %2629 = vmatpush.msra.mxu0 %v2628
        %v2630 = vand.u32 %v2551, 4294901760
        %v2631 = vsub.f32 %v2551, %v2630
        %v2632 = vand.u32 %v2631, 4294901760
        %v2633 = vsub.f32 %v2631, %v2632
        %v2634 = vand.u32 %v2633, 4294901760
        %2635 = vmatpush.msra.mxu0 %v2634
        %v2636 = vand.u32 %v2547, 4294901760
        %v2637 = vsub.f32 %v2547, %v2636
        %v2638 = vand.u32 %v2637, 4294901760
        %v2639 = vsub.f32 %v2637, %v2638
        %v2640 = vand.u32 %v2639, 4294901760
        %2641 = vmatpush.msra.mxu0 %v2640
        %v2642 = vand.u32 %v2543, 4294901760
        %v2643 = vsub.f32 %v2543, %v2642
        %v2644 = vand.u32 %v2643, 4294901760
        %v2645 = vsub.f32 %v2643, %v2644
        %v2646 = vand.u32 %v2645, 4294901760
        %2647 = vmatpush.msra.mxu0 %v2646
        %v2648 = vand.u32 %v2539, 4294901760
        %v2649 = vsub.f32 %v2539, %v2648
        %v2650 = vand.u32 %v2649, 4294901760
        %v2651 = vsub.f32 %v2649, %v2650
        %v2652 = vand.u32 %v2651, 4294901760
        %2653 = vmatpush.msra.mxu0 %v2652
        %v2654 = vand.u32 %v2535, 4294901760
        %v2655 = vsub.f32 %v2535, %v2654
        %v2656 = vand.u32 %v2655, 4294901760
        %v2657 = vsub.f32 %v2655, %v2656
        %v2658 = vand.u32 %v2657, 4294901760
        %2659 = vmatpush.msra.mxu0 %v2658
        %v2660 = vand.u32 %v2531, 4294901760
        %v2661 = vsub.f32 %v2531, %v2660
        %v2662 = vand.u32 %v2661, 4294901760
        %v2663 = vsub.f32 %v2661, %v2662
        %v2664 = vand.u32 %v2663, 4294901760
        %2665 = vmatpush.msra.mxu0 %v2664
        %v2666 = vand.u32 %v2527, 4294901760
        %v2667 = vsub.f32 %v2527, %v2666
        %v2668 = vand.u32 %v2667, 4294901760
        %v2669 = vsub.f32 %v2667, %v2668
        %v2670 = vand.u32 %v2669, 4294901760
        %2671 = vmatpush.msra.mxu0 %v2670
        %v2672 = vand.u32 %v2564, 4294901760
        %2673 = vmatmul.f32.gmra.mxu0 %v2672
        %v2674 = vpop.f32.mrf.mxu0
        %v2675 = vadd.f32 %v2601, %v2674
        %v2676 = vand.u32 %v2567, 4294901760
        %2677 = vmatmul.f32.gmra.mxu0 %v2676
        %v2678 = vpop.f32.mrf.mxu0
        %v2679 = vadd.f32 %v2609, %v2678
        %2680 = vdwg.mxu0
        %2681 = vmatpush.msra.mxu0 0.0
        %2682 = vmatpush.msra.mxu0 0.0
        %2683 = vmatpush.msra.mxu0 0.0
        %2684 = vmatpush.msra.mxu0 0.0
        %2685 = vmatpush.msra.mxu0 0.0
        %2686 = vmatpush.msra.mxu0 0.0
        %2687 = vmatpush.msra.mxu0 0.0
        %v2688 = vand.u32 %v2559, 4294901760
        %v2689 = vsub.f32 %v2559, %v2688
        %2690 = vmatpush.msra.mxu0 %v2689
        %v2691 = vand.u32 %v2555, 4294901760
        %v2692 = vsub.f32 %v2555, %v2691
        %2693 = vmatpush.msra.mxu0 %v2692
        %v2694 = vand.u32 %v2551, 4294901760
        %v2695 = vsub.f32 %v2551, %v2694
        %2696 = vmatpush.msra.mxu0 %v2695
        %v2697 = vand.u32 %v2547, 4294901760
        %v2698 = vsub.f32 %v2547, %v2697
        %2699 = vmatpush.msra.mxu0 %v2698
        %v2700 = vand.u32 %v2543, 4294901760
        %v2701 = vsub.f32 %v2543, %v2700
        %2702 = vmatpush.msra.mxu0 %v2701
        %v2703 = vand.u32 %v2539, 4294901760
        %v2704 = vsub.f32 %v2539, %v2703
        %2705 = vmatpush.msra.mxu0 %v2704
        %v2706 = vand.u32 %v2535, 4294901760
        %v2707 = vsub.f32 %v2535, %v2706
        %2708 = vmatpush.msra.mxu0 %v2707
        %v2709 = vand.u32 %v2531, 4294901760
        %v2710 = vsub.f32 %v2531, %v2709
        %2711 = vmatpush.msra.mxu0 %v2710
        %v2712 = vand.u32 %v2527, 4294901760
        %v2713 = vsub.f32 %v2527, %v2712
        %2714 = vmatpush.msra.mxu0 %v2713
        %v2715 = vand.u32 %v2564, 4294901760
        %v2716 = vsub.f32 %v2564, %v2715
        %2717 = vmatmul.f32.gmra.mxu0 %v2716
        %v2718 = vpop.f32.mrf.mxu0
        %v2719 = vadd.f32 %v2675, %v2718
        %v2720 = vand.u32 %v2567, 4294901760
        %v2721 = vsub.f32 %v2567, %v2720
        %2722 = vmatmul.f32.gmra.mxu0 %v2721
        %v2723 = vpop.f32.mrf.mxu0
        %v2724 = vadd.f32 %v2679, %v2723
        %2725 = vdwg.mxu0
        %2726 = vmatpush.msra.mxu0 0.0
        %2727 = vmatpush.msra.mxu0 0.0
        %2728 = vmatpush.msra.mxu0 0.0
        %2729 = vmatpush.msra.mxu0 0.0
        %2730 = vmatpush.msra.mxu0 0.0
        %2731 = vmatpush.msra.mxu0 0.0
        %2732 = vmatpush.msra.mxu0 0.0
        %v2733 = vand.u32 %v2559, 4294901760
        %2734 = vmatpush.msra.mxu0 %v2733
        %v2735 = vand.u32 %v2555, 4294901760
        %2736 = vmatpush.msra.mxu0 %v2735
        %v2737 = vand.u32 %v2551, 4294901760
        %2738 = vmatpush.msra.mxu0 %v2737
        %v2739 = vand.u32 %v2547, 4294901760
        %2740 = vmatpush.msra.mxu0 %v2739
        %v2741 = vand.u32 %v2543, 4294901760
        %2742 = vmatpush.msra.mxu0 %v2741
        %v2743 = vand.u32 %v2539, 4294901760
        %2744 = vmatpush.msra.mxu0 %v2743
        %v2745 = vand.u32 %v2535, 4294901760
        %2746 = vmatpush.msra.mxu0 %v2745
        %v2747 = vand.u32 %v2531, 4294901760
        %2748 = vmatpush.msra.mxu0 %v2747
        %v2749 = vand.u32 %v2527, 4294901760
        %2750 = vmatpush.msra.mxu0 %v2749
        %v2751 = vand.u32 %v2564, 4294901760
        %v2752 = vsub.f32 %v2564, %v2751
        %v2753 = vand.u32 %v2752, 4294901760
        %2754 = vmatmul.f32.gmra.mxu0 %v2753
        %v2755 = vpop.f32.mrf.mxu0
        %v2756 = vadd.f32 %v2719, %v2755
        %v2757 = vand.u32 %v2567, 4294901760
        %v2758 = vsub.f32 %v2567, %v2757
        %v2759 = vand.u32 %v2758, 4294901760
        %2760 = vmatmul.f32.gmra.mxu0 %v2759
        %v2761 = vpop.f32.mrf.mxu0
        %v2762 = vadd.f32 %v2724, %v2761
        %2763 = vdwg.mxu0
        %2764 = vmatpush.msra.mxu0 0.0
        %2765 = vmatpush.msra.mxu0 0.0
        %2766 = vmatpush.msra.mxu0 0.0
        %2767 = vmatpush.msra.mxu0 0.0
        %2768 = vmatpush.msra.mxu0 0.0
        %2769 = vmatpush.msra.mxu0 0.0
        %2770 = vmatpush.msra.mxu0 0.0
        %v2771 = vand.u32 %v2559, 4294901760
        %v2772 = vsub.f32 %v2559, %v2771
        %v2773 = vand.u32 %v2772, 4294901760
        %2774 = vmatpush.msra.mxu0 %v2773
        %v2775 = vand.u32 %v2555, 4294901760
        %v2776 = vsub.f32 %v2555, %v2775
        %v2777 = vand.u32 %v2776, 4294901760
        %2778 = vmatpush.msra.mxu0 %v2777
        %v2779 = vand.u32 %v2551, 4294901760
        %v2780 = vsub.f32 %v2551, %v2779
        %v2781 = vand.u32 %v2780, 4294901760
        %2782 = vmatpush.msra.mxu0 %v2781
        %v2783 = vand.u32 %v2547, 4294901760
        %v2784 = vsub.f32 %v2547, %v2783
        %v2785 = vand.u32 %v2784, 4294901760
        %2786 = vmatpush.msra.mxu0 %v2785
        %v2787 = vand.u32 %v2543, 4294901760
        %v2788 = vsub.f32 %v2543, %v2787
        %v2789 = vand.u32 %v2788, 4294901760
        %2790 = vmatpush.msra.mxu0 %v2789
        %v2791 = vand.u32 %v2539, 4294901760
        %v2792 = vsub.f32 %v2539, %v2791
        %v2793 = vand.u32 %v2792, 4294901760
        %2794 = vmatpush.msra.mxu0 %v2793
        %v2795 = vand.u32 %v2535, 4294901760
        %v2796 = vsub.f32 %v2535, %v2795
        %v2797 = vand.u32 %v2796, 4294901760
        %2798 = vmatpush.msra.mxu0 %v2797
        %v2799 = vand.u32 %v2531, 4294901760
        %v2800 = vsub.f32 %v2531, %v2799
        %v2801 = vand.u32 %v2800, 4294901760
        %2802 = vmatpush.msra.mxu0 %v2801
        %v2803 = vand.u32 %v2527, 4294901760
        %v2804 = vsub.f32 %v2527, %v2803
        %v2805 = vand.u32 %v2804, 4294901760
        %2806 = vmatpush.msra.mxu0 %v2805
        %v2807 = vand.u32 %v2564, 4294901760
        %2808 = vmatmul.f32.gmra.mxu0 %v2807
        %v2809 = vpop.f32.mrf.mxu0
        %v2810 = vadd.f32 %v2756, %v2809
        %v2811 = vand.u32 %v2567, 4294901760
        %2812 = vmatmul.f32.gmra.mxu0 %v2811
        %v2813 = vpop.f32.mrf.mxu0
        %v2814 = vadd.f32 %v2762, %v2813
        %2815 = vdwg.mxu0
        %2816 = vmatpush.msra.mxu0 0.0
        %2817 = vmatpush.msra.mxu0 0.0
        %2818 = vmatpush.msra.mxu0 0.0
        %2819 = vmatpush.msra.mxu0 0.0
        %2820 = vmatpush.msra.mxu0 0.0
        %2821 = vmatpush.msra.mxu0 0.0
        %2822 = vmatpush.msra.mxu0 0.0
        %v2823 = vand.u32 %v2559, 4294901760
        %2824 = vmatpush.msra.mxu0 %v2823
        %v2825 = vand.u32 %v2555, 4294901760
        %2826 = vmatpush.msra.mxu0 %v2825
        %v2827 = vand.u32 %v2551, 4294901760
        %2828 = vmatpush.msra.mxu0 %v2827
        %v2829 = vand.u32 %v2547, 4294901760
        %2830 = vmatpush.msra.mxu0 %v2829
        %v2831 = vand.u32 %v2543, 4294901760
        %2832 = vmatpush.msra.mxu0 %v2831
        %v2833 = vand.u32 %v2539, 4294901760
        %2834 = vmatpush.msra.mxu0 %v2833
        %v2835 = vand.u32 %v2535, 4294901760
        %2836 = vmatpush.msra.mxu0 %v2835
        %v2837 = vand.u32 %v2531, 4294901760
        %2838 = vmatpush.msra.mxu0 %v2837
        %v2839 = vand.u32 %v2527, 4294901760
        %2840 = vmatpush.msra.mxu0 %v2839
        %v2841 = vand.u32 %v2564, 4294901760
        %2842 = vmatmul.f32.gmra.mxu0 %v2841
        %v2843 = vpop.f32.mrf.mxu0
        %v2844 = vadd.f32 %v2810, %v2843
        %v2845 = vand.u32 %v2567, 4294901760
        %2846 = vmatmul.f32.gmra.mxu0 %v2845
        %v2847 = vpop.f32.mrf.mxu0
        %v2848 = vadd.f32 %v2814, %v2847
        %2849 = vdwg.mxu0
        %2850 = vmatpush.msra.mxu0 0.0
        %2851 = vmatpush.msra.mxu0 0.0
        %2852 = vmatpush.msra.mxu0 0.0
        %2853 = vmatpush.msra.mxu0 0.0
        %2854 = vmatpush.msra.mxu0 0.0
        %2855 = vmatpush.msra.mxu0 0.0
        %2856 = vmatpush.msra.mxu0 0.0
        %v2857 = vand.u32 %v2560, 4294901760
        %2858 = vmatpush.msra.mxu0 %v2857
        %v2859 = vand.u32 %v2556, 4294901760
        %2860 = vmatpush.msra.mxu0 %v2859
        %v2861 = vand.u32 %v2552, 4294901760
        %2862 = vmatpush.msra.mxu0 %v2861
        %v2863 = vand.u32 %v2548, 4294901760
        %2864 = vmatpush.msra.mxu0 %v2863
        %v2865 = vand.u32 %v2544, 4294901760
        %2866 = vmatpush.msra.mxu0 %v2865
        %v2867 = vand.u32 %v2540, 4294901760
        %2868 = vmatpush.msra.mxu0 %v2867
        %v2869 = vand.u32 %v2536, 4294901760
        %2870 = vmatpush.msra.mxu0 %v2869
        %v2871 = vand.u32 %v2532, 4294901760
        %2872 = vmatpush.msra.mxu0 %v2871
        %v2873 = vand.u32 %v2528, 4294901760
        %2874 = vmatpush.msra.mxu0 %v2873
        %v2875 = vand.u32 %v2564, 4294901760
        %v2876 = vsub.f32 %v2564, %v2875
        %v2877 = vand.u32 %v2876, 4294901760
        %v2878 = vsub.f32 %v2876, %v2877
        %v2879 = vand.u32 %v2878, 4294901760
        %2880 = vmatmul.f32.gmra.mxu0 %v2879
        %v2881 = vpop.f32.mrf.mxu0
        %v2882 = vadd.f32 0.0, %v2881
        %v2883 = vand.u32 %v2567, 4294901760
        %v2884 = vsub.f32 %v2567, %v2883
        %v2885 = vand.u32 %v2884, 4294901760
        %v2886 = vsub.f32 %v2884, %v2885
        %v2887 = vand.u32 %v2886, 4294901760
        %2888 = vmatmul.f32.gmra.mxu0 %v2887
        %v2889 = vpop.f32.mrf.mxu0
        %v2890 = vadd.f32 0.0, %v2889
        %2891 = vdwg.mxu0
        %2892 = vmatpush.msra.mxu0 0.0
        %2893 = vmatpush.msra.mxu0 0.0
        %2894 = vmatpush.msra.mxu0 0.0
        %2895 = vmatpush.msra.mxu0 0.0
        %2896 = vmatpush.msra.mxu0 0.0
        %2897 = vmatpush.msra.mxu0 0.0
        %2898 = vmatpush.msra.mxu0 0.0
        %v2899 = vand.u32 %v2560, 4294901760
        %v2900 = vsub.f32 %v2560, %v2899
        %v2901 = vand.u32 %v2900, 4294901760
        %v2902 = vsub.f32 %v2900, %v2901
        %v2903 = vand.u32 %v2902, 4294901760
        %2904 = vmatpush.msra.mxu0 %v2903
        %v2905 = vand.u32 %v2556, 4294901760
        %v2906 = vsub.f32 %v2556, %v2905
        %v2907 = vand.u32 %v2906, 4294901760
        %v2908 = vsub.f32 %v2906, %v2907
        %v2909 = vand.u32 %v2908, 4294901760
        %2910 = vmatpush.msra.mxu0 %v2909
        %v2911 = vand.u32 %v2552, 4294901760
        %v2912 = vsub.f32 %v2552, %v2911
        %v2913 = vand.u32 %v2912, 4294901760
        %v2914 = vsub.f32 %v2912, %v2913
        %v2915 = vand.u32 %v2914, 4294901760
        %2916 = vmatpush.msra.mxu0 %v2915
        %v2917 = vand.u32 %v2548, 4294901760
        %v2918 = vsub.f32 %v2548, %v2917
        %v2919 = vand.u32 %v2918, 4294901760
        %v2920 = vsub.f32 %v2918, %v2919
        %v2921 = vand.u32 %v2920, 4294901760
        %2922 = vmatpush.msra.mxu0 %v2921
        %v2923 = vand.u32 %v2544, 4294901760
        %v2924 = vsub.f32 %v2544, %v2923
        %v2925 = vand.u32 %v2924, 4294901760
        %v2926 = vsub.f32 %v2924, %v2925
        %v2927 = vand.u32 %v2926, 4294901760
        %2928 = vmatpush.msra.mxu0 %v2927
        %v2929 = vand.u32 %v2540, 4294901760
        %v2930 = vsub.f32 %v2540, %v2929
        %v2931 = vand.u32 %v2930, 4294901760
        %v2932 = vsub.f32 %v2930, %v2931
        %v2933 = vand.u32 %v2932, 4294901760
        %2934 = vmatpush.msra.mxu0 %v2933
        %v2935 = vand.u32 %v2536, 4294901760
        %v2936 = vsub.f32 %v2536, %v2935
        %v2937 = vand.u32 %v2936, 4294901760
        %v2938 = vsub.f32 %v2936, %v2937
        %v2939 = vand.u32 %v2938, 4294901760
        %2940 = vmatpush.msra.mxu0 %v2939
        %v2941 = vand.u32 %v2532, 4294901760
        %v2942 = vsub.f32 %v2532, %v2941
        %v2943 = vand.u32 %v2942, 4294901760
        %v2944 = vsub.f32 %v2942, %v2943
        %v2945 = vand.u32 %v2944, 4294901760
        %2946 = vmatpush.msra.mxu0 %v2945
        %v2947 = vand.u32 %v2528, 4294901760
        %v2948 = vsub.f32 %v2528, %v2947
        %v2949 = vand.u32 %v2948, 4294901760
        %v2950 = vsub.f32 %v2948, %v2949
        %v2951 = vand.u32 %v2950, 4294901760
        %2952 = vmatpush.msra.mxu0 %v2951
        %v2953 = vand.u32 %v2564, 4294901760
        %2954 = vmatmul.f32.gmra.mxu0 %v2953
        %v2955 = vpop.f32.mrf.mxu0
        %v2956 = vadd.f32 %v2882, %v2955
        %v2957 = vand.u32 %v2567, 4294901760
        %2958 = vmatmul.f32.gmra.mxu0 %v2957
        %v2959 = vpop.f32.mrf.mxu0
        %v2960 = vadd.f32 %v2890, %v2959
        %2961 = vdwg.mxu0
        %2962 = vmatpush.msra.mxu0 0.0
        %2963 = vmatpush.msra.mxu0 0.0
        %2964 = vmatpush.msra.mxu0 0.0
        %2965 = vmatpush.msra.mxu0 0.0
        %2966 = vmatpush.msra.mxu0 0.0
        %2967 = vmatpush.msra.mxu0 0.0
        %2968 = vmatpush.msra.mxu0 0.0
        %v2969 = vand.u32 %v2560, 4294901760
        %v2970 = vsub.f32 %v2560, %v2969
        %2971 = vmatpush.msra.mxu0 %v2970
        %v2972 = vand.u32 %v2556, 4294901760
        %v2973 = vsub.f32 %v2556, %v2972
        %2974 = vmatpush.msra.mxu0 %v2973
        %v2975 = vand.u32 %v2552, 4294901760
        %v2976 = vsub.f32 %v2552, %v2975
        %2977 = vmatpush.msra.mxu0 %v2976
        %v2978 = vand.u32 %v2548, 4294901760
        %v2979 = vsub.f32 %v2548, %v2978
        %2980 = vmatpush.msra.mxu0 %v2979
        %v2981 = vand.u32 %v2544, 4294901760
        %v2982 = vsub.f32 %v2544, %v2981
        %2983 = vmatpush.msra.mxu0 %v2982
        %v2984 = vand.u32 %v2540, 4294901760
        %v2985 = vsub.f32 %v2540, %v2984
        %2986 = vmatpush.msra.mxu0 %v2985
        %v2987 = vand.u32 %v2536, 4294901760
        %v2988 = vsub.f32 %v2536, %v2987
        %2989 = vmatpush.msra.mxu0 %v2988
        %v2990 = vand.u32 %v2532, 4294901760
        %v2991 = vsub.f32 %v2532, %v2990
        %2992 = vmatpush.msra.mxu0 %v2991
        %v2993 = vand.u32 %v2528, 4294901760
        %v2994 = vsub.f32 %v2528, %v2993
        %2995 = vmatpush.msra.mxu0 %v2994
        %v2996 = vand.u32 %v2564, 4294901760
        %v2997 = vsub.f32 %v2564, %v2996
        %2998 = vmatmul.f32.gmra.mxu0 %v2997
        %v2999 = vpop.f32.mrf.mxu0
        %v3000 = vadd.f32 %v2956, %v2999
        %v3001 = vand.u32 %v2567, 4294901760
        %v3002 = vsub.f32 %v2567, %v3001
        %3003 = vmatmul.f32.gmra.mxu0 %v3002
        %v3004 = vpop.f32.mrf.mxu0
        %v3005 = vadd.f32 %v2960, %v3004
        %3006 = vdwg.mxu0
        %3007 = vmatpush.msra.mxu0 0.0
        %3008 = vmatpush.msra.mxu0 0.0
        %3009 = vmatpush.msra.mxu0 0.0
        %3010 = vmatpush.msra.mxu0 0.0
        %3011 = vmatpush.msra.mxu0 0.0
        %3012 = vmatpush.msra.mxu0 0.0
        %3013 = vmatpush.msra.mxu0 0.0
        %v3014 = vand.u32 %v2560, 4294901760
        %3015 = vmatpush.msra.mxu0 %v3014
        %v3016 = vand.u32 %v2556, 4294901760
        %3017 = vmatpush.msra.mxu0 %v3016
        %v3018 = vand.u32 %v2552, 4294901760
        %3019 = vmatpush.msra.mxu0 %v3018
        %v3020 = vand.u32 %v2548, 4294901760
        %3021 = vmatpush.msra.mxu0 %v3020
        %v3022 = vand.u32 %v2544, 4294901760
        %3023 = vmatpush.msra.mxu0 %v3022
        %v3024 = vand.u32 %v2540, 4294901760
        %3025 = vmatpush.msra.mxu0 %v3024
        %v3026 = vand.u32 %v2536, 4294901760
        %3027 = vmatpush.msra.mxu0 %v3026
        %v3028 = vand.u32 %v2532, 4294901760
        %3029 = vmatpush.msra.mxu0 %v3028
        %v3030 = vand.u32 %v2528, 4294901760
        %3031 = vmatpush.msra.mxu0 %v3030
        %v3032 = vand.u32 %v2564, 4294901760
        %v3033 = vsub.f32 %v2564, %v3032
        %v3034 = vand.u32 %v3033, 4294901760
        %3035 = vmatmul.f32.gmra.mxu0 %v3034
        %v3036 = vpop.f32.mrf.mxu0
        %v3037 = vadd.f32 %v3000, %v3036
        %v3038 = vand.u32 %v2567, 4294901760
        %v3039 = vsub.f32 %v2567, %v3038
        %v3040 = vand.u32 %v3039, 4294901760
        %3041 = vmatmul.f32.gmra.mxu0 %v3040
        %v3042 = vpop.f32.mrf.mxu0
        %v3043 = vadd.f32 %v3005, %v3042
        %3044 = vdwg.mxu0
        %3045 = vmatpush.msra.mxu0 0.0
        %3046 = vmatpush.msra.mxu0 0.0
        %3047 = vmatpush.msra.mxu0 0.0
        %3048 = vmatpush.msra.mxu0 0.0
        %3049 = vmatpush.msra.mxu0 0.0
        %3050 = vmatpush.msra.mxu0 0.0
        %3051 = vmatpush.msra.mxu0 0.0
        %v3052 = vand.u32 %v2560, 4294901760
        %v3053 = vsub.f32 %v2560, %v3052
        %v3054 = vand.u32 %v3053, 4294901760
        %3055 = vmatpush.msra.mxu0 %v3054
        %v3056 = vand.u32 %v2556, 4294901760
        %v3057 = vsub.f32 %v2556, %v3056
        %v3058 = vand.u32 %v3057, 4294901760
        %3059 = vmatpush.msra.mxu0 %v3058
        %v3060 = vand.u32 %v2552, 4294901760
        %v3061 = vsub.f32 %v2552, %v3060
        %v3062 = vand.u32 %v3061, 4294901760
        %3063 = vmatpush.msra.mxu0 %v3062
        %v3064 = vand.u32 %v2548, 4294901760
        %v3065 = vsub.f32 %v2548, %v3064
        %v3066 = vand.u32 %v3065, 4294901760
        %3067 = vmatpush.msra.mxu0 %v3066
        %v3068 = vand.u32 %v2544, 4294901760
        %v3069 = vsub.f32 %v2544, %v3068
        %v3070 = vand.u32 %v3069, 4294901760
        %3071 = vmatpush.msra.mxu0 %v3070
        %v3072 = vand.u32 %v2540, 4294901760
        %v3073 = vsub.f32 %v2540, %v3072
        %v3074 = vand.u32 %v3073, 4294901760
        %3075 = vmatpush.msra.mxu0 %v3074
        %v3076 = vand.u32 %v2536, 4294901760
        %v3077 = vsub.f32 %v2536, %v3076
        %v3078 = vand.u32 %v3077, 4294901760
        %3079 = vmatpush.msra.mxu0 %v3078
        %v3080 = vand.u32 %v2532, 4294901760
        %v3081 = vsub.f32 %v2532, %v3080
        %v3082 = vand.u32 %v3081, 4294901760
        %3083 = vmatpush.msra.mxu0 %v3082
        %v3084 = vand.u32 %v2528, 4294901760
        %v3085 = vsub.f32 %v2528, %v3084
        %v3086 = vand.u32 %v3085, 4294901760
        %3087 = vmatpush.msra.mxu0 %v3086
        %v3088 = vand.u32 %v2564, 4294901760
        %3089 = vmatmul.f32.gmra.mxu0 %v3088
        %v3090 = vpop.f32.mrf.mxu0
        %v3091 = vadd.f32 %v3037, %v3090
        %v3092 = vand.u32 %v2567, 4294901760
        %3093 = vmatmul.f32.gmra.mxu0 %v3092
        %v3094 = vpop.f32.mrf.mxu0
        %v3095 = vadd.f32 %v3043, %v3094
        %3096 = vdwg.mxu0
        %3097 = vmatpush.msra.mxu0 0.0
        %3098 = vmatpush.msra.mxu0 0.0
        %3099 = vmatpush.msra.mxu0 0.0
        %3100 = vmatpush.msra.mxu0 0.0
        %3101 = vmatpush.msra.mxu0 0.0
        %3102 = vmatpush.msra.mxu0 0.0
        %3103 = vmatpush.msra.mxu0 0.0
        %v3104 = vand.u32 %v2560, 4294901760
        %3105 = vmatpush.msra.mxu0 %v3104
        %v3106 = vand.u32 %v2556, 4294901760
        %3107 = vmatpush.msra.mxu0 %v3106
        %v3108 = vand.u32 %v2552, 4294901760
        %3109 = vmatpush.msra.mxu0 %v3108
        %v3110 = vand.u32 %v2548, 4294901760
        %3111 = vmatpush.msra.mxu0 %v3110
        %v3112 = vand.u32 %v2544, 4294901760
        %3113 = vmatpush.msra.mxu0 %v3112
        %v3114 = vand.u32 %v2540, 4294901760
        %3115 = vmatpush.msra.mxu0 %v3114
        %v3116 = vand.u32 %v2536, 4294901760
        %3117 = vmatpush.msra.mxu0 %v3116
        %v3118 = vand.u32 %v2532, 4294901760
        %3119 = vmatpush.msra.mxu0 %v3118
        %v3120 = vand.u32 %v2528, 4294901760
        %3121 = vmatpush.msra.mxu0 %v3120
        %v3122 = vand.u32 %v2564, 4294901760
        %3123 = vmatmul.f32.gmra.mxu0 %v3122
        %v3124 = vpop.f32.mrf.mxu0
        %v3125 = vadd.f32 %v3091, %v3124
        %v3126 = vand.u32 %v2567, 4294901760
        %3127 = vmatmul.f32.gmra.mxu0 %v3126
        %v3128 = vpop.f32.mrf.mxu0
        %v3129 = vadd.f32 %v3095, %v3128
        %3130 = vdwg.mxu0
        %3131 = vmatpush.msra.mxu0 0.0
        %3132 = vmatpush.msra.mxu0 0.0
        %3133 = vmatpush.msra.mxu0 0.0
        %3134 = vmatpush.msra.mxu0 0.0
        %3135 = vmatpush.msra.mxu0 0.0
        %3136 = vmatpush.msra.mxu0 0.0
        %3137 = vmatpush.msra.mxu0 0.0
        %v3138 = vand.u32 %v2561, 4294901760
        %3139 = vmatpush.msra.mxu0 %v3138
        %v3140 = vand.u32 %v2557, 4294901760
        %3141 = vmatpush.msra.mxu0 %v3140
        %v3142 = vand.u32 %v2553, 4294901760
        %3143 = vmatpush.msra.mxu0 %v3142
        %v3144 = vand.u32 %v2549, 4294901760
        %3145 = vmatpush.msra.mxu0 %v3144
        %v3146 = vand.u32 %v2545, 4294901760
        %3147 = vmatpush.msra.mxu0 %v3146
        %v3148 = vand.u32 %v2541, 4294901760
        %3149 = vmatpush.msra.mxu0 %v3148
        %v3150 = vand.u32 %v2537, 4294901760
        %3151 = vmatpush.msra.mxu0 %v3150
        %v3152 = vand.u32 %v2533, 4294901760
        %3153 = vmatpush.msra.mxu0 %v3152
        %v3154 = vand.u32 %v2529, 4294901760
        %3155 = vmatpush.msra.mxu0 %v3154
        %v3156 = vand.u32 %v2564, 4294901760
        %v3157 = vsub.f32 %v2564, %v3156
        %v3158 = vand.u32 %v3157, 4294901760
        %v3159 = vsub.f32 %v3157, %v3158
        %v3160 = vand.u32 %v3159, 4294901760
        %3161 = vmatmul.f32.gmra.mxu0 %v3160
        %v3162 = vpop.f32.mrf.mxu0
        %v3163 = vadd.f32 0.0, %v3162
        %v3164 = vand.u32 %v2567, 4294901760
        %v3165 = vsub.f32 %v2567, %v3164
        %v3166 = vand.u32 %v3165, 4294901760
        %v3167 = vsub.f32 %v3165, %v3166
        %v3168 = vand.u32 %v3167, 4294901760
        %3169 = vmatmul.f32.gmra.mxu0 %v3168
        %v3170 = vpop.f32.mrf.mxu0
        %v3171 = vadd.f32 0.0, %v3170
        %3172 = vdwg.mxu0
        %3173 = vmatpush.msra.mxu0 0.0
        %3174 = vmatpush.msra.mxu0 0.0
        %3175 = vmatpush.msra.mxu0 0.0
        %3176 = vmatpush.msra.mxu0 0.0
        %3177 = vmatpush.msra.mxu0 0.0
        %3178 = vmatpush.msra.mxu0 0.0
        %3179 = vmatpush.msra.mxu0 0.0
        %v3180 = vand.u32 %v2561, 4294901760
        %v3181 = vsub.f32 %v2561, %v3180
        %v3182 = vand.u32 %v3181, 4294901760
        %v3183 = vsub.f32 %v3181, %v3182
        %v3184 = vand.u32 %v3183, 4294901760
        %3185 = vmatpush.msra.mxu0 %v3184
        %v3186 = vand.u32 %v2557, 4294901760
        %v3187 = vsub.f32 %v2557, %v3186
        %v3188 = vand.u32 %v3187, 4294901760
        %v3189 = vsub.f32 %v3187, %v3188
        %v3190 = vand.u32 %v3189, 4294901760
        %3191 = vmatpush.msra.mxu0 %v3190
        %v3192 = vand.u32 %v2553, 4294901760
        %v3193 = vsub.f32 %v2553, %v3192
        %v3194 = vand.u32 %v3193, 4294901760
        %v3195 = vsub.f32 %v3193, %v3194
        %v3196 = vand.u32 %v3195, 4294901760
        %3197 = vmatpush.msra.mxu0 %v3196
        %v3198 = vand.u32 %v2549, 4294901760
        %v3199 = vsub.f32 %v2549, %v3198
        %v3200 = vand.u32 %v3199, 4294901760
        %v3201 = vsub.f32 %v3199, %v3200
        %v3202 = vand.u32 %v3201, 4294901760
        %3203 = vmatpush.msra.mxu0 %v3202
        %v3204 = vand.u32 %v2545, 4294901760
        %v3205 = vsub.f32 %v2545, %v3204
        %v3206 = vand.u32 %v3205, 4294901760
        %v3207 = vsub.f32 %v3205, %v3206
        %v3208 = vand.u32 %v3207, 4294901760
        %3209 = vmatpush.msra.mxu0 %v3208
        %v3210 = vand.u32 %v2541, 4294901760
        %v3211 = vsub.f32 %v2541, %v3210
        %v3212 = vand.u32 %v3211, 4294901760
        %v3213 = vsub.f32 %v3211, %v3212
        %v3214 = vand.u32 %v3213, 4294901760
        %3215 = vmatpush.msra.mxu0 %v3214
        %v3216 = vand.u32 %v2537, 4294901760
        %v3217 = vsub.f32 %v2537, %v3216
        %v3218 = vand.u32 %v3217, 4294901760
        %v3219 = vsub.f32 %v3217, %v3218
        %v3220 = vand.u32 %v3219, 4294901760
        %3221 = vmatpush.msra.mxu0 %v3220
        %v3222 = vand.u32 %v2533, 4294901760
        %v3223 = vsub.f32 %v2533, %v3222
        %v3224 = vand.u32 %v3223, 4294901760
        %v3225 = vsub.f32 %v3223, %v3224
        %v3226 = vand.u32 %v3225, 4294901760
        %3227 = vmatpush.msra.mxu0 %v3226
        %v3228 = vand.u32 %v2529, 4294901760
        %v3229 = vsub.f32 %v2529, %v3228
        %v3230 = vand.u32 %v3229, 4294901760
        %v3231 = vsub.f32 %v3229, %v3230
        %v3232 = vand.u32 %v3231, 4294901760
        %3233 = vmatpush.msra.mxu0 %v3232
        %v3234 = vand.u32 %v2564, 4294901760
        %3235 = vmatmul.f32.gmra.mxu0 %v3234
        %v3236 = vpop.f32.mrf.mxu0
        %v3237 = vadd.f32 %v3163, %v3236
        %v3238 = vand.u32 %v2567, 4294901760
        %3239 = vmatmul.f32.gmra.mxu0 %v3238
        %v3240 = vpop.f32.mrf.mxu0
        %v3241 = vadd.f32 %v3171, %v3240
        %3242 = vdwg.mxu0
        %3243 = vmatpush.msra.mxu0 0.0
        %3244 = vmatpush.msra.mxu0 0.0
        %3245 = vmatpush.msra.mxu0 0.0
        %3246 = vmatpush.msra.mxu0 0.0
        %3247 = vmatpush.msra.mxu0 0.0
        %3248 = vmatpush.msra.mxu0 0.0
        %3249 = vmatpush.msra.mxu0 0.0
        %v3250 = vand.u32 %v2561, 4294901760
        %v3251 = vsub.f32 %v2561, %v3250
        %3252 = vmatpush.msra.mxu0 %v3251
        %v3253 = vand.u32 %v2557, 4294901760
        %v3254 = vsub.f32 %v2557, %v3253
        %3255 = vmatpush.msra.mxu0 %v3254
        %v3256 = vand.u32 %v2553, 4294901760
        %v3257 = vsub.f32 %v2553, %v3256
        %3258 = vmatpush.msra.mxu0 %v3257
        %v3259 = vand.u32 %v2549, 4294901760
        %v3260 = vsub.f32 %v2549, %v3259
        %3261 = vmatpush.msra.mxu0 %v3260
        %v3262 = vand.u32 %v2545, 4294901760
        %v3263 = vsub.f32 %v2545, %v3262
        %3264 = vmatpush.msra.mxu0 %v3263
        %v3265 = vand.u32 %v2541, 4294901760
        %v3266 = vsub.f32 %v2541, %v3265
        %3267 = vmatpush.msra.mxu0 %v3266
        %v3268 = vand.u32 %v2537, 4294901760
        %v3269 = vsub.f32 %v2537, %v3268
        %3270 = vmatpush.msra.mxu0 %v3269
        %v3271 = vand.u32 %v2533, 4294901760
        %v3272 = vsub.f32 %v2533, %v3271
        %3273 = vmatpush.msra.mxu0 %v3272
        %v3274 = vand.u32 %v2529, 4294901760
        %v3275 = vsub.f32 %v2529, %v3274
        %3276 = vmatpush.msra.mxu0 %v3275
        %v3277 = vand.u32 %v2564, 4294901760
        %v3278 = vsub.f32 %v2564, %v3277
        %3279 = vmatmul.f32.gmra.mxu0 %v3278
        %v3280 = vpop.f32.mrf.mxu0
        %v3281 = vadd.f32 %v3237, %v3280
        %v3282 = vand.u32 %v2567, 4294901760
        %v3283 = vsub.f32 %v2567, %v3282
        %3284 = vmatmul.f32.gmra.mxu0 %v3283
        %v3285 = vpop.f32.mrf.mxu0
        %v3286 = vadd.f32 %v3241, %v3285
        %3287 = vdwg.mxu0
        %3288 = vmatpush.msra.mxu0 0.0
        %3289 = vmatpush.msra.mxu0 0.0
        %3290 = vmatpush.msra.mxu0 0.0
        %3291 = vmatpush.msra.mxu0 0.0
        %3292 = vmatpush.msra.mxu0 0.0
        %3293 = vmatpush.msra.mxu0 0.0
        %3294 = vmatpush.msra.mxu0 0.0
        %v3295 = vand.u32 %v2561, 4294901760
        %3296 = vmatpush.msra.mxu0 %v3295
        %v3297 = vand.u32 %v2557, 4294901760
        %3298 = vmatpush.msra.mxu0 %v3297
        %v3299 = vand.u32 %v2553, 4294901760
        %3300 = vmatpush.msra.mxu0 %v3299
        %v3301 = vand.u32 %v2549, 4294901760
        %3302 = vmatpush.msra.mxu0 %v3301
        %v3303 = vand.u32 %v2545, 4294901760
        %3304 = vmatpush.msra.mxu0 %v3303
        %v3305 = vand.u32 %v2541, 4294901760
        %3306 = vmatpush.msra.mxu0 %v3305
        %v3307 = vand.u32 %v2537, 4294901760
        %3308 = vmatpush.msra.mxu0 %v3307
        %v3309 = vand.u32 %v2533, 4294901760
        %3310 = vmatpush.msra.mxu0 %v3309
        %v3311 = vand.u32 %v2529, 4294901760
        %3312 = vmatpush.msra.mxu0 %v3311
        %v3313 = vand.u32 %v2564, 4294901760
        %v3314 = vsub.f32 %v2564, %v3313
        %v3315 = vand.u32 %v3314, 4294901760
        %3316 = vmatmul.f32.gmra.mxu0 %v3315
        %v3317 = vpop.f32.mrf.mxu0
        %v3318 = vadd.f32 %v3281, %v3317
        %v3319 = vand.u32 %v2567, 4294901760
        %v3320 = vsub.f32 %v2567, %v3319
        %v3321 = vand.u32 %v3320, 4294901760
        %3322 = vmatmul.f32.gmra.mxu0 %v3321
        %v3323 = vpop.f32.mrf.mxu0
        %v3324 = vadd.f32 %v3286, %v3323
        %3325 = vdwg.mxu0
        %3326 = vmatpush.msra.mxu0 0.0
        %3327 = vmatpush.msra.mxu0 0.0
        %3328 = vmatpush.msra.mxu0 0.0
        %3329 = vmatpush.msra.mxu0 0.0
        %3330 = vmatpush.msra.mxu0 0.0
        %3331 = vmatpush.msra.mxu0 0.0
        %3332 = vmatpush.msra.mxu0 0.0
        %v3333 = vand.u32 %v2561, 4294901760
        %v3334 = vsub.f32 %v2561, %v3333
        %v3335 = vand.u32 %v3334, 4294901760
        %3336 = vmatpush.msra.mxu0 %v3335
        %v3337 = vand.u32 %v2557, 4294901760
        %v3338 = vsub.f32 %v2557, %v3337
        %v3339 = vand.u32 %v3338, 4294901760
        %3340 = vmatpush.msra.mxu0 %v3339
        %v3341 = vand.u32 %v2553, 4294901760
        %v3342 = vsub.f32 %v2553, %v3341
        %v3343 = vand.u32 %v3342, 4294901760
        %3344 = vmatpush.msra.mxu0 %v3343
        %v3345 = vand.u32 %v2549, 4294901760
        %v3346 = vsub.f32 %v2549, %v3345
        %v3347 = vand.u32 %v3346, 4294901760
        %3348 = vmatpush.msra.mxu0 %v3347
        %v3349 = vand.u32 %v2545, 4294901760
        %v3350 = vsub.f32 %v2545, %v3349
        %v3351 = vand.u32 %v3350, 4294901760
        %3352 = vmatpush.msra.mxu0 %v3351
        %v3353 = vand.u32 %v2541, 4294901760
        %v3354 = vsub.f32 %v2541, %v3353
        %v3355 = vand.u32 %v3354, 4294901760
        %3356 = vmatpush.msra.mxu0 %v3355
        %v3357 = vand.u32 %v2537, 4294901760
        %v3358 = vsub.f32 %v2537, %v3357
        %v3359 = vand.u32 %v3358, 4294901760
        %3360 = vmatpush.msra.mxu0 %v3359
        %v3361 = vand.u32 %v2533, 4294901760
        %v3362 = vsub.f32 %v2533, %v3361
        %v3363 = vand.u32 %v3362, 4294901760
        %3364 = vmatpush.msra.mxu0 %v3363
        %v3365 = vand.u32 %v2529, 4294901760
        %v3366 = vsub.f32 %v2529, %v3365
        %v3367 = vand.u32 %v3366, 4294901760
        %3368 = vmatpush.msra.mxu0 %v3367
        %v3369 = vand.u32 %v2564, 4294901760
        %3370 = vmatmul.f32.gmra.mxu0 %v3369
        %v3371 = vpop.f32.mrf.mxu0
        %v3372 = vadd.f32 %v3318, %v3371
        %v3373 = vand.u32 %v2567, 4294901760
        %3374 = vmatmul.f32.gmra.mxu0 %v3373
        %v3375 = vpop.f32.mrf.mxu0
        %v3376 = vadd.f32 %v3324, %v3375
        %3377 = vdwg.mxu0
        %3378 = vmatpush.msra.mxu0 0.0
        %3379 = vmatpush.msra.mxu0 0.0
        %3380 = vmatpush.msra.mxu0 0.0
        %3381 = vmatpush.msra.mxu0 0.0
        %3382 = vmatpush.msra.mxu0 0.0
        %3383 = vmatpush.msra.mxu0 0.0
        %3384 = vmatpush.msra.mxu0 0.0
        %v3385 = vand.u32 %v2561, 4294901760
        %3386 = vmatpush.msra.mxu0 %v3385
        %v3387 = vand.u32 %v2557, 4294901760
        %3388 = vmatpush.msra.mxu0 %v3387
        %v3389 = vand.u32 %v2553, 4294901760
        %3390 = vmatpush.msra.mxu0 %v3389
        %v3391 = vand.u32 %v2549, 4294901760
        %3392 = vmatpush.msra.mxu0 %v3391
        %v3393 = vand.u32 %v2545, 4294901760
        %3394 = vmatpush.msra.mxu0 %v3393
        %v3395 = vand.u32 %v2541, 4294901760
        %3396 = vmatpush.msra.mxu0 %v3395
        %v3397 = vand.u32 %v2537, 4294901760
        %3398 = vmatpush.msra.mxu0 %v3397
        %v3399 = vand.u32 %v2533, 4294901760
        %3400 = vmatpush.msra.mxu0 %v3399
        %v3401 = vand.u32 %v2529, 4294901760
        %3402 = vmatpush.msra.mxu0 %v3401
        %v3403 = vand.u32 %v2564, 4294901760
        %3404 = vmatmul.f32.gmra.mxu0 %v3403
        %v3405 = vpop.f32.mrf.mxu0
        %v3406 = vadd.f32 %v3372, %v3405
        %v3407 = vand.u32 %v2567, 4294901760
        %3408 = vmatmul.f32.gmra.mxu0 %v3407
        %v3409 = vpop.f32.mrf.mxu0
        %v3410 = vadd.f32 %v3376, %v3409
        %3411 = vdwg.mxu0
        %3412 = vmatpush.msra.mxu0 0.0
        %3413 = vmatpush.msra.mxu0 0.0
        %3414 = vmatpush.msra.mxu0 0.0
        %3415 = vmatpush.msra.mxu0 0.0
        %3416 = vmatpush.msra.mxu0 0.0
        %3417 = vmatpush.msra.mxu0 0.0
        %3418 = vmatpush.msra.mxu0 0.0
        %v3419 = vand.u32 %v2562, 4294901760
        %3420 = vmatpush.msra.mxu0 %v3419
        %v3421 = vand.u32 %v2558, 4294901760
        %3422 = vmatpush.msra.mxu0 %v3421
        %v3423 = vand.u32 %v2554, 4294901760
        %3424 = vmatpush.msra.mxu0 %v3423
        %v3425 = vand.u32 %v2550, 4294901760
        %3426 = vmatpush.msra.mxu0 %v3425
        %v3427 = vand.u32 %v2546, 4294901760
        %3428 = vmatpush.msra.mxu0 %v3427
        %v3429 = vand.u32 %v2542, 4294901760
        %3430 = vmatpush.msra.mxu0 %v3429
        %v3431 = vand.u32 %v2538, 4294901760
        %3432 = vmatpush.msra.mxu0 %v3431
        %v3433 = vand.u32 %v2534, 4294901760
        %3434 = vmatpush.msra.mxu0 %v3433
        %v3435 = vand.u32 %v2530, 4294901760
        %3436 = vmatpush.msra.mxu0 %v3435
        %v3437 = vand.u32 %v2564, 4294901760
        %v3438 = vsub.f32 %v2564, %v3437
        %v3439 = vand.u32 %v3438, 4294901760
        %v3440 = vsub.f32 %v3438, %v3439
        %v3441 = vand.u32 %v3440, 4294901760
        %3442 = vmatmul.f32.gmra.mxu0 %v3441
        %v3443 = vpop.f32.mrf.mxu0
        %v3444 = vadd.f32 0.0, %v3443
        %v3445 = vand.u32 %v2567, 4294901760
        %v3446 = vsub.f32 %v2567, %v3445
        %v3447 = vand.u32 %v3446, 4294901760
        %v3448 = vsub.f32 %v3446, %v3447
        %v3449 = vand.u32 %v3448, 4294901760
        %3450 = vmatmul.f32.gmra.mxu0 %v3449
        %v3451 = vpop.f32.mrf.mxu0
        %v3452 = vadd.f32 0.0, %v3451
        %3453 = vdwg.mxu0
        %3454 = vmatpush.msra.mxu0 0.0
        %3455 = vmatpush.msra.mxu0 0.0
        %3456 = vmatpush.msra.mxu0 0.0
        %3457 = vmatpush.msra.mxu0 0.0
        %3458 = vmatpush.msra.mxu0 0.0
        %3459 = vmatpush.msra.mxu0 0.0
        %3460 = vmatpush.msra.mxu0 0.0
        %v3461 = vand.u32 %v2562, 4294901760
        %v3462 = vsub.f32 %v2562, %v3461
        %v3463 = vand.u32 %v3462, 4294901760
        %v3464 = vsub.f32 %v3462, %v3463
        %v3465 = vand.u32 %v3464, 4294901760
        %3466 = vmatpush.msra.mxu0 %v3465
        %v3467 = vand.u32 %v2558, 4294901760
        %v3468 = vsub.f32 %v2558, %v3467
        %v3469 = vand.u32 %v3468, 4294901760
        %v3470 = vsub.f32 %v3468, %v3469
        %v3471 = vand.u32 %v3470, 4294901760
        %3472 = vmatpush.msra.mxu0 %v3471
        %v3473 = vand.u32 %v2554, 4294901760
        %v3474 = vsub.f32 %v2554, %v3473
        %v3475 = vand.u32 %v3474, 4294901760
        %v3476 = vsub.f32 %v3474, %v3475
        %v3477 = vand.u32 %v3476, 4294901760
        %3478 = vmatpush.msra.mxu0 %v3477
        %v3479 = vand.u32 %v2550, 4294901760
        %v3480 = vsub.f32 %v2550, %v3479
        %v3481 = vand.u32 %v3480, 4294901760
        %v3482 = vsub.f32 %v3480, %v3481
        %v3483 = vand.u32 %v3482, 4294901760
        %3484 = vmatpush.msra.mxu0 %v3483
        %v3485 = vand.u32 %v2546, 4294901760
        %v3486 = vsub.f32 %v2546, %v3485
        %v3487 = vand.u32 %v3486, 4294901760
        %v3488 = vsub.f32 %v3486, %v3487
        %v3489 = vand.u32 %v3488, 4294901760
        %3490 = vmatpush.msra.mxu0 %v3489
        %v3491 = vand.u32 %v2542, 4294901760
        %v3492 = vsub.f32 %v2542, %v3491
        %v3493 = vand.u32 %v3492, 4294901760
        %v3494 = vsub.f32 %v3492, %v3493
        %v3495 = vand.u32 %v3494, 4294901760
        %3496 = vmatpush.msra.mxu0 %v3495
        %v3497 = vand.u32 %v2538, 4294901760
        %v3498 = vsub.f32 %v2538, %v3497
        %v3499 = vand.u32 %v3498, 4294901760
        %v3500 = vsub.f32 %v3498, %v3499
        %v3501 = vand.u32 %v3500, 4294901760
        %3502 = vmatpush.msra.mxu0 %v3501
        %v3503 = vand.u32 %v2534, 4294901760
        %v3504 = vsub.f32 %v2534, %v3503
        %v3505 = vand.u32 %v3504, 4294901760
        %v3506 = vsub.f32 %v3504, %v3505
        %v3507 = vand.u32 %v3506, 4294901760
        %3508 = vmatpush.msra.mxu0 %v3507
        %v3509 = vand.u32 %v2530, 4294901760
        %v3510 = vsub.f32 %v2530, %v3509
        %v3511 = vand.u32 %v3510, 4294901760
        %v3512 = vsub.f32 %v3510, %v3511
        %v3513 = vand.u32 %v3512, 4294901760
        %3514 = vmatpush.msra.mxu0 %v3513
        %v3515 = vand.u32 %v2564, 4294901760
        %3516 = vmatmul.f32.gmra.mxu0 %v3515
        %v3517 = vpop.f32.mrf.mxu0
        %v3518 = vadd.f32 %v3444, %v3517
        %v3519 = vand.u32 %v2567, 4294901760
        %3520 = vmatmul.f32.gmra.mxu0 %v3519
        %v3521 = vpop.f32.mrf.mxu0
        %v3522 = vadd.f32 %v3452, %v3521
        %3523 = vdwg.mxu0
        %3524 = vmatpush.msra.mxu0 0.0
        %3525 = vmatpush.msra.mxu0 0.0
        %3526 = vmatpush.msra.mxu0 0.0
        %3527 = vmatpush.msra.mxu0 0.0
        %3528 = vmatpush.msra.mxu0 0.0
        %3529 = vmatpush.msra.mxu0 0.0
        %3530 = vmatpush.msra.mxu0 0.0
        %v3531 = vand.u32 %v2562, 4294901760
        %v3532 = vsub.f32 %v2562, %v3531
        %3533 = vmatpush.msra.mxu0 %v3532
        %v3534 = vand.u32 %v2558, 4294901760
        %v3535 = vsub.f32 %v2558, %v3534
        %3536 = vmatpush.msra.mxu0 %v3535
        %v3537 = vand.u32 %v2554, 4294901760
        %v3538 = vsub.f32 %v2554, %v3537
        %3539 = vmatpush.msra.mxu0 %v3538
        %v3540 = vand.u32 %v2550, 4294901760
        %v3541 = vsub.f32 %v2550, %v3540
        %3542 = vmatpush.msra.mxu0 %v3541
        %v3543 = vand.u32 %v2546, 4294901760
        %v3544 = vsub.f32 %v2546, %v3543
        %3545 = vmatpush.msra.mxu0 %v3544
        %v3546 = vand.u32 %v2542, 4294901760
        %v3547 = vsub.f32 %v2542, %v3546
        %3548 = vmatpush.msra.mxu0 %v3547
        %v3549 = vand.u32 %v2538, 4294901760
        %v3550 = vsub.f32 %v2538, %v3549
        %3551 = vmatpush.msra.mxu0 %v3550
        %v3552 = vand.u32 %v2534, 4294901760
        %v3553 = vsub.f32 %v2534, %v3552
        %3554 = vmatpush.msra.mxu0 %v3553
        %v3555 = vand.u32 %v2530, 4294901760
        %v3556 = vsub.f32 %v2530, %v3555
        %3557 = vmatpush.msra.mxu0 %v3556
        %v3558 = vand.u32 %v2564, 4294901760
        %v3559 = vsub.f32 %v2564, %v3558
        %3560 = vmatmul.f32.gmra.mxu0 %v3559
        %v3561 = vpop.f32.mrf.mxu0
        %v3562 = vadd.f32 %v3518, %v3561
        %v3563 = vand.u32 %v2567, 4294901760
        %v3564 = vsub.f32 %v2567, %v3563
        %3565 = vmatmul.f32.gmra.mxu0 %v3564
        %v3566 = vpop.f32.mrf.mxu0
        %v3567 = vadd.f32 %v3522, %v3566
        %3568 = vdwg.mxu0
        %3569 = vmatpush.msra.mxu0 0.0
        %3570 = vmatpush.msra.mxu0 0.0
        %3571 = vmatpush.msra.mxu0 0.0
        %3572 = vmatpush.msra.mxu0 0.0
        %3573 = vmatpush.msra.mxu0 0.0
        %3574 = vmatpush.msra.mxu0 0.0
        %3575 = vmatpush.msra.mxu0 0.0
        %v3576 = vand.u32 %v2562, 4294901760
        %3577 = vmatpush.msra.mxu0 %v3576
        %v3578 = vand.u32 %v2558, 4294901760
        %3579 = vmatpush.msra.mxu0 %v3578
        %v3580 = vand.u32 %v2554, 4294901760
        %3581 = vmatpush.msra.mxu0 %v3580
        %v3582 = vand.u32 %v2550, 4294901760
        %3583 = vmatpush.msra.mxu0 %v3582
        %v3584 = vand.u32 %v2546, 4294901760
        %3585 = vmatpush.msra.mxu0 %v3584
        %v3586 = vand.u32 %v2542, 4294901760
        %3587 = vmatpush.msra.mxu0 %v3586
        %v3588 = vand.u32 %v2538, 4294901760
        %3589 = vmatpush.msra.mxu0 %v3588
        %v3590 = vand.u32 %v2534, 4294901760
        %3591 = vmatpush.msra.mxu0 %v3590
        %v3592 = vand.u32 %v2530, 4294901760
        %3593 = vmatpush.msra.mxu0 %v3592
        %v3594 = vand.u32 %v2564, 4294901760
        %v3595 = vsub.f32 %v2564, %v3594
        %v3596 = vand.u32 %v3595, 4294901760
        %3597 = vmatmul.f32.gmra.mxu0 %v3596
        %v3598 = vpop.f32.mrf.mxu0
        %v3599 = vadd.f32 %v3562, %v3598
        %v3600 = vand.u32 %v2567, 4294901760
        %v3601 = vsub.f32 %v2567, %v3600
        %v3602 = vand.u32 %v3601, 4294901760
        %3603 = vmatmul.f32.gmra.mxu0 %v3602
        %v3604 = vpop.f32.mrf.mxu0
        %v3605 = vadd.f32 %v3567, %v3604
        %3606 = vdwg.mxu0
        %3607 = vmatpush.msra.mxu0 0.0
        %3608 = vmatpush.msra.mxu0 0.0
        %3609 = vmatpush.msra.mxu0 0.0
        %3610 = vmatpush.msra.mxu0 0.0
        %3611 = vmatpush.msra.mxu0 0.0
        %3612 = vmatpush.msra.mxu0 0.0
        %3613 = vmatpush.msra.mxu0 0.0
        %v3614 = vand.u32 %v2562, 4294901760
        %v3615 = vsub.f32 %v2562, %v3614
        %v3616 = vand.u32 %v3615, 4294901760
        %3617 = vmatpush.msra.mxu0 %v3616
        %v3618 = vand.u32 %v2558, 4294901760
        %v3619 = vsub.f32 %v2558, %v3618
        %v3620 = vand.u32 %v3619, 4294901760
        %3621 = vmatpush.msra.mxu0 %v3620
        %v3622 = vand.u32 %v2554, 4294901760
        %v3623 = vsub.f32 %v2554, %v3622
        %v3624 = vand.u32 %v3623, 4294901760
        %3625 = vmatpush.msra.mxu0 %v3624
        %v3626 = vand.u32 %v2550, 4294901760
        %v3627 = vsub.f32 %v2550, %v3626
        %v3628 = vand.u32 %v3627, 4294901760
        %3629 = vmatpush.msra.mxu0 %v3628
        %v3630 = vand.u32 %v2546, 4294901760
        %v3631 = vsub.f32 %v2546, %v3630
        %v3632 = vand.u32 %v3631, 4294901760
        %3633 = vmatpush.msra.mxu0 %v3632
        %v3634 = vand.u32 %v2542, 4294901760
        %v3635 = vsub.f32 %v2542, %v3634
        %v3636 = vand.u32 %v3635, 4294901760
        %3637 = vmatpush.msra.mxu0 %v3636
        %v3638 = vand.u32 %v2538, 4294901760
        %v3639 = vsub.f32 %v2538, %v3638
        %v3640 = vand.u32 %v3639, 4294901760
        %3641 = vmatpush.msra.mxu0 %v3640
        %v3642 = vand.u32 %v2534, 4294901760
        %v3643 = vsub.f32 %v2534, %v3642
        %v3644 = vand.u32 %v3643, 4294901760
        %3645 = vmatpush.msra.mxu0 %v3644
        %v3646 = vand.u32 %v2530, 4294901760
        %v3647 = vsub.f32 %v2530, %v3646
        %v3648 = vand.u32 %v3647, 4294901760
        %3649 = vmatpush.msra.mxu0 %v3648
        %v3650 = vand.u32 %v2564, 4294901760
        %3651 = vmatmul.f32.gmra.mxu0 %v3650
        %v3652 = vpop.f32.mrf.mxu0
        %v3653 = vadd.f32 %v3599, %v3652
        %v3654 = vand.u32 %v2567, 4294901760
        %3655 = vmatmul.f32.gmra.mxu0 %v3654
        %v3656 = vpop.f32.mrf.mxu0
        %v3657 = vadd.f32 %v3605, %v3656
        %3658 = vdwg.mxu0
        %3659 = vmatpush.msra.mxu0 0.0
        %3660 = vmatpush.msra.mxu0 0.0
        %3661 = vmatpush.msra.mxu0 0.0
        %3662 = vmatpush.msra.mxu0 0.0
        %3663 = vmatpush.msra.mxu0 0.0
        %3664 = vmatpush.msra.mxu0 0.0
        %3665 = vmatpush.msra.mxu0 0.0
        %v3666 = vand.u32 %v2562, 4294901760
        %3667 = vmatpush.msra.mxu0 %v3666
        %v3668 = vand.u32 %v2558, 4294901760
        %3669 = vmatpush.msra.mxu0 %v3668
        %v3670 = vand.u32 %v2554, 4294901760
        %3671 = vmatpush.msra.mxu0 %v3670
        %v3672 = vand.u32 %v2550, 4294901760
        %3673 = vmatpush.msra.mxu0 %v3672
        %v3674 = vand.u32 %v2546, 4294901760
        %3675 = vmatpush.msra.mxu0 %v3674
        %v3676 = vand.u32 %v2542, 4294901760
        %3677 = vmatpush.msra.mxu0 %v3676
        %v3678 = vand.u32 %v2538, 4294901760
        %3679 = vmatpush.msra.mxu0 %v3678
        %v3680 = vand.u32 %v2534, 4294901760
        %3681 = vmatpush.msra.mxu0 %v3680
        %v3682 = vand.u32 %v2530, 4294901760
        %3683 = vmatpush.msra.mxu0 %v3682
        %v3684 = vand.u32 %v2564, 4294901760
        %3685 = vmatmul.f32.gmra.mxu0 %v3684
        %v3686 = vpop.f32.mrf.mxu0
        %v3687 = vadd.f32 %v3653, %v3686
        %v3688 = vand.u32 %v2567, 4294901760
        %3689 = vmatmul.f32.gmra.mxu0 %v3688
        %v3690 = vpop.f32.mrf.mxu0
        %v3691 = vadd.f32 %v3657, %v3690
        %3692 = vdwg.mxu0
        %v3693 = vadd.f32 %v1675, %v2844
        %v3694 = vadd.f32 %v1956, %v3125
        %v3695 = vadd.f32 %v2237, %v3406
        %v3696 = vadd.f32 %v2518, %v3687
        %v3697 = vadd.f32 %v1679, %v2848
        %v3698 = vadd.f32 %v1960, %v3129
        %v3699 = vadd.f32 %v2241, %v3410
        %v3700 = vadd.f32 %v2522, %v3691
        %v3701 = vld [vmem:[%s2] sm:$0xf]
        %v3703 = vperm.slane %v3701, 0
        %v3704 = vperm.slane %v3701, 1
        %v3705 = vperm.slane %v3701, 2
        %v3706 = vperm.slane %v3701, 3
        %v3711 = vadd.f32 %v3693, %v3703
        %v3712 = vadd.f32 %v3694, %v3704
        %v3713 = vadd.f32 %v3695, %v3705
        %v3714 = vadd.f32 %v3696, %v3706
        %v3715 = vadd.f32 %v3697, %v3703
        %v3716 = vadd.f32 %v3698, %v3704
        %v3717 = vadd.f32 %v3699, %v3705
        %v3718 = vadd.f32 %v3700, %v3706
        %3719 = vst [vmem:[%s180] sm:$0xff] %v3711
        %3720 = vst [vmem:[%s180 + $0x8] sm:$0xff] %v3712
        %3721 = vst [vmem:[%s180 + $0x10] sm:$0xff] %v3713
        %3722 = vst [vmem:[%s180 + $0x18] sm:$0xff] %v3714
        %3723 = vst [vmem:[%s180 + $0x20] sm:$0xff] %v3715
        %3724 = vst [vmem:[%s180 + $0x28] sm:$0xff] %v3716
        %3725 = vst [vmem:[%s180 + $0x30] sm:$0xff] %v3717
        %3726 = vst [vmem:[%s180 + $0x38] sm:$0xff] %v3718
        %s3727 = sand.u32 %s94, 1
        %s3728 = scalar_lea.sflag [#allocation4], %s3727
        %s3729 = sand.u32 %s94, 1
        %s3730 = smul.addr %s3729, 64
        %s3731 = scalar_lea.vmem [#allocation5], %s3730
        // Predicated region
        $region37: #{tpu_custom_call.1} parent=31 // pred_check
          %p3732 = pneg %p104
        $region38: #{tpu_custom_call.1} parent=31 // pred_check_branch
          %3734 = sbr.rel (%p3732) target = $region40
        $region39: #{tpu_custom_call.1} parent=31 // pred_region
          %3736 = vsyncadd %s3728, 0
          %s3737 = smul.addr %s18, 8
          %s3738 = smul.addr %s3737, 8
          %s3739 = scalar_lea.hbm %s3, %s3738
          %s3740 = sshll.u32 %s3731, 4
          %s3741 = int_to_ptr.vmem [resolvable:$true] %s3740
          %s3742 = sshll.u32 %s3739, 4
          %s3743 = int_to_ptr.hbm [resolvable:$true] %s3742
          %3748 = dma.vmem_to_hbm [thread:$0]  %s3741, 1024, %s3743, %s3728, 512, 512, 32
        $region40: #{tpu_custom_call.1} parent=31 // pred_fallthru
          _
      $region32: #{tpu_custom_call.1} parent=5 // pred_fallthru
        _
      %p3749 = scmp.le.s32.totalorder 2, %s13
      // Predicated region
      $region41: #{tpu_custom_call.1} parent=5 // pred_check
        %p3750 = pneg %p3749
      $region42: #{tpu_custom_call.1} parent=5 // pred_check_branch
        %3752 = sbr.rel (%p3750) target = $region44
      $region43: #{tpu_custom_call.1} parent=5 // pred_region
        %s3753 = ssub.s32 %s13, 2
        // Predicated region
        $region45: #{tpu_custom_call.1} parent=43 // pred_check
          %p3754 = pneg %p110
        $region46: #{tpu_custom_call.1} parent=43 // pred_check_branch
          %3756 = sbr.rel (%p3754) target = $region48
        $region47: #{tpu_custom_call.1} parent=43 // pred_region
          %s3757 = sand.u32 %s95, 1
          %s3758 = scalar_lea.sflag [#allocation4], %s3757
          %s3759 = sand.u32 %s95, 1
          %s3760 = smul.addr %s3759, 64
          %s3761 = scalar_lea.vmem [#allocation5], %s3760
          %3763 = dma.done %s3758, 1024
        $region48: #{tpu_custom_call.1} parent=43 // pred_fallthru
          _
      $region44: #{tpu_custom_call.1} parent=5 // pred_fallthru
        _
    $region6: #{tpu_custom_call.1} parent=1 // loop_footer
      %s17 = sadd.s32 1, %s13
    $region7: #{tpu_custom_call.1} parent=1 // loop_footer_branch
      %12 = sbr.rel target = $region3
    $region8: #{tpu_custom_call.1} parent=1 // loop_exit
      _
    %3764 = vsyncpa [#allocation3], 1
    %s3765 = scalar_lea.sflag [#allocation3], 1
    %3766 = vsyncpa %s3765, 1
    %3767 = vsyncpa [#allocation4], 1
    %s3768 = scalar_lea.sflag [#allocation4], 1
    %3769 = vsyncpa %s3768, 1

</llo_original>
